<compile_context>
chip_gen: v6e
topology: v6e:2x2x1
jax: 0.10.0
libtpu: 0.0.40
codegen_flags: <defaults>
</compile_context>

<pallas_src>
import functools

import jax
import jax.numpy as jnp
import numpy as np
from jax.experimental import pallas as pl
from jax.experimental.pallas import tpu as pltpu

LANE = 128      # lane width (last-dim padding target)
SUBLANE = 8     # f32 sublane granularity (NP / TP bucketing)

# ----------------------------------------------------------------------------
# BT string parsing (host-side glue, copied from the reference module)
# ----------------------------------------------------------------------------
node_dict = {0: '0', 1: '1', 2: '2', 3: 'a', 4: 'b', 5: 'c', 6: 'e', 7: 'f',
             8: 'g', 9: 'B', 10: 'D', 11: 'E', 12: 'F', 13: 'G', 14: 'H', 15: None}
char_to_node_type = {v: k for k, v in node_dict.items() if v is not None}
composite_chars = {'0', '1', '2'}


class TreeNode:
    def __init__(self, name, node_type, children=None):
        self.name = name
        self.node_type = node_type
        self.children = children if children else []


def string_to_tree_node(tree_string, node_id=0):
    if tree_string == '':
        return TreeNode('emty_tree', 19)
    if len(tree_string) == 1:
        node_type = char_to_node_type[tree_string[0]]
        return TreeNode(f'leaf_{tree_string[0]}', node_type)
    node_type_char = tree_string[1]
    if node_type_char in composite_chars:
        node_type = char_to_node_type[node_type_char]
        name = f'composite_{node_id}'
        node_id += 1
    elif node_type_char in char_to_node_type:
        node_type = char_to_node_type[node_type_char]
        return TreeNode(f'leaf_{node_type_char}', node_type)
    else:
        raise ValueError(f'[Error] Unknown node type char: {node_type_char}')
    children = []
    i = 2
    while i < len(tree_string) - 1:
        c = tree_string[i]
        if c == '(':
            depth = 1
            start = i
            while depth != 0:
                i += 1
                if tree_string[i] == '(':
                    depth += 1
                elif tree_string[i] == ')':
                    depth -= 1
            children.append(string_to_tree_node(tree_string[start:i + 1], node_id))
            i += 1
        elif c in char_to_node_type:
            children.append(TreeNode(f'leaf_{c}', char_to_node_type[c]))
            i += 1
        else:
            i += 1
    return TreeNode(name, node_type, children)


def extract_child_substrings(tree_string):
    children = []
    i = 2
    while i < len(tree_string) - 1:
        c = tree_string[i]
        if c == '(':
            depth = 1
            start = i
            while depth != 0:
                i += 1
                if tree_string[i] == '(':
                    depth += 1
                elif tree_string[i] == ')':
                    depth -= 1
            children.append(tree_string[start:i + 1])
            i += 1
        elif c in char_to_node_type:
            children.append(c)
            i += 1
        else:
            i += 1
    return children


def _round_up(x, m):
    return ((x + m - 1) // m) * m


# ----------------------------------------------------------------------------
# The forest kernel: grid axis = topological level of the new nodes.
# ----------------------------------------------------------------------------
def _forest_kernel(cidx_ref, oidx_ref,              # scalar-prefetch (SMEM)
                   lens_ref, emb_ref,               # per-level VMEM blocks
                   wi_ref, bi_ref, wh_ref, bh_ref,  # fused GRU weights (resident)
                   wcat_ref, bc_ref,                # fused cell weights (resident)
                   memo_in_ref,                     # old memo (resident input)
                   memo_out_ref,                    # new memo (resident output)
                   seq_scr, cat_scr):               # VMEM scratch
    # Shapes (all static):
    #   cidx_ref: (L, NP*TP) int32   child memo rows (row n*TP + t), 0 = dummy
    #   oidx_ref: (L, NP)    int32   memo row each node writes (0 = dummy)
    #   lens_ref: (NP, 1)    f32     true child count per node (0 for pads)
    #   emb_ref : (NP, EP)   f32     node embeddings for this level
    #   wi/wh   : (HP, 3*HP)         fused [r|z|n] gate weights
    #   bi/bh   : (1, 3*HP)
    #   wcat    : (EP+HP, HP), bc: (1, HP)
    #   memo_*  : (CAP, HP)
    #   seq_scr : (TP*NP, HP), cat_scr: (NP, EP+HP)
    lvl = pl.program_id(0)
    NP = lens_ref.shape[0]
    EP = emb_ref.shape[1]
    CAP, HP = memo_out_ref.shape
    TP = seq_scr.shape[0] // NP

    # ---- grid step 0: bring the existing memo into the resident output ----
    @pl.when(lvl == 0)
    def _():
        for r in range(0, CAP, 128):                # chunked VMEM->VMEM copy
            memo_out_ref[r:r + 128, :] = memo_in_ref[r:r + 128, :]

    # ---- device-side gather of child encodings from the live memo ---------
    for n in range(NP):
        for t in range(TP):
            c = cidx_ref[lvl, n * TP + t]
            row = memo_out_ref[pl.ds(c, 1), :]      # (1, HP), dynamic row load
            seq_scr[t * NP + n:t * NP + n + 1, :] = row

    # embeddings go into the left 128-lane half of the concat buffer
    cat_scr[:, 0:EP] = emb_ref[...]

    # ---- GRU over children: hoisted input projection + masked recurrence --
    bi = bi_ref[...]
    bh = bh_ref[...]
    xi = jnp.dot(seq_scr[...], wi_ref[...],
                 preferred_element_type=jnp.float32) + bi       # (TP*NP, 3*HP)
    lens = lens_ref[...]                                        # (NP, 1)
    h = jnp.zeros((NP, HP), jnp.float32)
    for t in range(TP):                # statically unrolled (TP is small)
        xi_t = xi[t * NP:(t + 1) * NP, :]
        gh = jnp.dot(h, wh_ref[...], preferred_element_type=jnp.float32) + bh
        r = jax.nn.sigmoid(xi_t[:, 0:HP] + gh[:, 0:HP])
        z = jax.nn.sigmoid(xi_t[:, HP:2 * HP] + gh[:, HP:2 * HP])
        g = jnp.tanh(xi_t[:, 2 * HP:3 * HP] + r * gh[:, 2 * HP:3 * HP])
        h_new = (1.0 - z) * g + z * h
        m = (lens > t).astype(jnp.float32)          # only real children advance h
        h = m * h_new + (1.0 - m) * h

    # ---- fused cell epilogue: tanh([emb | h] @ [Wce; Wch] + bc) ------------
    cat_scr[:, EP:EP + HP] = h
    out = jnp.tanh(
        jnp.dot(cat_scr[...], wcat_ref[...], preferred_element_type=jnp.float32)
        + bc_ref[...])                                          # (NP, HP)

    # ---- scatter results into the memo (dummy row 0 absorbs pad nodes) ----
    for n in range(NP):
        o = oidx_ref[lvl, n]
        memo_out_ref[pl.ds(o, 1), :] = out[n:n + 1, :]


def _forest_forward_impl(cidx, oidx, lens, types, memo, emb_tab,
                         Wi, bi, Wh, bh, Wcat, bc):
    L, NP = types.shape
    TP = cidx.shape[1] // NP
    CAP, HP = memo.shape
    EP = emb_tab.shape[1]

    # embedding gather fuses into the jitted executable feeding the kernel
    emb = jnp.take(emb_tab, types.reshape(-1), axis=0).reshape(L, NP, EP)

    const2 = lambda l, *_: (0, 0)       # weights / memo: resident across levels
    return pl.pallas_call(
        _forest_kernel,
        out_shape=jax.ShapeDtypeStruct((CAP, HP), jnp.float32),
        grid_spec=pltpu.PrefetchScalarGridSpec(
            num_scalar_prefetch=2,
            grid=(L,),
            in_specs=[
                pl.BlockSpec((None, NP, 1), lambda l, *_: (l, 0, 0)),    # lens
                pl.BlockSpec((None, NP, EP), lambda l, *_: (l, 0, 0)),   # emb
                pl.BlockSpec((HP, 3 * HP), const2),                      # Wi
                pl.BlockSpec((1, 3 * HP), const2),                       # bi
                pl.BlockSpec((HP, 3 * HP), const2),                      # Wh
                pl.BlockSpec((1, 3 * HP), const2),                       # bh
                pl.BlockSpec((EP + HP, HP), const2),                     # Wcat
                pl.BlockSpec((1, HP), const2),                           # bc
                pl.BlockSpec((CAP, HP), const2),                         # old memo
            ],
            out_specs=pl.BlockSpec((CAP, HP), const2),                   # new memo
            scratch_shapes=[pltpu.VMEM((TP * NP, HP), jnp.float32),
                            pltpu.VMEM((NP, EP + HP), jnp.float32)],
        ),
        compiler_params=pltpu.CompilerParams(
            dimension_semantics=("arbitrary",)),   # levels are sequential
    )(cidx, oidx, lens, emb, Wi, bi, Wh, bh, Wcat, bc, memo)


# jit caches one executable per (L, NP, TP, CAP) shape bucket.
_forest_forward = jax.jit(_forest_forward_impl)


# ----------------------------------------------------------------------------
# RvNN_mem (forward pass only) on top of the forest kernel
# ----------------------------------------------------------------------------
class RvNNMemPallas:
    def __init__(self, node_type_vocab_size, embed_size, hidden_size,
                 action1_size, action2_size, key, capacity=1024):
        E, H = embed_size, hidden_size
        self.embed_size, self.hidden_size = E, H
        EP, HP = _round_up(E, LANE), _round_up(H, LANE)
        self.EP, self.HP = EP, HP
        scale = jnp.float32(0.1)
        keys = jax.random.split(key, 10)

        # ---- torch-layout raw parameters (also used by the pure-JAX ref) ----
        self.node_embedding = scale * jax.random.normal(
            keys[0], (node_type_vocab_size, E), jnp.float32)             # Embedding
        W_c = scale * jax.random.normal(keys[1], (H, E + H), jnp.float32)  # Linear (out,in)
        b_c = scale * jax.random.normal(keys[2], (H,), jnp.float32)
        w_ih = scale * jax.random.normal(keys[3], (3 * H, H), jnp.float32)  # GRU [r|z|n]
        w_hh = scale * jax.random.normal(keys[4], (3 * H, H), jnp.float32)
        b_ih = scale * jax.random.normal(keys[5], (3 * H,), jnp.float32)
        b_hh = scale * jax.random.normal(keys[6], (3 * H,), jnp.float32)
        # Output heads exist in the torch module's __init__ but are unused by forward().
        self.W_a1 = scale * jax.random.normal(keys[7], (H, action1_size), jnp.float32)
        self.W_a2 = scale * jax.random.normal(keys[8], (H, action2_size), jnp.float32)
        self.W_r = scale * jax.random.normal(keys[9], (H, 1), jnp.float32)

        self.Wc_raw = W_c.T            # (E+H, H)
        self.bc_raw = b_c
        self.gru_raw = (w_ih, w_hh, b_ih, b_hh)

        # ---- lane-padded, gate-fused kernel parameters ----
        # NOTE: pad rows/cols must stay exactly zero so pad lanes of h / memo
        # rows never leak into the first H lanes (see perf-review concern #1).
        self.emb_pad = jnp.zeros((node_type_vocab_size, EP),
                                 jnp.float32).at[:, :E].set(self.node_embedding)
        Wce = jnp.zeros((EP, HP), jnp.float32).at[:E, :H].set(W_c[:, :E].T)
        Wch = jnp.zeros((HP, HP), jnp.float32).at[:H, :H].set(W_c[:, E:].T)
        self.Wcat_pad = jnp.concatenate([Wce, Wch], axis=0)      # (EP+HP, HP)
        self.bc_pad = jnp.zeros((1, HP), jnp.float32).at[0, :H].set(b_c)
        Wi = jnp.zeros((HP, 3 * HP), jnp.float32)
        Wh = jnp.zeros((HP, 3 * HP), jnp.float32)
        bi = jnp.zeros((1, 3 * HP), jnp.float32)
        bh = jnp.zeros((1, 3 * HP), jnp.float32)
        for g in range(3):   # gate g occupies its own 128-lane block
            Wi = Wi.at[:H, g * HP:g * HP + H].set(w_ih[g * H:(g + 1) * H, :].T)
            Wh = Wh.at[:H, g * HP:g * HP + H].set(w_hh[g * H:(g + 1) * H, :].T)
            bi = bi.at[0, g * HP:g * HP + H].set(b_ih[g * H:(g + 1) * H])
            bh = bh.at[0, g * HP:g * HP + H].set(b_hh[g * H:(g + 1) * H])
        self.Wi_pad, self.Wh_pad, self.bi_pad, self.bh_pad = Wi, Wh, bi, bh

        # ---- device-resident memo (row 0 is a dummy/scratch row) ----
        # TODO(synk): no LRU eviction like the torch LRUCache(maxsize=...).
        self.capacity = _round_up(max(capacity, 2 * LANE), LANE)
        self.memo_buf = jnp.zeros((self.capacity, HP), jnp.float32)
        self.memo_rows = {}            # tree string -> memo row index
        self.next_row = 1
        self.tree_parse_memo = {}
        self.cache_hits = 0
        self.cache_misses = 0

    # memoized parse
    def _parse_tree_node(self, tree_string):
        if tree_string in self.tree_parse_memo:
            return self.tree_parse_memo[tree_string]
        node = string_to_tree_node(tree_string)
        self.tree_parse_memo[tree_string] = node
        return node

    # ------------------------------------------------------------------ API
    def forward(self, bt_string):
        if bt_string in self.memo_rows:
            self.cache_hits += 1
            return self.memo_buf[self.memo_rows[bt_string], :self.hidden_size]
        info = {}
        self._collect(bt_string, info)
        if info:
            self._encode_new_nodes(info)
        return self.memo_buf[self.memo_rows[bt_string], :self.hidden_size]

    def forward_batch(self, bt_strings):
        """Encode several BT strings through ONE kernel launch."""
        info = {}
        for s in bt_strings:
            self._collect(s, info)
        if info:
            self._encode_new_nodes(info)
        return [self.memo_buf[self.memo_rows[s], :self.hidden_size]
                for s in bt_strings]

    # ------------------------------------------------------- host orchestration
    def _collect(self, s, info):
        """info[s] = (node_type, child_substrings) for every uncached subtree."""
        if s in info:
            return
        if s in self.memo_rows:
            self.cache_hits += 1
            return
        self.cache_misses += 1
        node = self._parse_tree_node(s)
        if not node.children:
            info[s] = (node.node_type, [])
            return
        childs = extract_child_substrings(s)
        info[s] = (node.node_type, childs)
        for c in childs:
            self._collect(c, info)

    def _encode_new_nodes(self, info):
        HP, EP = self.HP, self.EP

        # --- topological levels (children strictly below their parents) -----
        levels = {}

        def level_of(s):
            if s not in info:          # already memoized -> readable at step 0
                return -1
            if s in levels:
                return levels[s]
            _, childs = info[s]
            lv = 0 if not childs else 1 + max(level_of(c) for c in childs)
            levels[s] = lv
            return lv

        for s in info:
            level_of(s)
        distinct = sorted(set(levels.values()))
        lvl_of = {lv: i for i, lv in enumerate(distinct)}
        L = len(distinct)
        per_level = [[] for _ in range(L)]
        for s in info:
            per_level[lvl_of[levels[s]]].append(s)

        # --- merged padding: one NP / TP for every level of this pass -------
        NP = _round_up(max(len(g) for g in per_level), SUBLANE)
        TP = _round_up(max(max(len(info[s][1]) for s in info), 1), SUBLANE)
        # TODO(synk): block NP into <=32-row tiles on an extra ("parallel")
        # grid axis for v7x's second TensorCore / vreg pressure at large NP.

        # --- memo row assignment (row 0 = dummy), grow capacity if needed ---
        if self.next_row + len(info) > self.capacity:
            new_cap = _round_up(max(2 * self.capacity,
                                    self.next_row + len(info)), LANE)
            self.memo_buf = (jnp.zeros((new_cap, HP), jnp.float32)
                             .at[:self.capacity, :].set(self.memo_buf))
            self.capacity = new_cap
        for grp in per_level:
            for s in grp:
                self.memo_rows[s] = self.next_row
                self.next_row += 1

        # --- topology tables (tiny int32 arrays, built on host) -------------
        cidx = np.zeros((L, NP * TP), np.int32)
        oidx = np.zeros((L, NP), np.int32)
        lens = np.zeros((L, NP, 1), np.float32)
        types = np.zeros((L, NP), np.int32)
        for li, grp in enumerate(per_level):
            for j, s in enumerate(grp):
                t_id, childs = info[s]
                oidx[li, j] = self.memo_rows[s]
                types[li, j] = t_id
                lens[li, j, 0] = len(childs)
                for t, c in enumerate(childs):
                    cidx[li, j * TP + t] = self.memo_rows[c]

        # --- one jitted call: embedding gather + forest kernel --------------
        self.memo_buf = _forest_forward(
            jnp.asarray(cidx), jnp.asarray(oidx), jnp.asarray(lens),
            jnp.asarray(types), self.memo_buf, self.emb_pad,
            self.Wi_pad, self.bi_pad, self.Wh_pad, self.bh_pad,
            self.Wcat_pad, self.bc_pad)

    # ------------------------------------------------------------------
    # Pure-JAX reference mirroring the torch per-node recursion (unpadded).
    # ------------------------------------------------------------------
    def ref_forward(self, bt_string):
        return self._ref_encode(bt_string, {})

    def _ref_encode(self, s, memo):
        if s in memo:
            return memo[s]
        node = self._parse_tree_node(s)
        E, H = self.embed_size, self.hidden_size
        w_ih, w_hh, b_ih, b_hh = self.gru_raw
        emb = self.node_embedding[node.node_type]                       # (E,)
        if not node.children:
            x = jnp.concatenate([emb, jnp.zeros((H,), jnp.float32)])
            h = jnp.tanh(x @ self.Wc_raw + self.bc_raw)
            memo[s] = h
            return h
        childs = extract_child_substrings(s)
        states = [self._ref_encode(c, memo) for c in childs]
        hh = jnp.zeros((H,), jnp.float32)
        for x in states:                                                # torch nn.GRU
            gi = x @ w_ih.T + b_ih
            gh = hh @ w_hh.T + b_hh
            r = jax.nn.sigmoid(gi[:H] + gh[:H])
            z = jax.nn.sigmoid(gi[H:2 * H] + gh[H:2 * H])
            n = jnp.tanh(gi[2 * H:] + r * gh[2 * H:])
            hh = (1.0 - z) * n + z * hh
        x = jnp.concatenate([emb, hh])
        h = jnp.tanh(x @ self.Wc_raw + self.bc_raw)
        memo[s] = h
        return h


# ----------------------------------------------------------------------------
if __name__ == "__main__":
    key = jax.random.PRNGKey(0)
    model = RvNNMemPallas(node_type_vocab_size=20, embed_size=32, hidden_size=32,
                          action1_size=8, action2_size=16, key=key)

    bt_string = "(0a(1bc)(2ef(0gB))H)"          # composite root w/ nested subtrees
    h = jax.block_until_ready(model.forward(bt_string))
    h_ref = jax.block_until_ready(model.ref_forward(bt_string))
    assert h.shape == (32,), h.shape
    diff = float(jnp.max(jnp.abs(h - h_ref)))
    assert diff < 1e-4, f"mismatch on tree 1: max abs diff {diff}"

    # second tree reusing memoized subtrees ('(1bc)', 'a', 'H')
    bt_string2 = "(1(1bc)aH)"
    h2 = jax.block_until_ready(model.forward(bt_string2))
    h2_ref = jax.block_until_ready(model.ref_forward(bt_string2))
    diff2 = float(jnp.max(jnp.abs(h2 - h2_ref)))
    assert diff2 < 1e-4, f"mismatch on tree 2: max abs diff {diff2}"

    # repeated query hits the memo and returns the identical encoding
    h_again = jax.block_until_ready(model.forward(bt_string))
    assert bool(jnp.all(h_again == h))

    # batched API: both trees through one kernel launch on a fresh model
    # (same PRNG key -> same weights -> same compiled shape bucket, no recompile)
    model_b = RvNNMemPallas(node_type_vocab_size=20, embed_size=32, hidden_size=32,
                            action1_size=8, action2_size=16, key=key)
    hb1, hb2 = model_b.forward_batch([bt_string, bt_string2])
    jax.block_until_ready((hb1, hb2))
    db1 = float(jnp.max(jnp.abs(hb1 - h_ref)))
    db2 = float(jnp.max(jnp.abs(hb2 - h2_ref)))
    assert db1 < 1e-4 and db2 < 1e-4, (db1, db2)

    print("KERNEL_OK")
</pallas_src>

<mosaic_0001>
module attributes {stable_mosaic.version = 11 : i64} {
  func.func @_forest_kernel(%arg0: i32, %arg1: memref<4x64xi32, #tpu.memory_space<smem>>, %arg2: memref<4x8xi32, #tpu.memory_space<smem>>, %arg3: memref<1x8x1xf32, #tpu.memory_space<vmem>>, %arg4: memref<1x8x128xf32, #tpu.memory_space<vmem>>, %arg5: memref<128x384xf32, #tpu.memory_space<vmem>>, %arg6: memref<1x384xf32, #tpu.memory_space<vmem>>, %arg7: memref<128x384xf32, #tpu.memory_space<vmem>>, %arg8: memref<1x384xf32, #tpu.memory_space<vmem>>, %arg9: memref<256x128xf32, #tpu.memory_space<vmem>>, %arg10: memref<1x128xf32, #tpu.memory_space<vmem>>, %arg11: memref<1024x128xf32, #tpu.memory_space<vmem>>, %arg12: memref<1024x128xf32, #tpu.memory_space<vmem>>, %arg13: memref<64x128xf32, #tpu.memory_space<vmem>>, %arg14: memref<8x256xf32, #tpu.memory_space<vmem>>) attributes {dimension_semantics = [#tpu.dimension_semantics<arbitrary>], iteration_bounds = array<i64: 4>, scalar_prefetch = 2 : i64, scratch_operands = 2 : i64, tpu.core_type = #tpu.core_type<tc>, window_params = [{transform_indices = @transform_0, window_bounds = array<i64: 1, 8, 1>}, {transform_indices = @transform_1, window_bounds = array<i64: 1, 8, 128>}, {pipeline_mode = #tpu.pipeline_mode<synchronous>, transform_indices = @transform_2, window_bounds = array<i64: 128, 384>}, {pipeline_mode = #tpu.pipeline_mode<synchronous>, transform_indices = @transform_3, window_bounds = array<i64: 1, 384>}, {pipeline_mode = #tpu.pipeline_mode<synchronous>, transform_indices = @transform_4, window_bounds = array<i64: 128, 384>}, {pipeline_mode = #tpu.pipeline_mode<synchronous>, transform_indices = @transform_5, window_bounds = array<i64: 1, 384>}, {pipeline_mode = #tpu.pipeline_mode<synchronous>, transform_indices = @transform_6, window_bounds = array<i64: 256, 128>}, {pipeline_mode = #tpu.pipeline_mode<synchronous>, transform_indices = @transform_7, window_bounds = array<i64: 1, 128>}, {pipeline_mode = #tpu.pipeline_mode<synchronous>, transform_indices = @transform_8, window_bounds = array<i64: 1024, 128>}, {pipeline_mode = #tpu.pipeline_mode<synchronous>, transform_indices = @transform_9, window_bounds = array<i64: 1024, 128>}]} {
    %c0_i32 = arith.constant 0 : i32
    %0 = arith.cmpi eq, %arg0, %c0_i32 : i32
    %1 = arith.extui %0 : i1 to i32
    %c0_i32_0 = arith.constant 0 : i32
    %2 = arith.cmpi ne, %1, %c0_i32_0 : i32
    scf.if %2 {
      %c0_298 = arith.constant 0 : index
      %c0_299 = arith.constant 0 : index
      %720 = vector.load %arg11[%c0_298, %c0_299] : memref<1024x128xf32, #tpu.memory_space<vmem>>, vector<128x128xf32>
      %c0_300 = arith.constant 0 : index
      %c0_301 = arith.constant 0 : index
      %721 = vector.load %arg12[%c0_300, %c0_301] : memref<1024x128xf32, #tpu.memory_space<vmem>>, vector<128x128xf32>
      tpu.vector_store %arg12[%c0_300, %c0_301], %720 {strides = array<i32>} : memref<1024x128xf32, #tpu.memory_space<vmem>>, vector<128x128xf32>,
      %c128_302 = arith.constant 128 : index
      %c0_303 = arith.constant 0 : index
      %722 = vector.load %arg11[%c128_302, %c0_303] : memref<1024x128xf32, #tpu.memory_space<vmem>>, vector<128x128xf32>
      %c128_304 = arith.constant 128 : index
      %c0_305 = arith.constant 0 : index
      %723 = vector.load %arg12[%c128_304, %c0_305] : memref<1024x128xf32, #tpu.memory_space<vmem>>, vector<128x128xf32>
      tpu.vector_store %arg12[%c128_304, %c0_305], %722 {strides = array<i32>} : memref<1024x128xf32, #tpu.memory_space<vmem>>, vector<128x128xf32>,
      %c256 = arith.constant 256 : index
      %c0_306 = arith.constant 0 : index
      %724 = vector.load %arg11[%c256, %c0_306] : memref<1024x128xf32, #tpu.memory_space<vmem>>, vector<128x128xf32>
      %c256_307 = arith.constant 256 : index
      %c0_308 = arith.constant 0 : index
      %725 = vector.load %arg12[%c256_307, %c0_308] : memref<1024x128xf32, #tpu.memory_space<vmem>>, vector<128x128xf32>
      tpu.vector_store %arg12[%c256_307, %c0_308], %724 {strides = array<i32>} : memref<1024x128xf32, #tpu.memory_space<vmem>>, vector<128x128xf32>,
      %c384 = arith.constant 384 : index
      %c0_309 = arith.constant 0 : index
      %726 = vector.load %arg11[%c384, %c0_309] : memref<1024x128xf32, #tpu.memory_space<vmem>>, vector<128x128xf32>
      %c384_310 = arith.constant 384 : index
      %c0_311 = arith.constant 0 : index
      %727 = vector.load %arg12[%c384_310, %c0_311] : memref<1024x128xf32, #tpu.memory_space<vmem>>, vector<128x128xf32>
      tpu.vector_store %arg12[%c384_310, %c0_311], %726 {strides = array<i32>} : memref<1024x128xf32, #tpu.memory_space<vmem>>, vector<128x128xf32>,
      %c512 = arith.constant 512 : index
      %c0_312 = arith.constant 0 : index
      %728 = vector.load %arg11[%c512, %c0_312] : memref<1024x128xf32, #tpu.memory_space<vmem>>, vector<128x128xf32>
      %c512_313 = arith.constant 512 : index
      %c0_314 = arith.constant 0 : index
      %729 = vector.load %arg12[%c512_313, %c0_314] : memref<1024x128xf32, #tpu.memory_space<vmem>>, vector<128x128xf32>
      tpu.vector_store %arg12[%c512_313, %c0_314], %728 {strides = array<i32>} : memref<1024x128xf32, #tpu.memory_space<vmem>>, vector<128x128xf32>,
      %c640 = arith.constant 640 : index
      %c0_315 = arith.constant 0 : index
      %730 = vector.load %arg11[%c640, %c0_315] : memref<1024x128xf32, #tpu.memory_space<vmem>>, vector<128x128xf32>
      %c640_316 = arith.constant 640 : index
      %c0_317 = arith.constant 0 : index
      %731 = vector.load %arg12[%c640_316, %c0_317] : memref<1024x128xf32, #tpu.memory_space<vmem>>, vector<128x128xf32>
      tpu.vector_store %arg12[%c640_316, %c0_317], %730 {strides = array<i32>} : memref<1024x128xf32, #tpu.memory_space<vmem>>, vector<128x128xf32>,
      %c768 = arith.constant 768 : index
      %c0_318 = arith.constant 0 : index
      %732 = vector.load %arg11[%c768, %c0_318] : memref<1024x128xf32, #tpu.memory_space<vmem>>, vector<128x128xf32>
      %c768_319 = arith.constant 768 : index
      %c0_320 = arith.constant 0 : index
      %733 = vector.load %arg12[%c768_319, %c0_320] : memref<1024x128xf32, #tpu.memory_space<vmem>>, vector<128x128xf32>
      tpu.vector_store %arg12[%c768_319, %c0_320], %732 {strides = array<i32>} : memref<1024x128xf32, #tpu.memory_space<vmem>>, vector<128x128xf32>,
      %c896 = arith.constant 896 : index
      %c0_321 = arith.constant 0 : index
      %734 = vector.load %arg11[%c896, %c0_321] : memref<1024x128xf32, #tpu.memory_space<vmem>>, vector<128x128xf32>
      %c896_322 = arith.constant 896 : index
      %c0_323 = arith.constant 0 : index
      %735 = vector.load %arg12[%c896_322, %c0_323] : memref<1024x128xf32, #tpu.memory_space<vmem>>, vector<128x128xf32>
      tpu.vector_store %arg12[%c896_322, %c0_323], %734 {strides = array<i32>} : memref<1024x128xf32, #tpu.memory_space<vmem>>, vector<128x128xf32>,
    } else {
    }
    %3 = arith.index_cast %arg0 : i32 to index
    %c0 = arith.constant 0 : index
    %4 = memref.load %arg1[%3, %c0] : memref<4x64xi32, #tpu.memory_space<smem>>
    %5 = arith.index_cast %4 : i32 to index
    %c0_1 = arith.constant 0 : index
    %6 = vector.load %arg12[%5, %c0_1] : memref<1024x128xf32, #tpu.memory_space<vmem>>, vector<1x128xf32>
    %c0_2 = arith.constant 0 : index
    %c0_3 = arith.constant 0 : index
    %7 = vector.load %arg13[%c0_2, %c0_3] : memref<64x128xf32, #tpu.memory_space<vmem>>, vector<1x128xf32>
    tpu.vector_store %arg13[%c0_2, %c0_3], %6 {strides = array<i32>} : memref<64x128xf32, #tpu.memory_space<vmem>>, vector<1x128xf32>,
    %8 = arith.index_cast %arg0 : i32 to index
    %c1 = arith.constant 1 : index
    %9 = memref.load %arg1[%8, %c1] : memref<4x64xi32, #tpu.memory_space<smem>>
    %10 = arith.index_cast %9 : i32 to index
    %c0_4 = arith.constant 0 : index
    %11 = vector.load %arg12[%10, %c0_4] : memref<1024x128xf32, #tpu.memory_space<vmem>>, vector<1x128xf32>
    %c8 = arith.constant 8 : index
    %c0_5 = arith.constant 0 : index
    %12 = vector.load %arg13[%c8, %c0_5] : memref<64x128xf32, #tpu.memory_space<vmem>>, vector<1x128xf32>
    tpu.vector_store %arg13[%c8, %c0_5], %11 {strides = array<i32>} : memref<64x128xf32, #tpu.memory_space<vmem>>, vector<1x128xf32>,
    %13 = arith.index_cast %arg0 : i32 to index
    %c2 = arith.constant 2 : index
    %14 = memref.load %arg1[%13, %c2] : memref<4x64xi32, #tpu.memory_space<smem>>
    %15 = arith.index_cast %14 : i32 to index
    %c0_6 = arith.constant 0 : index
    %16 = vector.load %arg12[%15, %c0_6] : memref<1024x128xf32, #tpu.memory_space<vmem>>, vector<1x128xf32>
    %c16 = arith.constant 16 : index
    %c0_7 = arith.constant 0 : index
    %17 = vector.load %arg13[%c16, %c0_7] : memref<64x128xf32, #tpu.memory_space<vmem>>, vector<1x128xf32>
    tpu.vector_store %arg13[%c16, %c0_7], %16 {strides = array<i32>} : memref<64x128xf32, #tpu.memory_space<vmem>>, vector<1x128xf32>,
    %18 = arith.index_cast %arg0 : i32 to index
    %c3 = arith.constant 3 : index
    %19 = memref.load %arg1[%18, %c3] : memref<4x64xi32, #tpu.memory_space<smem>>
    %20 = arith.index_cast %19 : i32 to index
    %c0_8 = arith.constant 0 : index
    %21 = vector.load %arg12[%20, %c0_8] : memref<1024x128xf32, #tpu.memory_space<vmem>>, vector<1x128xf32>
    %c24 = arith.constant 24 : index
    %c0_9 = arith.constant 0 : index
    %22 = vector.load %arg13[%c24, %c0_9] : memref<64x128xf32, #tpu.memory_space<vmem>>, vector<1x128xf32>
    tpu.vector_store %arg13[%c24, %c0_9], %21 {strides = array<i32>} : memref<64x128xf32, #tpu.memory_space<vmem>>, vector<1x128xf32>,
    %23 = arith.index_cast %arg0 : i32 to index
    %c4 = arith.constant 4 : index
    %24 = memref.load %arg1[%23, %c4] : memref<4x64xi32, #tpu.memory_space<smem>>
    %25 = arith.index_cast %24 : i32 to index
    %c0_10 = arith.constant 0 : index
    %26 = vector.load %arg12[%25, %c0_10] : memref<1024x128xf32, #tpu.memory_space<vmem>>, vector<1x128xf32>
    %c32 = arith.constant 32 : index
    %c0_11 = arith.constant 0 : index
    %27 = vector.load %arg13[%c32, %c0_11] : memref<64x128xf32, #tpu.memory_space<vmem>>, vector<1x128xf32>
    tpu.vector_store %arg13[%c32, %c0_11], %26 {strides = array<i32>} : memref<64x128xf32, #tpu.memory_space<vmem>>, vector<1x128xf32>,
    %28 = arith.index_cast %arg0 : i32 to index
    %c5 = arith.constant 5 : index
    %29 = memref.load %arg1[%28, %c5] : memref<4x64xi32, #tpu.memory_space<smem>>
    %30 = arith.index_cast %29 : i32 to index
    %c0_12 = arith.constant 0 : index
    %31 = vector.load %arg12[%30, %c0_12] : memref<1024x128xf32, #tpu.memory_space<vmem>>, vector<1x128xf32>
    %c40 = arith.constant 40 : index
    %c0_13 = arith.constant 0 : index
    %32 = vector.load %arg13[%c40, %c0_13] : memref<64x128xf32, #tpu.memory_space<vmem>>, vector<1x128xf32>
    tpu.vector_store %arg13[%c40, %c0_13], %31 {strides = array<i32>} : memref<64x128xf32, #tpu.memory_space<vmem>>, vector<1x128xf32>,
    %33 = arith.index_cast %arg0 : i32 to index
    %c6 = arith.constant 6 : index
    %34 = memref.load %arg1[%33, %c6] : memref<4x64xi32, #tpu.memory_space<smem>>
    %35 = arith.index_cast %34 : i32 to index
    %c0_14 = arith.constant 0 : index
    %36 = vector.load %arg12[%35, %c0_14] : memref<1024x128xf32, #tpu.memory_space<vmem>>, vector<1x128xf32>
    %c48 = arith.constant 48 : index
    %c0_15 = arith.constant 0 : index
    %37 = vector.load %arg13[%c48, %c0_15] : memref<64x128xf32, #tpu.memory_space<vmem>>, vector<1x128xf32>
    tpu.vector_store %arg13[%c48, %c0_15], %36 {strides = array<i32>} : memref<64x128xf32, #tpu.memory_space<vmem>>, vector<1x128xf32>,
    %38 = arith.index_cast %arg0 : i32 to index
    %c7 = arith.constant 7 : index
    %39 = memref.load %arg1[%38, %c7] : memref<4x64xi32, #tpu.memory_space<smem>>
    %40 = arith.index_cast %39 : i32 to index
    %c0_16 = arith.constant 0 : index
    %41 = vector.load %arg12[%40, %c0_16] : memref<1024x128xf32, #tpu.memory_space<vmem>>, vector<1x128xf32>
    %c56 = arith.constant 56 : index
    %c0_17 = arith.constant 0 : index
    %42 = vector.load %arg13[%c56, %c0_17] : memref<64x128xf32, #tpu.memory_space<vmem>>, vector<1x128xf32>
    tpu.vector_store %arg13[%c56, %c0_17], %41 {strides = array<i32>} : memref<64x128xf32, #tpu.memory_space<vmem>>, vector<1x128xf32>,
    %43 = arith.index_cast %arg0 : i32 to index
    %c8_18 = arith.constant 8 : index
    %44 = memref.load %arg1[%43, %c8_18] : memref<4x64xi32, #tpu.memory_space<smem>>
    %45 = arith.index_cast %44 : i32 to index
    %c0_19 = arith.constant 0 : index
    %46 = vector.load %arg12[%45, %c0_19] : memref<1024x128xf32, #tpu.memory_space<vmem>>, vector<1x128xf32>
    %c1_20 = arith.constant 1 : index
    %c0_21 = arith.constant 0 : index
    %47 = vector.load %arg13[%c1_20, %c0_21] : memref<64x128xf32, #tpu.memory_space<vmem>>, vector<1x128xf32>
    tpu.vector_store %arg13[%c1_20, %c0_21], %46 {strides = array<i32>} : memref<64x128xf32, #tpu.memory_space<vmem>>, vector<1x128xf32>,
    %48 = arith.index_cast %arg0 : i32 to index
    %c9 = arith.constant 9 : index
    %49 = memref.load %arg1[%48, %c9] : memref<4x64xi32, #tpu.memory_space<smem>>
    %50 = arith.index_cast %49 : i32 to index
    %c0_22 = arith.constant 0 : index
    %51 = vector.load %arg12[%50, %c0_22] : memref<1024x128xf32, #tpu.memory_space<vmem>>, vector<1x128xf32>
    %c9_23 = arith.constant 9 : index
    %c0_24 = arith.constant 0 : index
    %52 = vector.load %arg13[%c9_23, %c0_24] : memref<64x128xf32, #tpu.memory_space<vmem>>, vector<1x128xf32>
    tpu.vector_store %arg13[%c9_23, %c0_24], %51 {strides = array<i32>} : memref<64x128xf32, #tpu.memory_space<vmem>>, vector<1x128xf32>,
    %53 = arith.index_cast %arg0 : i32 to index
    %c10 = arith.constant 10 : index
    %54 = memref.load %arg1[%53, %c10] : memref<4x64xi32, #tpu.memory_space<smem>>
    %55 = arith.index_cast %54 : i32 to index
    %c0_25 = arith.constant 0 : index
    %56 = vector.load %arg12[%55, %c0_25] : memref<1024x128xf32, #tpu.memory_space<vmem>>, vector<1x128xf32>
    %c17 = arith.constant 17 : index
    %c0_26 = arith.constant 0 : index
    %57 = vector.load %arg13[%c17, %c0_26] : memref<64x128xf32, #tpu.memory_space<vmem>>, vector<1x128xf32>
    tpu.vector_store %arg13[%c17, %c0_26], %56 {strides = array<i32>} : memref<64x128xf32, #tpu.memory_space<vmem>>, vector<1x128xf32>,
    %58 = arith.index_cast %arg0 : i32 to index
    %c11 = arith.constant 11 : index
    %59 = memref.load %arg1[%58, %c11] : memref<4x64xi32, #tpu.memory_space<smem>>
    %60 = arith.index_cast %59 : i32 to index
    %c0_27 = arith.constant 0 : index
    %61 = vector.load %arg12[%60, %c0_27] : memref<1024x128xf32, #tpu.memory_space<vmem>>, vector<1x128xf32>
    %c25 = arith.constant 25 : index
    %c0_28 = arith.constant 0 : index
    %62 = vector.load %arg13[%c25, %c0_28] : memref<64x128xf32, #tpu.memory_space<vmem>>, vector<1x128xf32>
    tpu.vector_store %arg13[%c25, %c0_28], %61 {strides = array<i32>} : memref<64x128xf32, #tpu.memory_space<vmem>>, vector<1x128xf32>,
    %63 = arith.index_cast %arg0 : i32 to index
    %c12 = arith.constant 12 : index
    %64 = memref.load %arg1[%63, %c12] : memref<4x64xi32, #tpu.memory_space<smem>>
    %65 = arith.index_cast %64 : i32 to index
    %c0_29 = arith.constant 0 : index
    %66 = vector.load %arg12[%65, %c0_29] : memref<1024x128xf32, #tpu.memory_space<vmem>>, vector<1x128xf32>
    %c33 = arith.constant 33 : index
    %c0_30 = arith.constant 0 : index
    %67 = vector.load %arg13[%c33, %c0_30] : memref<64x128xf32, #tpu.memory_space<vmem>>, vector<1x128xf32>
    tpu.vector_store %arg13[%c33, %c0_30], %66 {strides = array<i32>} : memref<64x128xf32, #tpu.memory_space<vmem>>, vector<1x128xf32>,
    %68 = arith.index_cast %arg0 : i32 to index
    %c13 = arith.constant 13 : index
    %69 = memref.load %arg1[%68, %c13] : memref<4x64xi32, #tpu.memory_space<smem>>
    %70 = arith.index_cast %69 : i32 to index
    %c0_31 = arith.constant 0 : index
    %71 = vector.load %arg12[%70, %c0_31] : memref<1024x128xf32, #tpu.memory_space<vmem>>, vector<1x128xf32>
    %c41 = arith.constant 41 : index
    %c0_32 = arith.constant 0 : index
    %72 = vector.load %arg13[%c41, %c0_32] : memref<64x128xf32, #tpu.memory_space<vmem>>, vector<1x128xf32>
    tpu.vector_store %arg13[%c41, %c0_32], %71 {strides = array<i32>} : memref<64x128xf32, #tpu.memory_space<vmem>>, vector<1x128xf32>,
    %73 = arith.index_cast %arg0 : i32 to index
    %c14 = arith.constant 14 : index
    %74 = memref.load %arg1[%73, %c14] : memref<4x64xi32, #tpu.memory_space<smem>>
    %75 = arith.index_cast %74 : i32 to index
    %c0_33 = arith.constant 0 : index
    %76 = vector.load %arg12[%75, %c0_33] : memref<1024x128xf32, #tpu.memory_space<vmem>>, vector<1x128xf32>
    %c49 = arith.constant 49 : index
    %c0_34 = arith.constant 0 : index
    %77 = vector.load %arg13[%c49, %c0_34] : memref<64x128xf32, #tpu.memory_space<vmem>>, vector<1x128xf32>
    tpu.vector_store %arg13[%c49, %c0_34], %76 {strides = array<i32>} : memref<64x128xf32, #tpu.memory_space<vmem>>, vector<1x128xf32>,
    %78 = arith.index_cast %arg0 : i32 to index
    %c15 = arith.constant 15 : index
    %79 = memref.load %arg1[%78, %c15] : memref<4x64xi32, #tpu.memory_space<smem>>
    %80 = arith.index_cast %79 : i32 to index
    %c0_35 = arith.constant 0 : index
    %81 = vector.load %arg12[%80, %c0_35] : memref<1024x128xf32, #tpu.memory_space<vmem>>, vector<1x128xf32>
    %c57 = arith.constant 57 : index
    %c0_36 = arith.constant 0 : index
    %82 = vector.load %arg13[%c57, %c0_36] : memref<64x128xf32, #tpu.memory_space<vmem>>, vector<1x128xf32>
    tpu.vector_store %arg13[%c57, %c0_36], %81 {strides = array<i32>} : memref<64x128xf32, #tpu.memory_space<vmem>>, vector<1x128xf32>,
    %83 = arith.index_cast %arg0 : i32 to index
    %c16_37 = arith.constant 16 : index
    %84 = memref.load %arg1[%83, %c16_37] : memref<4x64xi32, #tpu.memory_space<smem>>
    %85 = arith.index_cast %84 : i32 to index
    %c0_38 = arith.constant 0 : index
    %86 = vector.load %arg12[%85, %c0_38] : memref<1024x128xf32, #tpu.memory_space<vmem>>, vector<1x128xf32>
    %c2_39 = arith.constant 2 : index
    %c0_40 = arith.constant 0 : index
    %87 = vector.load %arg13[%c2_39, %c0_40] : memref<64x128xf32, #tpu.memory_space<vmem>>, vector<1x128xf32>
    tpu.vector_store %arg13[%c2_39, %c0_40], %86 {strides = array<i32>} : memref<64x128xf32, #tpu.memory_space<vmem>>, vector<1x128xf32>,
    %88 = arith.index_cast %arg0 : i32 to index
    %c17_41 = arith.constant 17 : index
    %89 = memref.load %arg1[%88, %c17_41] : memref<4x64xi32, #tpu.memory_space<smem>>
    %90 = arith.index_cast %89 : i32 to index
    %c0_42 = arith.constant 0 : index
    %91 = vector.load %arg12[%90, %c0_42] : memref<1024x128xf32, #tpu.memory_space<vmem>>, vector<1x128xf32>
    %c10_43 = arith.constant 10 : index
    %c0_44 = arith.constant 0 : index
    %92 = vector.load %arg13[%c10_43, %c0_44] : memref<64x128xf32, #tpu.memory_space<vmem>>, vector<1x128xf32>
    tpu.vector_store %arg13[%c10_43, %c0_44], %91 {strides = array<i32>} : memref<64x128xf32, #tpu.memory_space<vmem>>, vector<1x128xf32>,
    %93 = arith.index_cast %arg0 : i32 to index
    %c18 = arith.constant 18 : index
    %94 = memref.load %arg1[%93, %c18] : memref<4x64xi32, #tpu.memory_space<smem>>
    %95 = arith.index_cast %94 : i32 to index
    %c0_45 = arith.constant 0 : index
    %96 = vector.load %arg12[%95, %c0_45] : memref<1024x128xf32, #tpu.memory_space<vmem>>, vector<1x128xf32>
    %c18_46 = arith.constant 18 : index
    %c0_47 = arith.constant 0 : index
    %97 = vector.load %arg13[%c18_46, %c0_47] : memref<64x128xf32, #tpu.memory_space<vmem>>, vector<1x128xf32>
    tpu.vector_store %arg13[%c18_46, %c0_47], %96 {strides = array<i32>} : memref<64x128xf32, #tpu.memory_space<vmem>>, vector<1x128xf32>,
    %98 = arith.index_cast %arg0 : i32 to index
    %c19 = arith.constant 19 : index
    %99 = memref.load %arg1[%98, %c19] : memref<4x64xi32, #tpu.memory_space<smem>>
    %100 = arith.index_cast %99 : i32 to index
    %c0_48 = arith.constant 0 : index
    %101 = vector.load %arg12[%100, %c0_48] : memref<1024x128xf32, #tpu.memory_space<vmem>>, vector<1x128xf32>
    %c26 = arith.constant 26 : index
    %c0_49 = arith.constant 0 : index
    %102 = vector.load %arg13[%c26, %c0_49] : memref<64x128xf32, #tpu.memory_space<vmem>>, vector<1x128xf32>
    tpu.vector_store %arg13[%c26, %c0_49], %101 {strides = array<i32>} : memref<64x128xf32, #tpu.memory_space<vmem>>, vector<1x128xf32>,
    %103 = arith.index_cast %arg0 : i32 to index
    %c20 = arith.constant 20 : index
    %104 = memref.load %arg1[%103, %c20] : memref<4x64xi32, #tpu.memory_space<smem>>
    %105 = arith.index_cast %104 : i32 to index
    %c0_50 = arith.constant 0 : index
    %106 = vector.load %arg12[%105, %c0_50] : memref<1024x128xf32, #tpu.memory_space<vmem>>, vector<1x128xf32>
    %c34 = arith.constant 34 : index
    %c0_51 = arith.constant 0 : index
    %107 = vector.load %arg13[%c34, %c0_51] : memref<64x128xf32, #tpu.memory_space<vmem>>, vector<1x128xf32>
    tpu.vector_store %arg13[%c34, %c0_51], %106 {strides = array<i32>} : memref<64x128xf32, #tpu.memory_space<vmem>>, vector<1x128xf32>,
    %108 = arith.index_cast %arg0 : i32 to index
    %c21 = arith.constant 21 : index
    %109 = memref.load %arg1[%108, %c21] : memref<4x64xi32, #tpu.memory_space<smem>>
    %110 = arith.index_cast %109 : i32 to index
    %c0_52 = arith.constant 0 : index
    %111 = vector.load %arg12[%110, %c0_52] : memref<1024x128xf32, #tpu.memory_space<vmem>>, vector<1x128xf32>
    %c42 = arith.constant 42 : index
    %c0_53 = arith.constant 0 : index
    %112 = vector.load %arg13[%c42, %c0_53] : memref<64x128xf32, #tpu.memory_space<vmem>>, vector<1x128xf32>
    tpu.vector_store %arg13[%c42, %c0_53], %111 {strides = array<i32>} : memref<64x128xf32, #tpu.memory_space<vmem>>, vector<1x128xf32>,
    %113 = arith.index_cast %arg0 : i32 to index
    %c22 = arith.constant 22 : index
    %114 = memref.load %arg1[%113, %c22] : memref<4x64xi32, #tpu.memory_space<smem>>
    %115 = arith.index_cast %114 : i32 to index
    %c0_54 = arith.constant 0 : index
    %116 = vector.load %arg12[%115, %c0_54] : memref<1024x128xf32, #tpu.memory_space<vmem>>, vector<1x128xf32>
    %c50 = arith.constant 50 : index
    %c0_55 = arith.constant 0 : index
    %117 = vector.load %arg13[%c50, %c0_55] : memref<64x128xf32, #tpu.memory_space<vmem>>, vector<1x128xf32>
    tpu.vector_store %arg13[%c50, %c0_55], %116 {strides = array<i32>} : memref<64x128xf32, #tpu.memory_space<vmem>>, vector<1x128xf32>,
    %118 = arith.index_cast %arg0 : i32 to index
    %c23 = arith.constant 23 : index
    %119 = memref.load %arg1[%118, %c23] : memref<4x64xi32, #tpu.memory_space<smem>>
    %120 = arith.index_cast %119 : i32 to index
    %c0_56 = arith.constant 0 : index
    %121 = vector.load %arg12[%120, %c0_56] : memref<1024x128xf32, #tpu.memory_space<vmem>>, vector<1x128xf32>
    %c58 = arith.constant 58 : index
    %c0_57 = arith.constant 0 : index
    %122 = vector.load %arg13[%c58, %c0_57] : memref<64x128xf32, #tpu.memory_space<vmem>>, vector<1x128xf32>
    tpu.vector_store %arg13[%c58, %c0_57], %121 {strides = array<i32>} : memref<64x128xf32, #tpu.memory_space<vmem>>, vector<1x128xf32>,
    %123 = arith.index_cast %arg0 : i32 to index
    %c24_58 = arith.constant 24 : index
    %124 = memref.load %arg1[%123, %c24_58] : memref<4x64xi32, #tpu.memory_space<smem>>
    %125 = arith.index_cast %124 : i32 to index
    %c0_59 = arith.constant 0 : index
    %126 = vector.load %arg12[%125, %c0_59] : memref<1024x128xf32, #tpu.memory_space<vmem>>, vector<1x128xf32>
    %c3_60 = arith.constant 3 : index
    %c0_61 = arith.constant 0 : index
    %127 = vector.load %arg13[%c3_60, %c0_61] : memref<64x128xf32, #tpu.memory_space<vmem>>, vector<1x128xf32>
    tpu.vector_store %arg13[%c3_60, %c0_61], %126 {strides = array<i32>} : memref<64x128xf32, #tpu.memory_space<vmem>>, vector<1x128xf32>,
    %128 = arith.index_cast %arg0 : i32 to index
    %c25_62 = arith.constant 25 : index
    %129 = memref.load %arg1[%128, %c25_62] : memref<4x64xi32, #tpu.memory_space<smem>>
    %130 = arith.index_cast %129 : i32 to index
    %c0_63 = arith.constant 0 : index
    %131 = vector.load %arg12[%130, %c0_63] : memref<1024x128xf32, #tpu.memory_space<vmem>>, vector<1x128xf32>
    %c11_64 = arith.constant 11 : index
    %c0_65 = arith.constant 0 : index
    %132 = vector.load %arg13[%c11_64, %c0_65] : memref<64x128xf32, #tpu.memory_space<vmem>>, vector<1x128xf32>
    tpu.vector_store %arg13[%c11_64, %c0_65], %131 {strides = array<i32>} : memref<64x128xf32, #tpu.memory_space<vmem>>, vector<1x128xf32>,
    %133 = arith.index_cast %arg0 : i32 to index
    %c26_66 = arith.constant 26 : index
    %134 = memref.load %arg1[%133, %c26_66] : memref<4x64xi32, #tpu.memory_space<smem>>
    %135 = arith.index_cast %134 : i32 to index
    %c0_67 = arith.constant 0 : index
    %136 = vector.load %arg12[%135, %c0_67] : memref<1024x128xf32, #tpu.memory_space<vmem>>, vector<1x128xf32>
    %c19_68 = arith.constant 19 : index
    %c0_69 = arith.constant 0 : index
    %137 = vector.load %arg13[%c19_68, %c0_69] : memref<64x128xf32, #tpu.memory_space<vmem>>, vector<1x128xf32>
    tpu.vector_store %arg13[%c19_68, %c0_69], %136 {strides = array<i32>} : memref<64x128xf32, #tpu.memory_space<vmem>>, vector<1x128xf32>,
    %138 = arith.index_cast %arg0 : i32 to index
    %c27 = arith.constant 27 : index
    %139 = memref.load %arg1[%138, %c27] : memref<4x64xi32, #tpu.memory_space<smem>>
    %140 = arith.index_cast %139 : i32 to index
    %c0_70 = arith.constant 0 : index
    %141 = vector.load %arg12[%140, %c0_70] : memref<1024x128xf32, #tpu.memory_space<vmem>>, vector<1x128xf32>
    %c27_71 = arith.constant 27 : index
    %c0_72 = arith.constant 0 : index
    %142 = vector.load %arg13[%c27_71, %c0_72] : memref<64x128xf32, #tpu.memory_space<vmem>>, vector<1x128xf32>
    tpu.vector_store %arg13[%c27_71, %c0_72], %141 {strides = array<i32>} : memref<64x128xf32, #tpu.memory_space<vmem>>, vector<1x128xf32>,
    %143 = arith.index_cast %arg0 : i32 to index
    %c28 = arith.constant 28 : index
    %144 = memref.load %arg1[%143, %c28] : memref<4x64xi32, #tpu.memory_space<smem>>
    %145 = arith.index_cast %144 : i32 to index
    %c0_73 = arith.constant 0 : index
    %146 = vector.load %arg12[%145, %c0_73] : memref<1024x128xf32, #tpu.memory_space<vmem>>, vector<1x128xf32>
    %c35 = arith.constant 35 : index
    %c0_74 = arith.constant 0 : index
    %147 = vector.load %arg13[%c35, %c0_74] : memref<64x128xf32, #tpu.memory_space<vmem>>, vector<1x128xf32>
    tpu.vector_store %arg13[%c35, %c0_74], %146 {strides = array<i32>} : memref<64x128xf32, #tpu.memory_space<vmem>>, vector<1x128xf32>,
    %148 = arith.index_cast %arg0 : i32 to index
    %c29 = arith.constant 29 : index
    %149 = memref.load %arg1[%148, %c29] : memref<4x64xi32, #tpu.memory_space<smem>>
    %150 = arith.index_cast %149 : i32 to index
    %c0_75 = arith.constant 0 : index
    %151 = vector.load %arg12[%150, %c0_75] : memref<1024x128xf32, #tpu.memory_space<vmem>>, vector<1x128xf32>
    %c43 = arith.constant 43 : index
    %c0_76 = arith.constant 0 : index
    %152 = vector.load %arg13[%c43, %c0_76] : memref<64x128xf32, #tpu.memory_space<vmem>>, vector<1x128xf32>
    tpu.vector_store %arg13[%c43, %c0_76], %151 {strides = array<i32>} : memref<64x128xf32, #tpu.memory_space<vmem>>, vector<1x128xf32>,
    %153 = arith.index_cast %arg0 : i32 to index
    %c30 = arith.constant 30 : index
    %154 = memref.load %arg1[%153, %c30] : memref<4x64xi32, #tpu.memory_space<smem>>
    %155 = arith.index_cast %154 : i32 to index
    %c0_77 = arith.constant 0 : index
    %156 = vector.load %arg12[%155, %c0_77] : memref<1024x128xf32, #tpu.memory_space<vmem>>, vector<1x128xf32>
    %c51 = arith.constant 51 : index
    %c0_78 = arith.constant 0 : index
    %157 = vector.load %arg13[%c51, %c0_78] : memref<64x128xf32, #tpu.memory_space<vmem>>, vector<1x128xf32>
    tpu.vector_store %arg13[%c51, %c0_78], %156 {strides = array<i32>} : memref<64x128xf32, #tpu.memory_space<vmem>>, vector<1x128xf32>,
    %158 = arith.index_cast %arg0 : i32 to index
    %c31 = arith.constant 31 : index
    %159 = memref.load %arg1[%158, %c31] : memref<4x64xi32, #tpu.memory_space<smem>>
    %160 = arith.index_cast %159 : i32 to index
    %c0_79 = arith.constant 0 : index
    %161 = vector.load %arg12[%160, %c0_79] : memref<1024x128xf32, #tpu.memory_space<vmem>>, vector<1x128xf32>
    %c59 = arith.constant 59 : index
    %c0_80 = arith.constant 0 : index
    %162 = vector.load %arg13[%c59, %c0_80] : memref<64x128xf32, #tpu.memory_space<vmem>>, vector<1x128xf32>
    tpu.vector_store %arg13[%c59, %c0_80], %161 {strides = array<i32>} : memref<64x128xf32, #tpu.memory_space<vmem>>, vector<1x128xf32>,
    %163 = arith.index_cast %arg0 : i32 to index
    %c32_81 = arith.constant 32 : index
    %164 = memref.load %arg1[%163, %c32_81] : memref<4x64xi32, #tpu.memory_space<smem>>
    %165 = arith.index_cast %164 : i32 to index
    %c0_82 = arith.constant 0 : index
    %166 = vector.load %arg12[%165, %c0_82] : memref<1024x128xf32, #tpu.memory_space<vmem>>, vector<1x128xf32>
    %c4_83 = arith.constant 4 : index
    %c0_84 = arith.constant 0 : index
    %167 = vector.load %arg13[%c4_83, %c0_84] : memref<64x128xf32, #tpu.memory_space<vmem>>, vector<1x128xf32>
    tpu.vector_store %arg13[%c4_83, %c0_84], %166 {strides = array<i32>} : memref<64x128xf32, #tpu.memory_space<vmem>>, vector<1x128xf32>,
    %168 = arith.index_cast %arg0 : i32 to index
    %c33_85 = arith.constant 33 : index
    %169 = memref.load %arg1[%168, %c33_85] : memref<4x64xi32, #tpu.memory_space<smem>>
    %170 = arith.index_cast %169 : i32 to index
    %c0_86 = arith.constant 0 : index
    %171 = vector.load %arg12[%170, %c0_86] : memref<1024x128xf32, #tpu.memory_space<vmem>>, vector<1x128xf32>
    %c12_87 = arith.constant 12 : index
    %c0_88 = arith.constant 0 : index
    %172 = vector.load %arg13[%c12_87, %c0_88] : memref<64x128xf32, #tpu.memory_space<vmem>>, vector<1x128xf32>
    tpu.vector_store %arg13[%c12_87, %c0_88], %171 {strides = array<i32>} : memref<64x128xf32, #tpu.memory_space<vmem>>, vector<1x128xf32>,
    %173 = arith.index_cast %arg0 : i32 to index
    %c34_89 = arith.constant 34 : index
    %174 = memref.load %arg1[%173, %c34_89] : memref<4x64xi32, #tpu.memory_space<smem>>
    %175 = arith.index_cast %174 : i32 to index
    %c0_90 = arith.constant 0 : index
    %176 = vector.load %arg12[%175, %c0_90] : memref<1024x128xf32, #tpu.memory_space<vmem>>, vector<1x128xf32>
    %c20_91 = arith.constant 20 : index
    %c0_92 = arith.constant 0 : index
    %177 = vector.load %arg13[%c20_91, %c0_92] : memref<64x128xf32, #tpu.memory_space<vmem>>, vector<1x128xf32>
    tpu.vector_store %arg13[%c20_91, %c0_92], %176 {strides = array<i32>} : memref<64x128xf32, #tpu.memory_space<vmem>>, vector<1x128xf32>,
    %178 = arith.index_cast %arg0 : i32 to index
    %c35_93 = arith.constant 35 : index
    %179 = memref.load %arg1[%178, %c35_93] : memref<4x64xi32, #tpu.memory_space<smem>>
    %180 = arith.index_cast %179 : i32 to index
    %c0_94 = arith.constant 0 : index
    %181 = vector.load %arg12[%180, %c0_94] : memref<1024x128xf32, #tpu.memory_space<vmem>>, vector<1x128xf32>
    %c28_95 = arith.constant 28 : index
    %c0_96 = arith.constant 0 : index
    %182 = vector.load %arg13[%c28_95, %c0_96] : memref<64x128xf32, #tpu.memory_space<vmem>>, vector<1x128xf32>
    tpu.vector_store %arg13[%c28_95, %c0_96], %181 {strides = array<i32>} : memref<64x128xf32, #tpu.memory_space<vmem>>, vector<1x128xf32>,
    %183 = arith.index_cast %arg0 : i32 to index
    %c36 = arith.constant 36 : index
    %184 = memref.load %arg1[%183, %c36] : memref<4x64xi32, #tpu.memory_space<smem>>
    %185 = arith.index_cast %184 : i32 to index
    %c0_97 = arith.constant 0 : index
    %186 = vector.load %arg12[%185, %c0_97] : memref<1024x128xf32, #tpu.memory_space<vmem>>, vector<1x128xf32>
    %c36_98 = arith.constant 36 : index
    %c0_99 = arith.constant 0 : index
    %187 = vector.load %arg13[%c36_98, %c0_99] : memref<64x128xf32, #tpu.memory_space<vmem>>, vector<1x128xf32>
    tpu.vector_store %arg13[%c36_98, %c0_99], %186 {strides = array<i32>} : memref<64x128xf32, #tpu.memory_space<vmem>>, vector<1x128xf32>,
    %188 = arith.index_cast %arg0 : i32 to index
    %c37 = arith.constant 37 : index
    %189 = memref.load %arg1[%188, %c37] : memref<4x64xi32, #tpu.memory_space<smem>>
    %190 = arith.index_cast %189 : i32 to index
    %c0_100 = arith.constant 0 : index
    %191 = vector.load %arg12[%190, %c0_100] : memref<1024x128xf32, #tpu.memory_space<vmem>>, vector<1x128xf32>
    %c44 = arith.constant 44 : index
    %c0_101 = arith.constant 0 : index
    %192 = vector.load %arg13[%c44, %c0_101] : memref<64x128xf32, #tpu.memory_space<vmem>>, vector<1x128xf32>
    tpu.vector_store %arg13[%c44, %c0_101], %191 {strides = array<i32>} : memref<64x128xf32, #tpu.memory_space<vmem>>, vector<1x128xf32>,
    %193 = arith.index_cast %arg0 : i32 to index
    %c38 = arith.constant 38 : index
    %194 = memref.load %arg1[%193, %c38] : memref<4x64xi32, #tpu.memory_space<smem>>
    %195 = arith.index_cast %194 : i32 to index
    %c0_102 = arith.constant 0 : index
    %196 = vector.load %arg12[%195, %c0_102] : memref<1024x128xf32, #tpu.memory_space<vmem>>, vector<1x128xf32>
    %c52 = arith.constant 52 : index
    %c0_103 = arith.constant 0 : index
    %197 = vector.load %arg13[%c52, %c0_103] : memref<64x128xf32, #tpu.memory_space<vmem>>, vector<1x128xf32>
    tpu.vector_store %arg13[%c52, %c0_103], %196 {strides = array<i32>} : memref<64x128xf32, #tpu.memory_space<vmem>>, vector<1x128xf32>,
    %198 = arith.index_cast %arg0 : i32 to index
    %c39 = arith.constant 39 : index
    %199 = memref.load %arg1[%198, %c39] : memref<4x64xi32, #tpu.memory_space<smem>>
    %200 = arith.index_cast %199 : i32 to index
    %c0_104 = arith.constant 0 : index
    %201 = vector.load %arg12[%200, %c0_104] : memref<1024x128xf32, #tpu.memory_space<vmem>>, vector<1x128xf32>
    %c60 = arith.constant 60 : index
    %c0_105 = arith.constant 0 : index
    %202 = vector.load %arg13[%c60, %c0_105] : memref<64x128xf32, #tpu.memory_space<vmem>>, vector<1x128xf32>
    tpu.vector_store %arg13[%c60, %c0_105], %201 {strides = array<i32>} : memref<64x128xf32, #tpu.memory_space<vmem>>, vector<1x128xf32>,
    %203 = arith.index_cast %arg0 : i32 to index
    %c40_106 = arith.constant 40 : index
    %204 = memref.load %arg1[%203, %c40_106] : memref<4x64xi32, #tpu.memory_space<smem>>
    %205 = arith.index_cast %204 : i32 to index
    %c0_107 = arith.constant 0 : index
    %206 = vector.load %arg12[%205, %c0_107] : memref<1024x128xf32, #tpu.memory_space<vmem>>, vector<1x128xf32>
    %c5_108 = arith.constant 5 : index
    %c0_109 = arith.constant 0 : index
    %207 = vector.load %arg13[%c5_108, %c0_109] : memref<64x128xf32, #tpu.memory_space<vmem>>, vector<1x128xf32>
    tpu.vector_store %arg13[%c5_108, %c0_109], %206 {strides = array<i32>} : memref<64x128xf32, #tpu.memory_space<vmem>>, vector<1x128xf32>,
    %208 = arith.index_cast %arg0 : i32 to index
    %c41_110 = arith.constant 41 : index
    %209 = memref.load %arg1[%208, %c41_110] : memref<4x64xi32, #tpu.memory_space<smem>>
    %210 = arith.index_cast %209 : i32 to index
    %c0_111 = arith.constant 0 : index
    %211 = vector.load %arg12[%210, %c0_111] : memref<1024x128xf32, #tpu.memory_space<vmem>>, vector<1x128xf32>
    %c13_112 = arith.constant 13 : index
    %c0_113 = arith.constant 0 : index
    %212 = vector.load %arg13[%c13_112, %c0_113] : memref<64x128xf32, #tpu.memory_space<vmem>>, vector<1x128xf32>
    tpu.vector_store %arg13[%c13_112, %c0_113], %211 {strides = array<i32>} : memref<64x128xf32, #tpu.memory_space<vmem>>, vector<1x128xf32>,
    %213 = arith.index_cast %arg0 : i32 to index
    %c42_114 = arith.constant 42 : index
    %214 = memref.load %arg1[%213, %c42_114] : memref<4x64xi32, #tpu.memory_space<smem>>
    %215 = arith.index_cast %214 : i32 to index
    %c0_115 = arith.constant 0 : index
    %216 = vector.load %arg12[%215, %c0_115] : memref<1024x128xf32, #tpu.memory_space<vmem>>, vector<1x128xf32>
    %c21_116 = arith.constant 21 : index
    %c0_117 = arith.constant 0 : index
    %217 = vector.load %arg13[%c21_116, %c0_117] : memref<64x128xf32, #tpu.memory_space<vmem>>, vector<1x128xf32>
    tpu.vector_store %arg13[%c21_116, %c0_117], %216 {strides = array<i32>} : memref<64x128xf32, #tpu.memory_space<vmem>>, vector<1x128xf32>,
    %218 = arith.index_cast %arg0 : i32 to index
    %c43_118 = arith.constant 43 : index
    %219 = memref.load %arg1[%218, %c43_118] : memref<4x64xi32, #tpu.memory_space<smem>>
    %220 = arith.index_cast %219 : i32 to index
    %c0_119 = arith.constant 0 : index
    %221 = vector.load %arg12[%220, %c0_119] : memref<1024x128xf32, #tpu.memory_space<vmem>>, vector<1x128xf32>
    %c29_120 = arith.constant 29 : index
    %c0_121 = arith.constant 0 : index
    %222 = vector.load %arg13[%c29_120, %c0_121] : memref<64x128xf32, #tpu.memory_space<vmem>>, vector<1x128xf32>
    tpu.vector_store %arg13[%c29_120, %c0_121], %221 {strides = array<i32>} : memref<64x128xf32, #tpu.memory_space<vmem>>, vector<1x128xf32>,
    %223 = arith.index_cast %arg0 : i32 to index
    %c44_122 = arith.constant 44 : index
    %224 = memref.load %arg1[%223, %c44_122] : memref<4x64xi32, #tpu.memory_space<smem>>
    %225 = arith.index_cast %224 : i32 to index
    %c0_123 = arith.constant 0 : index
    %226 = vector.load %arg12[%225, %c0_123] : memref<1024x128xf32, #tpu.memory_space<vmem>>, vector<1x128xf32>
    %c37_124 = arith.constant 37 : index
    %c0_125 = arith.constant 0 : index
    %227 = vector.load %arg13[%c37_124, %c0_125] : memref<64x128xf32, #tpu.memory_space<vmem>>, vector<1x128xf32>
    tpu.vector_store %arg13[%c37_124, %c0_125], %226 {strides = array<i32>} : memref<64x128xf32, #tpu.memory_space<vmem>>, vector<1x128xf32>,
    %228 = arith.index_cast %arg0 : i32 to index
    %c45 = arith.constant 45 : index
    %229 = memref.load %arg1[%228, %c45] : memref<4x64xi32, #tpu.memory_space<smem>>
    %230 = arith.index_cast %229 : i32 to index
    %c0_126 = arith.constant 0 : index
    %231 = vector.load %arg12[%230, %c0_126] : memref<1024x128xf32, #tpu.memory_space<vmem>>, vector<1x128xf32>
    %c45_127 = arith.constant 45 : index
    %c0_128 = arith.constant 0 : index
    %232 = vector.load %arg13[%c45_127, %c0_128] : memref<64x128xf32, #tpu.memory_space<vmem>>, vector<1x128xf32>
    tpu.vector_store %arg13[%c45_127, %c0_128], %231 {strides = array<i32>} : memref<64x128xf32, #tpu.memory_space<vmem>>, vector<1x128xf32>,
    %233 = arith.index_cast %arg0 : i32 to index
    %c46 = arith.constant 46 : index
    %234 = memref.load %arg1[%233, %c46] : memref<4x64xi32, #tpu.memory_space<smem>>
    %235 = arith.index_cast %234 : i32 to index
    %c0_129 = arith.constant 0 : index
    %236 = vector.load %arg12[%235, %c0_129] : memref<1024x128xf32, #tpu.memory_space<vmem>>, vector<1x128xf32>
    %c53 = arith.constant 53 : index
    %c0_130 = arith.constant 0 : index
    %237 = vector.load %arg13[%c53, %c0_130] : memref<64x128xf32, #tpu.memory_space<vmem>>, vector<1x128xf32>
    tpu.vector_store %arg13[%c53, %c0_130], %236 {strides = array<i32>} : memref<64x128xf32, #tpu.memory_space<vmem>>, vector<1x128xf32>,
    %238 = arith.index_cast %arg0 : i32 to index
    %c47 = arith.constant 47 : index
    %239 = memref.load %arg1[%238, %c47] : memref<4x64xi32, #tpu.memory_space<smem>>
    %240 = arith.index_cast %239 : i32 to index
    %c0_131 = arith.constant 0 : index
    %241 = vector.load %arg12[%240, %c0_131] : memref<1024x128xf32, #tpu.memory_space<vmem>>, vector<1x128xf32>
    %c61 = arith.constant 61 : index
    %c0_132 = arith.constant 0 : index
    %242 = vector.load %arg13[%c61, %c0_132] : memref<64x128xf32, #tpu.memory_space<vmem>>, vector<1x128xf32>
    tpu.vector_store %arg13[%c61, %c0_132], %241 {strides = array<i32>} : memref<64x128xf32, #tpu.memory_space<vmem>>, vector<1x128xf32>,
    %243 = arith.index_cast %arg0 : i32 to index
    %c48_133 = arith.constant 48 : index
    %244 = memref.load %arg1[%243, %c48_133] : memref<4x64xi32, #tpu.memory_space<smem>>
    %245 = arith.index_cast %244 : i32 to index
    %c0_134 = arith.constant 0 : index
    %246 = vector.load %arg12[%245, %c0_134] : memref<1024x128xf32, #tpu.memory_space<vmem>>, vector<1x128xf32>
    %c6_135 = arith.constant 6 : index
    %c0_136 = arith.constant 0 : index
    %247 = vector.load %arg13[%c6_135, %c0_136] : memref<64x128xf32, #tpu.memory_space<vmem>>, vector<1x128xf32>
    tpu.vector_store %arg13[%c6_135, %c0_136], %246 {strides = array<i32>} : memref<64x128xf32, #tpu.memory_space<vmem>>, vector<1x128xf32>,
    %248 = arith.index_cast %arg0 : i32 to index
    %c49_137 = arith.constant 49 : index
    %249 = memref.load %arg1[%248, %c49_137] : memref<4x64xi32, #tpu.memory_space<smem>>
    %250 = arith.index_cast %249 : i32 to index
    %c0_138 = arith.constant 0 : index
    %251 = vector.load %arg12[%250, %c0_138] : memref<1024x128xf32, #tpu.memory_space<vmem>>, vector<1x128xf32>
    %c14_139 = arith.constant 14 : index
    %c0_140 = arith.constant 0 : index
    %252 = vector.load %arg13[%c14_139, %c0_140] : memref<64x128xf32, #tpu.memory_space<vmem>>, vector<1x128xf32>
    tpu.vector_store %arg13[%c14_139, %c0_140], %251 {strides = array<i32>} : memref<64x128xf32, #tpu.memory_space<vmem>>, vector<1x128xf32>,
    %253 = arith.index_cast %arg0 : i32 to index
    %c50_141 = arith.constant 50 : index
    %254 = memref.load %arg1[%253, %c50_141] : memref<4x64xi32, #tpu.memory_space<smem>>
    %255 = arith.index_cast %254 : i32 to index
    %c0_142 = arith.constant 0 : index
    %256 = vector.load %arg12[%255, %c0_142] : memref<1024x128xf32, #tpu.memory_space<vmem>>, vector<1x128xf32>
    %c22_143 = arith.constant 22 : index
    %c0_144 = arith.constant 0 : index
    %257 = vector.load %arg13[%c22_143, %c0_144] : memref<64x128xf32, #tpu.memory_space<vmem>>, vector<1x128xf32>
    tpu.vector_store %arg13[%c22_143, %c0_144], %256 {strides = array<i32>} : memref<64x128xf32, #tpu.memory_space<vmem>>, vector<1x128xf32>,
    %258 = arith.index_cast %arg0 : i32 to index
    %c51_145 = arith.constant 51 : index
    %259 = memref.load %arg1[%258, %c51_145] : memref<4x64xi32, #tpu.memory_space<smem>>
    %260 = arith.index_cast %259 : i32 to index
    %c0_146 = arith.constant 0 : index
    %261 = vector.load %arg12[%260, %c0_146] : memref<1024x128xf32, #tpu.memory_space<vmem>>, vector<1x128xf32>
    %c30_147 = arith.constant 30 : index
    %c0_148 = arith.constant 0 : index
    %262 = vector.load %arg13[%c30_147, %c0_148] : memref<64x128xf32, #tpu.memory_space<vmem>>, vector<1x128xf32>
    tpu.vector_store %arg13[%c30_147, %c0_148], %261 {strides = array<i32>} : memref<64x128xf32, #tpu.memory_space<vmem>>, vector<1x128xf32>,
    %263 = arith.index_cast %arg0 : i32 to index
    %c52_149 = arith.constant 52 : index
    %264 = memref.load %arg1[%263, %c52_149] : memref<4x64xi32, #tpu.memory_space<smem>>
    %265 = arith.index_cast %264 : i32 to index
    %c0_150 = arith.constant 0 : index
    %266 = vector.load %arg12[%265, %c0_150] : memref<1024x128xf32, #tpu.memory_space<vmem>>, vector<1x128xf32>
    %c38_151 = arith.constant 38 : index
    %c0_152 = arith.constant 0 : index
    %267 = vector.load %arg13[%c38_151, %c0_152] : memref<64x128xf32, #tpu.memory_space<vmem>>, vector<1x128xf32>
    tpu.vector_store %arg13[%c38_151, %c0_152], %266 {strides = array<i32>} : memref<64x128xf32, #tpu.memory_space<vmem>>, vector<1x128xf32>,
    %268 = arith.index_cast %arg0 : i32 to index
    %c53_153 = arith.constant 53 : index
    %269 = memref.load %arg1[%268, %c53_153] : memref<4x64xi32, #tpu.memory_space<smem>>
    %270 = arith.index_cast %269 : i32 to index
    %c0_154 = arith.constant 0 : index
    %271 = vector.load %arg12[%270, %c0_154] : memref<1024x128xf32, #tpu.memory_space<vmem>>, vector<1x128xf32>
    %c46_155 = arith.constant 46 : index
    %c0_156 = arith.constant 0 : index
    %272 = vector.load %arg13[%c46_155, %c0_156] : memref<64x128xf32, #tpu.memory_space<vmem>>, vector<1x128xf32>
    tpu.vector_store %arg13[%c46_155, %c0_156], %271 {strides = array<i32>} : memref<64x128xf32, #tpu.memory_space<vmem>>, vector<1x128xf32>,
    %273 = arith.index_cast %arg0 : i32 to index
    %c54 = arith.constant 54 : index
    %274 = memref.load %arg1[%273, %c54] : memref<4x64xi32, #tpu.memory_space<smem>>
    %275 = arith.index_cast %274 : i32 to index
    %c0_157 = arith.constant 0 : index
    %276 = vector.load %arg12[%275, %c0_157] : memref<1024x128xf32, #tpu.memory_space<vmem>>, vector<1x128xf32>
    %c54_158 = arith.constant 54 : index
    %c0_159 = arith.constant 0 : index
    %277 = vector.load %arg13[%c54_158, %c0_159] : memref<64x128xf32, #tpu.memory_space<vmem>>, vector<1x128xf32>
    tpu.vector_store %arg13[%c54_158, %c0_159], %276 {strides = array<i32>} : memref<64x128xf32, #tpu.memory_space<vmem>>, vector<1x128xf32>,
    %278 = arith.index_cast %arg0 : i32 to index
    %c55 = arith.constant 55 : index
    %279 = memref.load %arg1[%278, %c55] : memref<4x64xi32, #tpu.memory_space<smem>>
    %280 = arith.index_cast %279 : i32 to index
    %c0_160 = arith.constant 0 : index
    %281 = vector.load %arg12[%280, %c0_160] : memref<1024x128xf32, #tpu.memory_space<vmem>>, vector<1x128xf32>
    %c62 = arith.constant 62 : index
    %c0_161 = arith.constant 0 : index
    %282 = vector.load %arg13[%c62, %c0_161] : memref<64x128xf32, #tpu.memory_space<vmem>>, vector<1x128xf32>
    tpu.vector_store %arg13[%c62, %c0_161], %281 {strides = array<i32>} : memref<64x128xf32, #tpu.memory_space<vmem>>, vector<1x128xf32>,
    %283 = arith.index_cast %arg0 : i32 to index
    %c56_162 = arith.constant 56 : index
    %284 = memref.load %arg1[%283, %c56_162] : memref<4x64xi32, #tpu.memory_space<smem>>
    %285 = arith.index_cast %284 : i32 to index
    %c0_163 = arith.constant 0 : index
    %286 = vector.load %arg12[%285, %c0_163] : memref<1024x128xf32, #tpu.memory_space<vmem>>, vector<1x128xf32>
    %c7_164 = arith.constant 7 : index
    %c0_165 = arith.constant 0 : index
    %287 = vector.load %arg13[%c7_164, %c0_165] : memref<64x128xf32, #tpu.memory_space<vmem>>, vector<1x128xf32>
    tpu.vector_store %arg13[%c7_164, %c0_165], %286 {strides = array<i32>} : memref<64x128xf32, #tpu.memory_space<vmem>>, vector<1x128xf32>,
    %288 = arith.index_cast %arg0 : i32 to index
    %c57_166 = arith.constant 57 : index
    %289 = memref.load %arg1[%288, %c57_166] : memref<4x64xi32, #tpu.memory_space<smem>>
    %290 = arith.index_cast %289 : i32 to index
    %c0_167 = arith.constant 0 : index
    %291 = vector.load %arg12[%290, %c0_167] : memref<1024x128xf32, #tpu.memory_space<vmem>>, vector<1x128xf32>
    %c15_168 = arith.constant 15 : index
    %c0_169 = arith.constant 0 : index
    %292 = vector.load %arg13[%c15_168, %c0_169] : memref<64x128xf32, #tpu.memory_space<vmem>>, vector<1x128xf32>
    tpu.vector_store %arg13[%c15_168, %c0_169], %291 {strides = array<i32>} : memref<64x128xf32, #tpu.memory_space<vmem>>, vector<1x128xf32>,
    %293 = arith.index_cast %arg0 : i32 to index
    %c58_170 = arith.constant 58 : index
    %294 = memref.load %arg1[%293, %c58_170] : memref<4x64xi32, #tpu.memory_space<smem>>
    %295 = arith.index_cast %294 : i32 to index
    %c0_171 = arith.constant 0 : index
    %296 = vector.load %arg12[%295, %c0_171] : memref<1024x128xf32, #tpu.memory_space<vmem>>, vector<1x128xf32>
    %c23_172 = arith.constant 23 : index
    %c0_173 = arith.constant 0 : index
    %297 = vector.load %arg13[%c23_172, %c0_173] : memref<64x128xf32, #tpu.memory_space<vmem>>, vector<1x128xf32>
    tpu.vector_store %arg13[%c23_172, %c0_173], %296 {strides = array<i32>} : memref<64x128xf32, #tpu.memory_space<vmem>>, vector<1x128xf32>,
    %298 = arith.index_cast %arg0 : i32 to index
    %c59_174 = arith.constant 59 : index
    %299 = memref.load %arg1[%298, %c59_174] : memref<4x64xi32, #tpu.memory_space<smem>>
    %300 = arith.index_cast %299 : i32 to index
    %c0_175 = arith.constant 0 : index
    %301 = vector.load %arg12[%300, %c0_175] : memref<1024x128xf32, #tpu.memory_space<vmem>>, vector<1x128xf32>
    %c31_176 = arith.constant 31 : index
    %c0_177 = arith.constant 0 : index
    %302 = vector.load %arg13[%c31_176, %c0_177] : memref<64x128xf32, #tpu.memory_space<vmem>>, vector<1x128xf32>
    tpu.vector_store %arg13[%c31_176, %c0_177], %301 {strides = array<i32>} : memref<64x128xf32, #tpu.memory_space<vmem>>, vector<1x128xf32>,
    %303 = arith.index_cast %arg0 : i32 to index
    %c60_178 = arith.constant 60 : index
    %304 = memref.load %arg1[%303, %c60_178] : memref<4x64xi32, #tpu.memory_space<smem>>
    %305 = arith.index_cast %304 : i32 to index
    %c0_179 = arith.constant 0 : index
    %306 = vector.load %arg12[%305, %c0_179] : memref<1024x128xf32, #tpu.memory_space<vmem>>, vector<1x128xf32>
    %c39_180 = arith.constant 39 : index
    %c0_181 = arith.constant 0 : index
    %307 = vector.load %arg13[%c39_180, %c0_181] : memref<64x128xf32, #tpu.memory_space<vmem>>, vector<1x128xf32>
    tpu.vector_store %arg13[%c39_180, %c0_181], %306 {strides = array<i32>} : memref<64x128xf32, #tpu.memory_space<vmem>>, vector<1x128xf32>,
    %308 = arith.index_cast %arg0 : i32 to index
    %c61_182 = arith.constant 61 : index
    %309 = memref.load %arg1[%308, %c61_182] : memref<4x64xi32, #tpu.memory_space<smem>>
    %310 = arith.index_cast %309 : i32 to index
    %c0_183 = arith.constant 0 : index
    %311 = vector.load %arg12[%310, %c0_183] : memref<1024x128xf32, #tpu.memory_space<vmem>>, vector<1x128xf32>
    %c47_184 = arith.constant 47 : index
    %c0_185 = arith.constant 0 : index
    %312 = vector.load %arg13[%c47_184, %c0_185] : memref<64x128xf32, #tpu.memory_space<vmem>>, vector<1x128xf32>
    tpu.vector_store %arg13[%c47_184, %c0_185], %311 {strides = array<i32>} : memref<64x128xf32, #tpu.memory_space<vmem>>, vector<1x128xf32>,
    %313 = arith.index_cast %arg0 : i32 to index
    %c62_186 = arith.constant 62 : index
    %314 = memref.load %arg1[%313, %c62_186] : memref<4x64xi32, #tpu.memory_space<smem>>
    %315 = arith.index_cast %314 : i32 to index
    %c0_187 = arith.constant 0 : index
    %316 = vector.load %arg12[%315, %c0_187] : memref<1024x128xf32, #tpu.memory_space<vmem>>, vector<1x128xf32>
    %c55_188 = arith.constant 55 : index
    %c0_189 = arith.constant 0 : index
    %317 = vector.load %arg13[%c55_188, %c0_189] : memref<64x128xf32, #tpu.memory_space<vmem>>, vector<1x128xf32>
    tpu.vector_store %arg13[%c55_188, %c0_189], %316 {strides = array<i32>} : memref<64x128xf32, #tpu.memory_space<vmem>>, vector<1x128xf32>,
    %318 = arith.index_cast %arg0 : i32 to index
    %c63 = arith.constant 63 : index
    %319 = memref.load %arg1[%318, %c63] : memref<4x64xi32, #tpu.memory_space<smem>>
    %320 = arith.index_cast %319 : i32 to index
    %c0_190 = arith.constant 0 : index
    %321 = vector.load %arg12[%320, %c0_190] : memref<1024x128xf32, #tpu.memory_space<vmem>>, vector<1x128xf32>
    %c63_191 = arith.constant 63 : index
    %c0_192 = arith.constant 0 : index
    %322 = vector.load %arg13[%c63_191, %c0_192] : memref<64x128xf32, #tpu.memory_space<vmem>>, vector<1x128xf32>
    tpu.vector_store %arg13[%c63_191, %c0_192], %321 {strides = array<i32>} : memref<64x128xf32, #tpu.memory_space<vmem>>, vector<1x128xf32>,
    %c0_193 = arith.constant 0 : index
    %c0_194 = arith.constant 0 : index
    %c0_195 = arith.constant 0 : index
    %323 = vector.load %arg4[%c0_193, %c0_194, %c0_195] : memref<1x8x128xf32, #tpu.memory_space<vmem>>, vector<1x8x128xf32>
    %324 = vector.shape_cast %323 : vector<1x8x128xf32> to vector<8x128xf32>
    %c0_196 = arith.constant 0 : index
    %c0_197 = arith.constant 0 : index
    %325 = vector.load %arg14[%c0_196, %c0_197] : memref<8x256xf32, #tpu.memory_space<vmem>>, vector<8x128xf32>
    tpu.vector_store %arg14[%c0_196, %c0_197], %324 {strides = array<i32>} : memref<8x256xf32, #tpu.memory_space<vmem>>, vector<8x128xf32>,
    %c0_198 = arith.constant 0 : index
    %c0_199 = arith.constant 0 : index
    %326 = vector.load %arg6[%c0_198, %c0_199] : memref<1x384xf32, #tpu.memory_space<vmem>>, vector<1x384xf32>
    %c0_200 = arith.constant 0 : index
    %c0_201 = arith.constant 0 : index
    %327 = vector.load %arg8[%c0_200, %c0_201] : memref<1x384xf32, #tpu.memory_space<vmem>>, vector<1x384xf32>
    %c0_202 = arith.constant 0 : index
    %c0_203 = arith.constant 0 : index
    %328 = vector.load %arg13[%c0_202, %c0_203] : memref<64x128xf32, #tpu.memory_space<vmem>>, vector<64x128xf32>
    %c0_204 = arith.constant 0 : index
    %c0_205 = arith.constant 0 : index
    %329 = vector.load %arg5[%c0_204, %c0_205] : memref<128x384xf32, #tpu.memory_space<vmem>>, vector<128x384xf32>
    %cst = arith.constant dense<0.000000e+00> : vector<64x384xf32>
    %330 = tpu.matmul %328, %329, %cst {dimension_numbers = #tpu.dot_dimension_numbers<[1], [0], [0], [1], [0, 0, 1, 1], [], []>} : vector<64x128xf32>, vector<128x384xf32>, vector<64x384xf32> -> vector<64x384xf32>
    %331 = vector.broadcast %326 : vector<1x384xf32> to vector<64x384xf32>
    %332 = arith.addf %330, %331 : vector<64x384xf32>
    %c0_206 = arith.constant 0 : index
    %c0_207 = arith.constant 0 : index
    %c0_208 = arith.constant 0 : index
    %333 = vector.load %arg3[%c0_206, %c0_207, %c0_208] : memref<1x8x1xf32, #tpu.memory_space<vmem>>, vector<1x8x1xf32>
    %334 = vector.shape_cast %333 : vector<1x8x1xf32> to vector<8x1xf32>
    %cst_209 = arith.constant 0.000000e+00 : f32
    %335 = vector.broadcast %cst_209 : f32 to vector<8x128xf32>
    %336 = vector.extract_strided_slice %332 {offsets = [0, 0], sizes = [8, 384], strides = [1, 1]} : vector<64x384xf32> to vector<8x384xf32>
    %c0_210 = arith.constant 0 : index
    %c0_211 = arith.constant 0 : index
    %337 = vector.load %arg7[%c0_210, %c0_211] : memref<128x384xf32, #tpu.memory_space<vmem>>, vector<128x384xf32>
    %cst_212 = arith.constant dense<0.000000e+00> : vector<8x384xf32>
    %338 = tpu.matmul %335, %337, %cst_212 {dimension_numbers = #tpu.dot_dimension_numbers<[1], [0], [0], [1], [0, 0, 1, 1], [], []>} : vector<8x128xf32>, vector<128x384xf32>, vector<8x384xf32> -> vector<8x384xf32>
    %339 = vector.broadcast %327 : vector<1x384xf32> to vector<8x384xf32>
    %340 = arith.addf %338, %339 : vector<8x384xf32>
    %341 = vector.extract_strided_slice %336 {offsets = [0, 0], sizes = [8, 128], strides = [1, 1]} : vector<8x384xf32> to vector<8x128xf32>
    %342 = vector.extract_strided_slice %340 {offsets = [0, 0], sizes = [8, 128], strides = [1, 1]} : vector<8x384xf32> to vector<8x128xf32>
    %343 = arith.addf %341, %342 : vector<8x128xf32>
    %344 = arith.negf %343 : vector<8x128xf32>
    %345 = math.exp %344 : vector<8x128xf32>
    %cst_213 = arith.constant 1.000000e+00 : f32
    %346 = vector.broadcast %cst_213 : f32 to vector<8x128xf32>
    %347 = arith.addf %346, %345 : vector<8x128xf32>
    %348 = arith.divf %346, %347 : vector<8x128xf32>
    %349 = vector.extract_strided_slice %336 {offsets = [0, 128], sizes = [8, 128], strides = [1, 1]} : vector<8x384xf32> to vector<8x128xf32>
    %350 = vector.extract_strided_slice %340 {offsets = [0, 128], sizes = [8, 128], strides = [1, 1]} : vector<8x384xf32> to vector<8x128xf32>
    %351 = arith.addf %349, %350 : vector<8x128xf32>
    %352 = arith.negf %351 : vector<8x128xf32>
    %353 = math.exp %352 : vector<8x128xf32>
    %cst_214 = arith.constant 1.000000e+00 : f32
    %354 = vector.broadcast %cst_214 : f32 to vector<8x128xf32>
    %355 = arith.addf %354, %353 : vector<8x128xf32>
    %356 = arith.divf %354, %355 : vector<8x128xf32>
    %357 = vector.extract_strided_slice %336 {offsets = [0, 256], sizes = [8, 128], strides = [1, 1]} : vector<8x384xf32> to vector<8x128xf32>
    %358 = vector.extract_strided_slice %340 {offsets = [0, 256], sizes = [8, 128], strides = [1, 1]} : vector<8x384xf32> to vector<8x128xf32>
    %359 = arith.mulf %348, %358 : vector<8x128xf32>
    %360 = arith.addf %357, %359 : vector<8x128xf32>
    %361 = math.tanh %360 : vector<8x128xf32>
    %cst_215 = arith.constant 1.000000e+00 : f32
    %362 = vector.broadcast %cst_215 : f32 to vector<8x128xf32>
    %363 = arith.subf %362, %356 : vector<8x128xf32>
    %364 = arith.mulf %363, %361 : vector<8x128xf32>
    %365 = arith.mulf %356, %335 : vector<8x128xf32>
    %366 = arith.addf %364, %365 : vector<8x128xf32>
    %cst_216 = arith.constant 0.000000e+00 : f32
    %367 = vector.broadcast %cst_216 : f32 to vector<8x1xf32>
    %368 = arith.cmpf ogt, %334, %367 : vector<8x1xf32>
    %369 = arith.extui %368 : vector<8x1xi1> to vector<8x1xi32>
    %370 = arith.sitofp %369 : vector<8x1xi32> to vector<8x1xf32>
    %371 = vector.broadcast %370 : vector<8x1xf32> to vector<8x128xf32>
    %372 = arith.mulf %371, %366 : vector<8x128xf32>
    %cst_217 = arith.constant 1.000000e+00 : f32
    %373 = vector.broadcast %cst_217 : f32 to vector<8x1xf32>
    %374 = arith.subf %373, %370 : vector<8x1xf32>
    %375 = vector.broadcast %374 : vector<8x1xf32> to vector<8x128xf32>
    %376 = arith.mulf %375, %335 : vector<8x128xf32>
    %377 = arith.addf %372, %376 : vector<8x128xf32>
    %378 = vector.extract_strided_slice %332 {offsets = [8, 0], sizes = [8, 384], strides = [1, 1]} : vector<64x384xf32> to vector<8x384xf32>
    %c0_218 = arith.constant 0 : index
    %c0_219 = arith.constant 0 : index
    %379 = vector.load %arg7[%c0_218, %c0_219] : memref<128x384xf32, #tpu.memory_space<vmem>>, vector<128x384xf32>
    %cst_220 = arith.constant dense<0.000000e+00> : vector<8x384xf32>
    %380 = tpu.matmul %377, %379, %cst_220 {dimension_numbers = #tpu.dot_dimension_numbers<[1], [0], [0], [1], [0, 0, 1, 1], [], []>} : vector<8x128xf32>, vector<128x384xf32>, vector<8x384xf32> -> vector<8x384xf32>
    %381 = vector.broadcast %327 : vector<1x384xf32> to vector<8x384xf32>
    %382 = arith.addf %380, %381 : vector<8x384xf32>
    %383 = vector.extract_strided_slice %378 {offsets = [0, 0], sizes = [8, 128], strides = [1, 1]} : vector<8x384xf32> to vector<8x128xf32>
    %384 = vector.extract_strided_slice %382 {offsets = [0, 0], sizes = [8, 128], strides = [1, 1]} : vector<8x384xf32> to vector<8x128xf32>
    %385 = arith.addf %383, %384 : vector<8x128xf32>
    %386 = arith.negf %385 : vector<8x128xf32>
    %387 = math.exp %386 : vector<8x128xf32>
    %cst_221 = arith.constant 1.000000e+00 : f32
    %388 = vector.broadcast %cst_221 : f32 to vector<8x128xf32>
    %389 = arith.addf %388, %387 : vector<8x128xf32>
    %390 = arith.divf %388, %389 : vector<8x128xf32>
    %391 = vector.extract_strided_slice %378 {offsets = [0, 128], sizes = [8, 128], strides = [1, 1]} : vector<8x384xf32> to vector<8x128xf32>
    %392 = vector.extract_strided_slice %382 {offsets = [0, 128], sizes = [8, 128], strides = [1, 1]} : vector<8x384xf32> to vector<8x128xf32>
    %393 = arith.addf %391, %392 : vector<8x128xf32>
    %394 = arith.negf %393 : vector<8x128xf32>
    %395 = math.exp %394 : vector<8x128xf32>
    %cst_222 = arith.constant 1.000000e+00 : f32
    %396 = vector.broadcast %cst_222 : f32 to vector<8x128xf32>
    %397 = arith.addf %396, %395 : vector<8x128xf32>
    %398 = arith.divf %396, %397 : vector<8x128xf32>
    %399 = vector.extract_strided_slice %378 {offsets = [0, 256], sizes = [8, 128], strides = [1, 1]} : vector<8x384xf32> to vector<8x128xf32>
    %400 = vector.extract_strided_slice %382 {offsets = [0, 256], sizes = [8, 128], strides = [1, 1]} : vector<8x384xf32> to vector<8x128xf32>
    %401 = arith.mulf %390, %400 : vector<8x128xf32>
    %402 = arith.addf %399, %401 : vector<8x128xf32>
    %403 = math.tanh %402 : vector<8x128xf32>
    %cst_223 = arith.constant 1.000000e+00 : f32
    %404 = vector.broadcast %cst_223 : f32 to vector<8x128xf32>
    %405 = arith.subf %404, %398 : vector<8x128xf32>
    %406 = arith.mulf %405, %403 : vector<8x128xf32>
    %407 = arith.mulf %398, %377 : vector<8x128xf32>
    %408 = arith.addf %406, %407 : vector<8x128xf32>
    %cst_224 = arith.constant 1.000000e+00 : f32
    %409 = vector.broadcast %cst_224 : f32 to vector<8x1xf32>
    %410 = arith.cmpf ogt, %334, %409 : vector<8x1xf32>
    %411 = arith.extui %410 : vector<8x1xi1> to vector<8x1xi32>
    %412 = arith.sitofp %411 : vector<8x1xi32> to vector<8x1xf32>
    %413 = vector.broadcast %412 : vector<8x1xf32> to vector<8x128xf32>
    %414 = arith.mulf %413, %408 : vector<8x128xf32>
    %cst_225 = arith.constant 1.000000e+00 : f32
    %415 = vector.broadcast %cst_225 : f32 to vector<8x1xf32>
    %416 = arith.subf %415, %412 : vector<8x1xf32>
    %417 = vector.broadcast %416 : vector<8x1xf32> to vector<8x128xf32>
    %418 = arith.mulf %417, %377 : vector<8x128xf32>
    %419 = arith.addf %414, %418 : vector<8x128xf32>
    %420 = vector.extract_strided_slice %332 {offsets = [16, 0], sizes = [8, 384], strides = [1, 1]} : vector<64x384xf32> to vector<8x384xf32>
    %c0_226 = arith.constant 0 : index
    %c0_227 = arith.constant 0 : index
    %421 = vector.load %arg7[%c0_226, %c0_227] : memref<128x384xf32, #tpu.memory_space<vmem>>, vector<128x384xf32>
    %cst_228 = arith.constant dense<0.000000e+00> : vector<8x384xf32>
    %422 = tpu.matmul %419, %421, %cst_228 {dimension_numbers = #tpu.dot_dimension_numbers<[1], [0], [0], [1], [0, 0, 1, 1], [], []>} : vector<8x128xf32>, vector<128x384xf32>, vector<8x384xf32> -> vector<8x384xf32>
    %423 = vector.broadcast %327 : vector<1x384xf32> to vector<8x384xf32>
    %424 = arith.addf %422, %423 : vector<8x384xf32>
    %425 = vector.extract_strided_slice %420 {offsets = [0, 0], sizes = [8, 128], strides = [1, 1]} : vector<8x384xf32> to vector<8x128xf32>
    %426 = vector.extract_strided_slice %424 {offsets = [0, 0], sizes = [8, 128], strides = [1, 1]} : vector<8x384xf32> to vector<8x128xf32>
    %427 = arith.addf %425, %426 : vector<8x128xf32>
    %428 = arith.negf %427 : vector<8x128xf32>
    %429 = math.exp %428 : vector<8x128xf32>
    %cst_229 = arith.constant 1.000000e+00 : f32
    %430 = vector.broadcast %cst_229 : f32 to vector<8x128xf32>
    %431 = arith.addf %430, %429 : vector<8x128xf32>
    %432 = arith.divf %430, %431 : vector<8x128xf32>
    %433 = vector.extract_strided_slice %420 {offsets = [0, 128], sizes = [8, 128], strides = [1, 1]} : vector<8x384xf32> to vector<8x128xf32>
    %434 = vector.extract_strided_slice %424 {offsets = [0, 128], sizes = [8, 128], strides = [1, 1]} : vector<8x384xf32> to vector<8x128xf32>
    %435 = arith.addf %433, %434 : vector<8x128xf32>
    %436 = arith.negf %435 : vector<8x128xf32>
    %437 = math.exp %436 : vector<8x128xf32>
    %cst_230 = arith.constant 1.000000e+00 : f32
    %438 = vector.broadcast %cst_230 : f32 to vector<8x128xf32>
    %439 = arith.addf %438, %437 : vector<8x128xf32>
    %440 = arith.divf %438, %439 : vector<8x128xf32>
    %441 = vector.extract_strided_slice %420 {offsets = [0, 256], sizes = [8, 128], strides = [1, 1]} : vector<8x384xf32> to vector<8x128xf32>
    %442 = vector.extract_strided_slice %424 {offsets = [0, 256], sizes = [8, 128], strides = [1, 1]} : vector<8x384xf32> to vector<8x128xf32>
    %443 = arith.mulf %432, %442 : vector<8x128xf32>
    %444 = arith.addf %441, %443 : vector<8x128xf32>
    %445 = math.tanh %444 : vector<8x128xf32>
    %cst_231 = arith.constant 1.000000e+00 : f32
    %446 = vector.broadcast %cst_231 : f32 to vector<8x128xf32>
    %447 = arith.subf %446, %440 : vector<8x128xf32>
    %448 = arith.mulf %447, %445 : vector<8x128xf32>
    %449 = arith.mulf %440, %419 : vector<8x128xf32>
    %450 = arith.addf %448, %449 : vector<8x128xf32>
    %cst_232 = arith.constant 2.000000e+00 : f32
    %451 = vector.broadcast %cst_232 : f32 to vector<8x1xf32>
    %452 = arith.cmpf ogt, %334, %451 : vector<8x1xf32>
    %453 = arith.extui %452 : vector<8x1xi1> to vector<8x1xi32>
    %454 = arith.sitofp %453 : vector<8x1xi32> to vector<8x1xf32>
    %455 = vector.broadcast %454 : vector<8x1xf32> to vector<8x128xf32>
    %456 = arith.mulf %455, %450 : vector<8x128xf32>
    %cst_233 = arith.constant 1.000000e+00 : f32
    %457 = vector.broadcast %cst_233 : f32 to vector<8x1xf32>
    %458 = arith.subf %457, %454 : vector<8x1xf32>
    %459 = vector.broadcast %458 : vector<8x1xf32> to vector<8x128xf32>
    %460 = arith.mulf %459, %419 : vector<8x128xf32>
    %461 = arith.addf %456, %460 : vector<8x128xf32>
    %462 = vector.extract_strided_slice %332 {offsets = [24, 0], sizes = [8, 384], strides = [1, 1]} : vector<64x384xf32> to vector<8x384xf32>
    %c0_234 = arith.constant 0 : index
    %c0_235 = arith.constant 0 : index
    %463 = vector.load %arg7[%c0_234, %c0_235] : memref<128x384xf32, #tpu.memory_space<vmem>>, vector<128x384xf32>
    %cst_236 = arith.constant dense<0.000000e+00> : vector<8x384xf32>
    %464 = tpu.matmul %461, %463, %cst_236 {dimension_numbers = #tpu.dot_dimension_numbers<[1], [0], [0], [1], [0, 0, 1, 1], [], []>} : vector<8x128xf32>, vector<128x384xf32>, vector<8x384xf32> -> vector<8x384xf32>
    %465 = vector.broadcast %327 : vector<1x384xf32> to vector<8x384xf32>
    %466 = arith.addf %464, %465 : vector<8x384xf32>
    %467 = vector.extract_strided_slice %462 {offsets = [0, 0], sizes = [8, 128], strides = [1, 1]} : vector<8x384xf32> to vector<8x128xf32>
    %468 = vector.extract_strided_slice %466 {offsets = [0, 0], sizes = [8, 128], strides = [1, 1]} : vector<8x384xf32> to vector<8x128xf32>
    %469 = arith.addf %467, %468 : vector<8x128xf32>
    %470 = arith.negf %469 : vector<8x128xf32>
    %471 = math.exp %470 : vector<8x128xf32>
    %cst_237 = arith.constant 1.000000e+00 : f32
    %472 = vector.broadcast %cst_237 : f32 to vector<8x128xf32>
    %473 = arith.addf %472, %471 : vector<8x128xf32>
    %474 = arith.divf %472, %473 : vector<8x128xf32>
    %475 = vector.extract_strided_slice %462 {offsets = [0, 128], sizes = [8, 128], strides = [1, 1]} : vector<8x384xf32> to vector<8x128xf32>
    %476 = vector.extract_strided_slice %466 {offsets = [0, 128], sizes = [8, 128], strides = [1, 1]} : vector<8x384xf32> to vector<8x128xf32>
    %477 = arith.addf %475, %476 : vector<8x128xf32>
    %478 = arith.negf %477 : vector<8x128xf32>
    %479 = math.exp %478 : vector<8x128xf32>
    %cst_238 = arith.constant 1.000000e+00 : f32
    %480 = vector.broadcast %cst_238 : f32 to vector<8x128xf32>
    %481 = arith.addf %480, %479 : vector<8x128xf32>
    %482 = arith.divf %480, %481 : vector<8x128xf32>
    %483 = vector.extract_strided_slice %462 {offsets = [0, 256], sizes = [8, 128], strides = [1, 1]} : vector<8x384xf32> to vector<8x128xf32>
    %484 = vector.extract_strided_slice %466 {offsets = [0, 256], sizes = [8, 128], strides = [1, 1]} : vector<8x384xf32> to vector<8x128xf32>
    %485 = arith.mulf %474, %484 : vector<8x128xf32>
    %486 = arith.addf %483, %485 : vector<8x128xf32>
    %487 = math.tanh %486 : vector<8x128xf32>
    %cst_239 = arith.constant 1.000000e+00 : f32
    %488 = vector.broadcast %cst_239 : f32 to vector<8x128xf32>
    %489 = arith.subf %488, %482 : vector<8x128xf32>
    %490 = arith.mulf %489, %487 : vector<8x128xf32>
    %491 = arith.mulf %482, %461 : vector<8x128xf32>
    %492 = arith.addf %490, %491 : vector<8x128xf32>
    %cst_240 = arith.constant 3.000000e+00 : f32
    %493 = vector.broadcast %cst_240 : f32 to vector<8x1xf32>
    %494 = arith.cmpf ogt, %334, %493 : vector<8x1xf32>
    %495 = arith.extui %494 : vector<8x1xi1> to vector<8x1xi32>
    %496 = arith.sitofp %495 : vector<8x1xi32> to vector<8x1xf32>
    %497 = vector.broadcast %496 : vector<8x1xf32> to vector<8x128xf32>
    %498 = arith.mulf %497, %492 : vector<8x128xf32>
    %cst_241 = arith.constant 1.000000e+00 : f32
    %499 = vector.broadcast %cst_241 : f32 to vector<8x1xf32>
    %500 = arith.subf %499, %496 : vector<8x1xf32>
    %501 = vector.broadcast %500 : vector<8x1xf32> to vector<8x128xf32>
    %502 = arith.mulf %501, %461 : vector<8x128xf32>
    %503 = arith.addf %498, %502 : vector<8x128xf32>
    %504 = vector.extract_strided_slice %332 {offsets = [32, 0], sizes = [8, 384], strides = [1, 1]} : vector<64x384xf32> to vector<8x384xf32>
    %c0_242 = arith.constant 0 : index
    %c0_243 = arith.constant 0 : index
    %505 = vector.load %arg7[%c0_242, %c0_243] : memref<128x384xf32, #tpu.memory_space<vmem>>, vector<128x384xf32>
    %cst_244 = arith.constant dense<0.000000e+00> : vector<8x384xf32>
    %506 = tpu.matmul %503, %505, %cst_244 {dimension_numbers = #tpu.dot_dimension_numbers<[1], [0], [0], [1], [0, 0, 1, 1], [], []>} : vector<8x128xf32>, vector<128x384xf32>, vector<8x384xf32> -> vector<8x384xf32>
    %507 = vector.broadcast %327 : vector<1x384xf32> to vector<8x384xf32>
    %508 = arith.addf %506, %507 : vector<8x384xf32>
    %509 = vector.extract_strided_slice %504 {offsets = [0, 0], sizes = [8, 128], strides = [1, 1]} : vector<8x384xf32> to vector<8x128xf32>
    %510 = vector.extract_strided_slice %508 {offsets = [0, 0], sizes = [8, 128], strides = [1, 1]} : vector<8x384xf32> to vector<8x128xf32>
    %511 = arith.addf %509, %510 : vector<8x128xf32>
    %512 = arith.negf %511 : vector<8x128xf32>
    %513 = math.exp %512 : vector<8x128xf32>
    %cst_245 = arith.constant 1.000000e+00 : f32
    %514 = vector.broadcast %cst_245 : f32 to vector<8x128xf32>
    %515 = arith.addf %514, %513 : vector<8x128xf32>
    %516 = arith.divf %514, %515 : vector<8x128xf32>
    %517 = vector.extract_strided_slice %504 {offsets = [0, 128], sizes = [8, 128], strides = [1, 1]} : vector<8x384xf32> to vector<8x128xf32>
    %518 = vector.extract_strided_slice %508 {offsets = [0, 128], sizes = [8, 128], strides = [1, 1]} : vector<8x384xf32> to vector<8x128xf32>
    %519 = arith.addf %517, %518 : vector<8x128xf32>
    %520 = arith.negf %519 : vector<8x128xf32>
    %521 = math.exp %520 : vector<8x128xf32>
    %cst_246 = arith.constant 1.000000e+00 : f32
    %522 = vector.broadcast %cst_246 : f32 to vector<8x128xf32>
    %523 = arith.addf %522, %521 : vector<8x128xf32>
    %524 = arith.divf %522, %523 : vector<8x128xf32>
    %525 = vector.extract_strided_slice %504 {offsets = [0, 256], sizes = [8, 128], strides = [1, 1]} : vector<8x384xf32> to vector<8x128xf32>
    %526 = vector.extract_strided_slice %508 {offsets = [0, 256], sizes = [8, 128], strides = [1, 1]} : vector<8x384xf32> to vector<8x128xf32>
    %527 = arith.mulf %516, %526 : vector<8x128xf32>
    %528 = arith.addf %525, %527 : vector<8x128xf32>
    %529 = math.tanh %528 : vector<8x128xf32>
    %cst_247 = arith.constant 1.000000e+00 : f32
    %530 = vector.broadcast %cst_247 : f32 to vector<8x128xf32>
    %531 = arith.subf %530, %524 : vector<8x128xf32>
    %532 = arith.mulf %531, %529 : vector<8x128xf32>
    %533 = arith.mulf %524, %503 : vector<8x128xf32>
    %534 = arith.addf %532, %533 : vector<8x128xf32>
    %cst_248 = arith.constant 4.000000e+00 : f32
    %535 = vector.broadcast %cst_248 : f32 to vector<8x1xf32>
    %536 = arith.cmpf ogt, %334, %535 : vector<8x1xf32>
    %537 = arith.extui %536 : vector<8x1xi1> to vector<8x1xi32>
    %538 = arith.sitofp %537 : vector<8x1xi32> to vector<8x1xf32>
    %539 = vector.broadcast %538 : vector<8x1xf32> to vector<8x128xf32>
    %540 = arith.mulf %539, %534 : vector<8x128xf32>
    %cst_249 = arith.constant 1.000000e+00 : f32
    %541 = vector.broadcast %cst_249 : f32 to vector<8x1xf32>
    %542 = arith.subf %541, %538 : vector<8x1xf32>
    %543 = vector.broadcast %542 : vector<8x1xf32> to vector<8x128xf32>
    %544 = arith.mulf %543, %503 : vector<8x128xf32>
    %545 = arith.addf %540, %544 : vector<8x128xf32>
    %546 = vector.extract_strided_slice %332 {offsets = [40, 0], sizes = [8, 384], strides = [1, 1]} : vector<64x384xf32> to vector<8x384xf32>
    %c0_250 = arith.constant 0 : index
    %c0_251 = arith.constant 0 : index
    %547 = vector.load %arg7[%c0_250, %c0_251] : memref<128x384xf32, #tpu.memory_space<vmem>>, vector<128x384xf32>
    %cst_252 = arith.constant dense<0.000000e+00> : vector<8x384xf32>
    %548 = tpu.matmul %545, %547, %cst_252 {dimension_numbers = #tpu.dot_dimension_numbers<[1], [0], [0], [1], [0, 0, 1, 1], [], []>} : vector<8x128xf32>, vector<128x384xf32>, vector<8x384xf32> -> vector<8x384xf32>
    %549 = vector.broadcast %327 : vector<1x384xf32> to vector<8x384xf32>
    %550 = arith.addf %548, %549 : vector<8x384xf32>
    %551 = vector.extract_strided_slice %546 {offsets = [0, 0], sizes = [8, 128], strides = [1, 1]} : vector<8x384xf32> to vector<8x128xf32>
    %552 = vector.extract_strided_slice %550 {offsets = [0, 0], sizes = [8, 128], strides = [1, 1]} : vector<8x384xf32> to vector<8x128xf32>
    %553 = arith.addf %551, %552 : vector<8x128xf32>
    %554 = arith.negf %553 : vector<8x128xf32>
    %555 = math.exp %554 : vector<8x128xf32>
    %cst_253 = arith.constant 1.000000e+00 : f32
    %556 = vector.broadcast %cst_253 : f32 to vector<8x128xf32>
    %557 = arith.addf %556, %555 : vector<8x128xf32>
    %558 = arith.divf %556, %557 : vector<8x128xf32>
    %559 = vector.extract_strided_slice %546 {offsets = [0, 128], sizes = [8, 128], strides = [1, 1]} : vector<8x384xf32> to vector<8x128xf32>
    %560 = vector.extract_strided_slice %550 {offsets = [0, 128], sizes = [8, 128], strides = [1, 1]} : vector<8x384xf32> to vector<8x128xf32>
    %561 = arith.addf %559, %560 : vector<8x128xf32>
    %562 = arith.negf %561 : vector<8x128xf32>
    %563 = math.exp %562 : vector<8x128xf32>
    %cst_254 = arith.constant 1.000000e+00 : f32
    %564 = vector.broadcast %cst_254 : f32 to vector<8x128xf32>
    %565 = arith.addf %564, %563 : vector<8x128xf32>
    %566 = arith.divf %564, %565 : vector<8x128xf32>
    %567 = vector.extract_strided_slice %546 {offsets = [0, 256], sizes = [8, 128], strides = [1, 1]} : vector<8x384xf32> to vector<8x128xf32>
    %568 = vector.extract_strided_slice %550 {offsets = [0, 256], sizes = [8, 128], strides = [1, 1]} : vector<8x384xf32> to vector<8x128xf32>
    %569 = arith.mulf %558, %568 : vector<8x128xf32>
    %570 = arith.addf %567, %569 : vector<8x128xf32>
    %571 = math.tanh %570 : vector<8x128xf32>
    %cst_255 = arith.constant 1.000000e+00 : f32
    %572 = vector.broadcast %cst_255 : f32 to vector<8x128xf32>
    %573 = arith.subf %572, %566 : vector<8x128xf32>
    %574 = arith.mulf %573, %571 : vector<8x128xf32>
    %575 = arith.mulf %566, %545 : vector<8x128xf32>
    %576 = arith.addf %574, %575 : vector<8x128xf32>
    %cst_256 = arith.constant 5.000000e+00 : f32
    %577 = vector.broadcast %cst_256 : f32 to vector<8x1xf32>
    %578 = arith.cmpf ogt, %334, %577 : vector<8x1xf32>
    %579 = arith.extui %578 : vector<8x1xi1> to vector<8x1xi32>
    %580 = arith.sitofp %579 : vector<8x1xi32> to vector<8x1xf32>
    %581 = vector.broadcast %580 : vector<8x1xf32> to vector<8x128xf32>
    %582 = arith.mulf %581, %576 : vector<8x128xf32>
    %cst_257 = arith.constant 1.000000e+00 : f32
    %583 = vector.broadcast %cst_257 : f32 to vector<8x1xf32>
    %584 = arith.subf %583, %580 : vector<8x1xf32>
    %585 = vector.broadcast %584 : vector<8x1xf32> to vector<8x128xf32>
    %586 = arith.mulf %585, %545 : vector<8x128xf32>
    %587 = arith.addf %582, %586 : vector<8x128xf32>
    %588 = vector.extract_strided_slice %332 {offsets = [48, 0], sizes = [8, 384], strides = [1, 1]} : vector<64x384xf32> to vector<8x384xf32>
    %c0_258 = arith.constant 0 : index
    %c0_259 = arith.constant 0 : index
    %589 = vector.load %arg7[%c0_258, %c0_259] : memref<128x384xf32, #tpu.memory_space<vmem>>, vector<128x384xf32>
    %cst_260 = arith.constant dense<0.000000e+00> : vector<8x384xf32>
    %590 = tpu.matmul %587, %589, %cst_260 {dimension_numbers = #tpu.dot_dimension_numbers<[1], [0], [0], [1], [0, 0, 1, 1], [], []>} : vector<8x128xf32>, vector<128x384xf32>, vector<8x384xf32> -> vector<8x384xf32>
    %591 = vector.broadcast %327 : vector<1x384xf32> to vector<8x384xf32>
    %592 = arith.addf %590, %591 : vector<8x384xf32>
    %593 = vector.extract_strided_slice %588 {offsets = [0, 0], sizes = [8, 128], strides = [1, 1]} : vector<8x384xf32> to vector<8x128xf32>
    %594 = vector.extract_strided_slice %592 {offsets = [0, 0], sizes = [8, 128], strides = [1, 1]} : vector<8x384xf32> to vector<8x128xf32>
    %595 = arith.addf %593, %594 : vector<8x128xf32>
    %596 = arith.negf %595 : vector<8x128xf32>
    %597 = math.exp %596 : vector<8x128xf32>
    %cst_261 = arith.constant 1.000000e+00 : f32
    %598 = vector.broadcast %cst_261 : f32 to vector<8x128xf32>
    %599 = arith.addf %598, %597 : vector<8x128xf32>
    %600 = arith.divf %598, %599 : vector<8x128xf32>
    %601 = vector.extract_strided_slice %588 {offsets = [0, 128], sizes = [8, 128], strides = [1, 1]} : vector<8x384xf32> to vector<8x128xf32>
    %602 = vector.extract_strided_slice %592 {offsets = [0, 128], sizes = [8, 128], strides = [1, 1]} : vector<8x384xf32> to vector<8x128xf32>
    %603 = arith.addf %601, %602 : vector<8x128xf32>
    %604 = arith.negf %603 : vector<8x128xf32>
    %605 = math.exp %604 : vector<8x128xf32>
    %cst_262 = arith.constant 1.000000e+00 : f32
    %606 = vector.broadcast %cst_262 : f32 to vector<8x128xf32>
    %607 = arith.addf %606, %605 : vector<8x128xf32>
    %608 = arith.divf %606, %607 : vector<8x128xf32>
    %609 = vector.extract_strided_slice %588 {offsets = [0, 256], sizes = [8, 128], strides = [1, 1]} : vector<8x384xf32> to vector<8x128xf32>
    %610 = vector.extract_strided_slice %592 {offsets = [0, 256], sizes = [8, 128], strides = [1, 1]} : vector<8x384xf32> to vector<8x128xf32>
    %611 = arith.mulf %600, %610 : vector<8x128xf32>
    %612 = arith.addf %609, %611 : vector<8x128xf32>
    %613 = math.tanh %612 : vector<8x128xf32>
    %cst_263 = arith.constant 1.000000e+00 : f32
    %614 = vector.broadcast %cst_263 : f32 to vector<8x128xf32>
    %615 = arith.subf %614, %608 : vector<8x128xf32>
    %616 = arith.mulf %615, %613 : vector<8x128xf32>
    %617 = arith.mulf %608, %587 : vector<8x128xf32>
    %618 = arith.addf %616, %617 : vector<8x128xf32>
    %cst_264 = arith.constant 6.000000e+00 : f32
    %619 = vector.broadcast %cst_264 : f32 to vector<8x1xf32>
    %620 = arith.cmpf ogt, %334, %619 : vector<8x1xf32>
    %621 = arith.extui %620 : vector<8x1xi1> to vector<8x1xi32>
    %622 = arith.sitofp %621 : vector<8x1xi32> to vector<8x1xf32>
    %623 = vector.broadcast %622 : vector<8x1xf32> to vector<8x128xf32>
    %624 = arith.mulf %623, %618 : vector<8x128xf32>
    %cst_265 = arith.constant 1.000000e+00 : f32
    %625 = vector.broadcast %cst_265 : f32 to vector<8x1xf32>
    %626 = arith.subf %625, %622 : vector<8x1xf32>
    %627 = vector.broadcast %626 : vector<8x1xf32> to vector<8x128xf32>
    %628 = arith.mulf %627, %587 : vector<8x128xf32>
    %629 = arith.addf %624, %628 : vector<8x128xf32>
    %630 = vector.extract_strided_slice %332 {offsets = [56, 0], sizes = [8, 384], strides = [1, 1]} : vector<64x384xf32> to vector<8x384xf32>
    %c0_266 = arith.constant 0 : index
    %c0_267 = arith.constant 0 : index
    %631 = vector.load %arg7[%c0_266, %c0_267] : memref<128x384xf32, #tpu.memory_space<vmem>>, vector<128x384xf32>
    %cst_268 = arith.constant dense<0.000000e+00> : vector<8x384xf32>
    %632 = tpu.matmul %629, %631, %cst_268 {dimension_numbers = #tpu.dot_dimension_numbers<[1], [0], [0], [1], [0, 0, 1, 1], [], []>} : vector<8x128xf32>, vector<128x384xf32>, vector<8x384xf32> -> vector<8x384xf32>
    %633 = vector.broadcast %327 : vector<1x384xf32> to vector<8x384xf32>
    %634 = arith.addf %632, %633 : vector<8x384xf32>
    %635 = vector.extract_strided_slice %630 {offsets = [0, 0], sizes = [8, 128], strides = [1, 1]} : vector<8x384xf32> to vector<8x128xf32>
    %636 = vector.extract_strided_slice %634 {offsets = [0, 0], sizes = [8, 128], strides = [1, 1]} : vector<8x384xf32> to vector<8x128xf32>
    %637 = arith.addf %635, %636 : vector<8x128xf32>
    %638 = arith.negf %637 : vector<8x128xf32>
    %639 = math.exp %638 : vector<8x128xf32>
    %cst_269 = arith.constant 1.000000e+00 : f32
    %640 = vector.broadcast %cst_269 : f32 to vector<8x128xf32>
    %641 = arith.addf %640, %639 : vector<8x128xf32>
    %642 = arith.divf %640, %641 : vector<8x128xf32>
    %643 = vector.extract_strided_slice %630 {offsets = [0, 128], sizes = [8, 128], strides = [1, 1]} : vector<8x384xf32> to vector<8x128xf32>
    %644 = vector.extract_strided_slice %634 {offsets = [0, 128], sizes = [8, 128], strides = [1, 1]} : vector<8x384xf32> to vector<8x128xf32>
    %645 = arith.addf %643, %644 : vector<8x128xf32>
    %646 = arith.negf %645 : vector<8x128xf32>
    %647 = math.exp %646 : vector<8x128xf32>
    %cst_270 = arith.constant 1.000000e+00 : f32
    %648 = vector.broadcast %cst_270 : f32 to vector<8x128xf32>
    %649 = arith.addf %648, %647 : vector<8x128xf32>
    %650 = arith.divf %648, %649 : vector<8x128xf32>
    %651 = vector.extract_strided_slice %630 {offsets = [0, 256], sizes = [8, 128], strides = [1, 1]} : vector<8x384xf32> to vector<8x128xf32>
    %652 = vector.extract_strided_slice %634 {offsets = [0, 256], sizes = [8, 128], strides = [1, 1]} : vector<8x384xf32> to vector<8x128xf32>
    %653 = arith.mulf %642, %652 : vector<8x128xf32>
    %654 = arith.addf %651, %653 : vector<8x128xf32>
    %655 = math.tanh %654 : vector<8x128xf32>
    %cst_271 = arith.constant 1.000000e+00 : f32
    %656 = vector.broadcast %cst_271 : f32 to vector<8x128xf32>
    %657 = arith.subf %656, %650 : vector<8x128xf32>
    %658 = arith.mulf %657, %655 : vector<8x128xf32>
    %659 = arith.mulf %650, %629 : vector<8x128xf32>
    %660 = arith.addf %658, %659 : vector<8x128xf32>
    %cst_272 = arith.constant 7.000000e+00 : f32
    %661 = vector.broadcast %cst_272 : f32 to vector<8x1xf32>
    %662 = arith.cmpf ogt, %334, %661 : vector<8x1xf32>
    %663 = arith.extui %662 : vector<8x1xi1> to vector<8x1xi32>
    %664 = arith.sitofp %663 : vector<8x1xi32> to vector<8x1xf32>
    %665 = vector.broadcast %664 : vector<8x1xf32> to vector<8x128xf32>
    %666 = arith.mulf %665, %660 : vector<8x128xf32>
    %cst_273 = arith.constant 1.000000e+00 : f32
    %667 = vector.broadcast %cst_273 : f32 to vector<8x1xf32>
    %668 = arith.subf %667, %664 : vector<8x1xf32>
    %669 = vector.broadcast %668 : vector<8x1xf32> to vector<8x128xf32>
    %670 = arith.mulf %669, %629 : vector<8x128xf32>
    %671 = arith.addf %666, %670 : vector<8x128xf32>
    %c0_274 = arith.constant 0 : index
    %c128 = arith.constant 128 : index
    %672 = vector.load %arg14[%c0_274, %c128] : memref<8x256xf32, #tpu.memory_space<vmem>>, vector<8x128xf32>
    tpu.vector_store %arg14[%c0_274, %c128], %671 {strides = array<i32>} : memref<8x256xf32, #tpu.memory_space<vmem>>, vector<8x128xf32>,
    %c0_275 = arith.constant 0 : index
    %c0_276 = arith.constant 0 : index
    %673 = vector.load %arg14[%c0_275, %c0_276] : memref<8x256xf32, #tpu.memory_space<vmem>>, vector<8x256xf32>
    %c0_277 = arith.constant 0 : index
    %c0_278 = arith.constant 0 : index
    %674 = vector.load %arg9[%c0_277, %c0_278] : memref<256x128xf32, #tpu.memory_space<vmem>>, vector<256x128xf32>
    %cst_279 = arith.constant dense<0.000000e+00> : vector<8x128xf32>
    %675 = tpu.matmul %673, %674, %cst_279 {dimension_numbers = #tpu.dot_dimension_numbers<[1], [0], [0], [1], [0, 0, 1, 1], [], []>} : vector<8x256xf32>, vector<256x128xf32>, vector<8x128xf32> -> vector<8x128xf32>
    %c0_280 = arith.constant 0 : index
    %c0_281 = arith.constant 0 : index
    %676 = vector.load %arg10[%c0_280, %c0_281] : memref<1x128xf32, #tpu.memory_space<vmem>>, vector<1x128xf32>
    %677 = vector.broadcast %676 : vector<1x128xf32> to vector<8x128xf32>
    %678 = arith.addf %675, %677 : vector<8x128xf32>
    %679 = math.tanh %678 : vector<8x128xf32>
    %680 = arith.index_cast %arg0 : i32 to index
    %c0_282 = arith.constant 0 : index
    %681 = memref.load %arg2[%680, %c0_282] : memref<4x8xi32, #tpu.memory_space<smem>>
    %682 = vector.extract_strided_slice %679 {offsets = [0, 0], sizes = [1, 128], strides = [1, 1]} : vector<8x128xf32> to vector<1x128xf32>
    %683 = arith.index_cast %681 : i32 to index
    %c0_283 = arith.constant 0 : index
    %684 = vector.load %arg12[%683, %c0_283] : memref<1024x128xf32, #tpu.memory_space<vmem>>, vector<1x128xf32>
    tpu.vector_store %arg12[%683, %c0_283], %682 {strides = array<i32>} : memref<1024x128xf32, #tpu.memory_space<vmem>>, vector<1x128xf32>,
    %685 = arith.index_cast %arg0 : i32 to index
    %c1_284 = arith.constant 1 : index
    %686 = memref.load %arg2[%685, %c1_284] : memref<4x8xi32, #tpu.memory_space<smem>>
    %687 = vector.extract_strided_slice %679 {offsets = [1, 0], sizes = [1, 128], strides = [1, 1]} : vector<8x128xf32> to vector<1x128xf32>
    %688 = arith.index_cast %686 : i32 to index
    %c0_285 = arith.constant 0 : index
    %689 = vector.load %arg12[%688, %c0_285] : memref<1024x128xf32, #tpu.memory_space<vmem>>, vector<1x128xf32>
    tpu.vector_store %arg12[%688, %c0_285], %687 {strides = array<i32>} : memref<1024x128xf32, #tpu.memory_space<vmem>>, vector<1x128xf32>,
    %690 = arith.index_cast %arg0 : i32 to index
    %c2_286 = arith.constant 2 : index
    %691 = memref.load %arg2[%690, %c2_286] : memref<4x8xi32, #tpu.memory_space<smem>>
    %692 = vector.extract_strided_slice %679 {offsets = [2, 0], sizes = [1, 128], strides = [1, 1]} : vector<8x128xf32> to vector<1x128xf32>
    %693 = arith.index_cast %691 : i32 to index
    %c0_287 = arith.constant 0 : index
    %694 = vector.load %arg12[%693, %c0_287] : memref<1024x128xf32, #tpu.memory_space<vmem>>, vector<1x128xf32>
    tpu.vector_store %arg12[%693, %c0_287], %692 {strides = array<i32>} : memref<1024x128xf32, #tpu.memory_space<vmem>>, vector<1x128xf32>,
    %695 = arith.index_cast %arg0 : i32 to index
    %c3_288 = arith.constant 3 : index
    %696 = memref.load %arg2[%695, %c3_288] : memref<4x8xi32, #tpu.memory_space<smem>>
    %697 = vector.extract_strided_slice %679 {offsets = [3, 0], sizes = [1, 128], strides = [1, 1]} : vector<8x128xf32> to vector<1x128xf32>
    %698 = arith.index_cast %696 : i32 to index
    %c0_289 = arith.constant 0 : index
    %699 = vector.load %arg12[%698, %c0_289] : memref<1024x128xf32, #tpu.memory_space<vmem>>, vector<1x128xf32>
    tpu.vector_store %arg12[%698, %c0_289], %697 {strides = array<i32>} : memref<1024x128xf32, #tpu.memory_space<vmem>>, vector<1x128xf32>,
    %700 = arith.index_cast %arg0 : i32 to index
    %c4_290 = arith.constant 4 : index
    %701 = memref.load %arg2[%700, %c4_290] : memref<4x8xi32, #tpu.memory_space<smem>>
    %702 = vector.extract_strided_slice %679 {offsets = [4, 0], sizes = [1, 128], strides = [1, 1]} : vector<8x128xf32> to vector<1x128xf32>
    %703 = arith.index_cast %701 : i32 to index
    %c0_291 = arith.constant 0 : index
    %704 = vector.load %arg12[%703, %c0_291] : memref<1024x128xf32, #tpu.memory_space<vmem>>, vector<1x128xf32>
    tpu.vector_store %arg12[%703, %c0_291], %702 {strides = array<i32>} : memref<1024x128xf32, #tpu.memory_space<vmem>>, vector<1x128xf32>,
    %705 = arith.index_cast %arg0 : i32 to index
    %c5_292 = arith.constant 5 : index
    %706 = memref.load %arg2[%705, %c5_292] : memref<4x8xi32, #tpu.memory_space<smem>>
    %707 = vector.extract_strided_slice %679 {offsets = [5, 0], sizes = [1, 128], strides = [1, 1]} : vector<8x128xf32> to vector<1x128xf32>
    %708 = arith.index_cast %706 : i32 to index
    %c0_293 = arith.constant 0 : index
    %709 = vector.load %arg12[%708, %c0_293] : memref<1024x128xf32, #tpu.memory_space<vmem>>, vector<1x128xf32>
    tpu.vector_store %arg12[%708, %c0_293], %707 {strides = array<i32>} : memref<1024x128xf32, #tpu.memory_space<vmem>>, vector<1x128xf32>,
    %710 = arith.index_cast %arg0 : i32 to index
    %c6_294 = arith.constant 6 : index
    %711 = memref.load %arg2[%710, %c6_294] : memref<4x8xi32, #tpu.memory_space<smem>>
    %712 = vector.extract_strided_slice %679 {offsets = [6, 0], sizes = [1, 128], strides = [1, 1]} : vector<8x128xf32> to vector<1x128xf32>
    %713 = arith.index_cast %711 : i32 to index
    %c0_295 = arith.constant 0 : index
    %714 = vector.load %arg12[%713, %c0_295] : memref<1024x128xf32, #tpu.memory_space<vmem>>, vector<1x128xf32>
    tpu.vector_store %arg12[%713, %c0_295], %712 {strides = array<i32>} : memref<1024x128xf32, #tpu.memory_space<vmem>>, vector<1x128xf32>,
    %715 = arith.index_cast %arg0 : i32 to index
    %c7_296 = arith.constant 7 : index
    %716 = memref.load %arg2[%715, %c7_296] : memref<4x8xi32, #tpu.memory_space<smem>>
    %717 = vector.extract_strided_slice %679 {offsets = [7, 0], sizes = [1, 128], strides = [1, 1]} : vector<8x128xf32> to vector<1x128xf32>
    %718 = arith.index_cast %716 : i32 to index
    %c0_297 = arith.constant 0 : index
    %719 = vector.load %arg12[%718, %c0_297] : memref<1024x128xf32, #tpu.memory_space<vmem>>, vector<1x128xf32>
    tpu.vector_store %arg12[%718, %c0_297], %717 {strides = array<i32>} : memref<1024x128xf32, #tpu.memory_space<vmem>>, vector<1x128xf32>,
    return
  }
  func.func @transform_0(%arg0: i32, %arg1: memref<4x64xi32, #tpu.memory_space<smem>>, %arg2: memref<4x8xi32, #tpu.memory_space<smem>>) -> (i32, i32, i32) {
    %c0_i32 = arith.constant 0 : i32
    %c0_i32_0 = arith.constant 0 : i32
    %c0_i32_1 = arith.constant 0 : i32
    return %arg0, %c0_i32, %c0_i32_0 : i32, i32, i32
  }
  func.func @transform_1(%arg0: i32, %arg1: memref<4x64xi32, #tpu.memory_space<smem>>, %arg2: memref<4x8xi32, #tpu.memory_space<smem>>) -> (i32, i32, i32) {
    %c0_i32 = arith.constant 0 : i32
    %c0_i32_0 = arith.constant 0 : i32
    %c0_i32_1 = arith.constant 0 : i32
    return %arg0, %c0_i32, %c0_i32_0 : i32, i32, i32
  }
  func.func @transform_2(%arg0: i32, %arg1: memref<4x64xi32, #tpu.memory_space<smem>>, %arg2: memref<4x8xi32, #tpu.memory_space<smem>>) -> (i32, i32) {
    %c0_i32 = arith.constant 0 : i32
    %c0_i32_0 = arith.constant 0 : i32
    %c0_i32_1 = arith.constant 0 : i32
    return %c0_i32, %c0_i32_0 : i32, i32
  }
  func.func @transform_3(%arg0: i32, %arg1: memref<4x64xi32, #tpu.memory_space<smem>>, %arg2: memref<4x8xi32, #tpu.memory_space<smem>>) -> (i32, i32) {
    %c0_i32 = arith.constant 0 : i32
    %c0_i32_0 = arith.constant 0 : i32
    %c0_i32_1 = arith.constant 0 : i32
    return %c0_i32, %c0_i32_0 : i32, i32
  }
  func.func @transform_4(%arg0: i32, %arg1: memref<4x64xi32, #tpu.memory_space<smem>>, %arg2: memref<4x8xi32, #tpu.memory_space<smem>>) -> (i32, i32) {
    %c0_i32 = arith.constant 0 : i32
    %c0_i32_0 = arith.constant 0 : i32
    %c0_i32_1 = arith.constant 0 : i32
    return %c0_i32, %c0_i32_0 : i32, i32
  }
  func.func @transform_5(%arg0: i32, %arg1: memref<4x64xi32, #tpu.memory_space<smem>>, %arg2: memref<4x8xi32, #tpu.memory_space<smem>>) -> (i32, i32) {
    %c0_i32 = arith.constant 0 : i32
    %c0_i32_0 = arith.constant 0 : i32
    %c0_i32_1 = arith.constant 0 : i32
    return %c0_i32, %c0_i32_0 : i32, i32
  }
  func.func @transform_6(%arg0: i32, %arg1: memref<4x64xi32, #tpu.memory_space<smem>>, %arg2: memref<4x8xi32, #tpu.memory_space<smem>>) -> (i32, i32) {
    %c0_i32 = arith.constant 0 : i32
    %c0_i32_0 = arith.constant 0 : i32
    %c0_i32_1 = arith.constant 0 : i32
    return %c0_i32, %c0_i32_0 : i32, i32
  }
  func.func @transform_7(%arg0: i32, %arg1: memref<4x64xi32, #tpu.memory_space<smem>>, %arg2: memref<4x8xi32, #tpu.memory_space<smem>>) -> (i32, i32) {
    %c0_i32 = arith.constant 0 : i32
    %c0_i32_0 = arith.constant 0 : i32
    %c0_i32_1 = arith.constant 0 : i32
    return %c0_i32, %c0_i32_0 : i32, i32
  }
  func.func @transform_8(%arg0: i32, %arg1: memref<4x64xi32, #tpu.memory_space<smem>>, %arg2: memref<4x8xi32, #tpu.memory_space<smem>>) -> (i32, i32) {
    %c0_i32 = arith.constant 0 : i32
    %c0_i32_0 = arith.constant 0 : i32
    %c0_i32_1 = arith.constant 0 : i32
    return %c0_i32, %c0_i32_0 : i32, i32
  }
  func.func @transform_9(%arg0: i32, %arg1: memref<4x64xi32, #tpu.memory_space<smem>>, %arg2: memref<4x8xi32, #tpu.memory_space<smem>>) -> (i32, i32) {
    %c0_i32 = arith.constant 0 : i32
    %c0_i32_0 = arith.constant 0 : i32
    %c0_i32_1 = arith.constant 0 : i32
    return %c0_i32, %c0_i32_0 : i32, i32
  }
}

</mosaic_0001>

<llo_original>
// kernel: _forest_forward_impl.1
$region0: #{_forest_forward_impl.1}
  #allocation0 [shape = 'u32[]', space=smem, size = 0x4, offset = 0x4, fixed_abs, tag = 'smem constant byte address 0x4 - core index']
  #allocation1 [shape = 'u32[144,128]{1,0:T(1,128)}', space=vmem, size = 0x12000, scoped, tag = 'internal scratch']
  #allocation2 [shape = 'f32[64,128]{1,0:T(8,128)}', space=vmem, size = 0x8000, scoped, tag = 'scratch operand']
  #allocation3 [shape = 'f32[8,256]{1,0:T(8,128)}', space=vmem, size = 0x2000, scoped, tag = 'scratch operand']
  #allocation4 [shape = 's32[1]{0}', space=sflag, size = 0x4, scoped, tag = 'scoped memory for _forest_forward_impl.1']
  #allocation5 [shape = 'u8[2048]{0}', space=smem, size = 0x800, scoped, tag = 'prefetched SMEM operand 0']
  #allocation6 [shape = 'u8[2048]{0}', space=smem, size = 0x800, scoped, tag = 'prefetched SMEM operand 1']
  %s0 = inlined_call_operand.vmem [shape: s32[4,64], index: 0, kind: input, shape index: {}]
  %s1 = inlined_call_operand.vmem [shape: s32[4,8], index: 1, kind: input, shape index: {}]
  %s2 = inlined_call_operand.vmem [shape: f32[4,8,1], index: 2, kind: input, shape index: {}]
  %s3 = inlined_call_operand.vmem [shape: f32[4,8,128], index: 3, kind: input, shape index: {}]
  %s4 = inlined_call_operand.vmem [shape: f32[128,384], index: 4, kind: input, shape index: {}]
  %s5 = inlined_call_operand.vmem [shape: f32[1,384], index: 5, kind: input, shape index: {}]
  %s6 = inlined_call_operand.hbm [shape: f32[128,384], index: 6, kind: input, shape index: {}]
  %s7 = inlined_call_operand.vmem [shape: f32[1,384], index: 7, kind: input, shape index: {}]
  %s8 = inlined_call_operand.hbm [shape: f32[256,128], index: 8, kind: input, shape index: {}]
  %s9 = inlined_call_operand.vmem [shape: f32[1,128], index: 9, kind: input, shape index: {}]
  %s10 = inlined_call_operand.hbm [shape: f32[1024,128], index: 10, kind: input, shape index: {}]
  %s11 = inlined_call_operand.hbm [shape: f32[1024,128], index: 11, kind: output, shape index: {}]
  %s12 = sld [smem:[#allocation0]]
  $region85: #{_forest_forward_impl.1} parent=0
    _
  %s14 = ssub.s32 1, %s12
  %s15 = scalar_select 0, %s14, %s12
  %s16 = sshll.u32 %s0, 4
  %s17 = int_to_ptr.vmem [resolvable:$true] %s16
  %19 = dma.vmem_to_smem %s17, 64, [#allocation5], [#allocation4]
  %s20 = sshll.u32 %s1, 4
  %s21 = int_to_ptr.vmem [resolvable:$true] %s20
  %23 = dma.vmem_to_smem %s21, 64, [#allocation6], [#allocation4]
  %24 = dma.done [#allocation4], 128
  %25 = sfence
  $region1: #{_forest_forward_impl.1} parent=0
    #allocation7 [shape = 'u8[196608]{0}', space=vmem, size = 0x30000, scoped, tag = 'input window, operand 6, single buffered']
    #allocation8 [shape = 's32[2]{0}', space=sflag, size = 0x8, scoped, tag = 'scoped memory for _forest_forward_impl.1']
    #allocation9 [shape = 's32[2]{0}', space=sflag, size = 0x8, scoped, tag = 'scoped memory for _forest_forward_impl.1']
    #allocation10 [shape = 'u8[131072]{0}', space=vmem, size = 0x20000, scoped, tag = 'input window, operand 8, single buffered']
    #allocation11 [shape = 's32[1]{0}', space=sflag, size = 0x4, scoped, tag = 'scoped memory for _forest_forward_impl.1']
    #allocation12 [shape = 'u8[524288]{0}', space=vmem, size = 0x80000, scoped, tag = 'input window, operand 10, single buffered']
    #allocation13 [shape = 'u8[524288]{0}', space=vmem, size = 0x80000, scoped, tag = 'output window, operand 0, single buffered']
    %26 = vsyncpa [#allocation8], 0
    %27 = vsyncpa [#allocation11], 0
    %28 = vsyncpa [#allocation9], 0
    loop: start=0, step=1, limit=6
    $region2: #{_forest_forward_impl.1} parent=1 // loop_pre_header
      _
    $region3: #{_forest_forward_impl.1} parent=1 // loop_header
      %s30 = sphi 0, %s34
      %p31 = scmp.ge.s32.totalorder %s30, 6
      %s40 = sphi 0, %s42
      %s43 = sphi 0, %s40
      %s44 = sphi 0, %s43
      %s60 = sphi 0, %s44
      %s66 = sphi 0, %s68
      %s69 = sphi 0, %s66
      %s70 = sphi 0, %s69
      %s86 = sphi 0, %s70
      %s90 = sphi 0, %s90
      %s92 = sphi 0, %s90
      %s93 = sphi 0, %s92
      %s107 = sphi 0, %s93
      %s111 = sphi 0, %s111
      %s113 = sphi 0, %s111
      %s114 = sphi 0, %s113
      %s128 = sphi 0, %s114
      %s132 = sphi 0, %s132
      %s134 = sphi 0, %s132
      %s135 = sphi 0, %s134
      %s149 = sphi 0, %s135
      %s153 = sphi 0, %s153
      %s155 = sphi 0, %s153
      %s156 = sphi 0, %s155
      %s170 = sphi 0, %s156
      %s174 = sphi 0, %s174
      %s176 = sphi 0, %s174
      %s177 = sphi 0, %s176
      %s191 = sphi 0, %s177
      %s195 = sphi 0, %s195
      %s197 = sphi 0, %s195
      %s198 = sphi 0, %s197
      %s212 = sphi 0, %s198
      %s216 = sphi 0, %s216
      %s218 = sphi 0, %s216
      %s219 = sphi 0, %s218
      %s233 = sphi 0, %s219
      %s237 = sphi 0, %s237
      %s239 = sphi 0, %s237
      %s240 = sphi 0, %s239
      %s254 = sphi 0, %s240
    $region4: #{_forest_forward_impl.1} parent=1 // loop_header_branch
      %33 = sbr.rel (%p31) target = $region8
    $region5: #{_forest_forward_impl.1} parent=1 // loop_body
      %s35 = ssub.s32 %s30, 1
      %s36 = ssub.s32 %s30, 2
      %s37 = sadd.s32 %s30, 1
      %s38 = ssub.s32 %s30, %s37
      %p39 = scmp.eq.s32.totalorder %s38, 0
      %s41 = sadd.s32 %s40, 1
      %s42 = scalar_select %p39, %s40, %s41
      %p45 = pneg %p39
      %p46 = scmp.eq.s32.totalorder %s30, 3
      %p47 = por %p45, %p46
      %p48 = scmp.ne.s32.totalorder %s40, %s43
      %p49 = scmp.eq.s32.totalorder %s30, 0
      %p50 = por %p48, %p49
      %p51 = scmp.ne.s32.totalorder %s40, %s43
      %p52 = scmp.eq.s32.totalorder %s35, 3
      %p53 = por %p51, %p52
      %p54 = scmp.ne.s32.totalorder %s43, %s44
      %p55 = scmp.eq.s32.totalorder %s35, 0
      %p56 = por %p54, %p55
      %p57 = scmp.ne.s32.totalorder %s43, %s44
      %p58 = scmp.eq.s32.totalorder %s36, 3
      %p59 = por %p57, %p58
      %p61 = scmp.ne.s32.totalorder %s44, %s60
      %p62 = scmp.eq.s32.totalorder %s36, 0
      %p63 = por %p61, %p62
      %s64 = ssub.s32 %s30, %s37
      %p65 = scmp.eq.s32.totalorder %s64, 0
      %s67 = sadd.s32 %s66, 1
      %s68 = scalar_select %p65, %s66, %s67
      %p71 = pneg %p65
      %p72 = scmp.eq.s32.totalorder %s30, 3
      %p73 = por %p71, %p72
      %p74 = scmp.ne.s32.totalorder %s66, %s69
      %p75 = scmp.eq.s32.totalorder %s30, 0
      %p76 = por %p74, %p75
      %p77 = scmp.ne.s32.totalorder %s66, %s69
      %p78 = scmp.eq.s32.totalorder %s35, 3
      %p79 = por %p77, %p78
      %p80 = scmp.ne.s32.totalorder %s69, %s70
      %p81 = scmp.eq.s32.totalorder %s35, 0
      %p82 = por %p80, %p81
      %p83 = scmp.ne.s32.totalorder %s69, %s70
      %p84 = scmp.eq.s32.totalorder %s36, 3
      %p85 = por %p83, %p84
      %p87 = scmp.ne.s32.totalorder %s70, %s86
      %p88 = scmp.eq.s32.totalorder %s36, 0
      %p89 = por %p87, %p88
      %s91 = sadd.s32 %s90, 1
      %p94 = scmp.eq.s32.totalorder %s30, 3
      %p95 = scmp.ne.s32.totalorder %s90, %s92
      %p96 = scmp.eq.s32.totalorder %s30, 0
      %p97 = por %p95, %p96
      %p98 = scmp.ne.s32.totalorder %s90, %s92
      %p99 = scmp.eq.s32.totalorder %s35, 3
      %p100 = por %p98, %p99
      %p101 = scmp.ne.s32.totalorder %s92, %s93
      %p102 = scmp.eq.s32.totalorder %s35, 0
      %p103 = por %p101, %p102
      %p104 = scmp.ne.s32.totalorder %s92, %s93
      %p105 = scmp.eq.s32.totalorder %s36, 3
      %p106 = por %p104, %p105
      %p108 = scmp.ne.s32.totalorder %s93, %s107
      %p109 = scmp.eq.s32.totalorder %s36, 0
      %p110 = por %p108, %p109
      %s112 = sadd.s32 %s111, 1
      %p115 = scmp.eq.s32.totalorder %s30, 3
      %p116 = scmp.ne.s32.totalorder %s111, %s113
      %p117 = scmp.eq.s32.totalorder %s30, 0
      %p118 = por %p116, %p117
      %p119 = scmp.ne.s32.totalorder %s111, %s113
      %p120 = scmp.eq.s32.totalorder %s35, 3
      %p121 = por %p119, %p120
      %p122 = scmp.ne.s32.totalorder %s113, %s114
      %p123 = scmp.eq.s32.totalorder %s35, 0
      %p124 = por %p122, %p123
      %p125 = scmp.ne.s32.totalorder %s113, %s114
      %p126 = scmp.eq.s32.totalorder %s36, 3
      %p127 = por %p125, %p126
      %p129 = scmp.ne.s32.totalorder %s114, %s128
      %p130 = scmp.eq.s32.totalorder %s36, 0
      %p131 = por %p129, %p130
      %s133 = sadd.s32 %s132, 1
      %p136 = scmp.eq.s32.totalorder %s30, 3
      %p137 = scmp.ne.s32.totalorder %s132, %s134
      %p138 = scmp.eq.s32.totalorder %s30, 0
      %p139 = por %p137, %p138
      %p140 = scmp.ne.s32.totalorder %s132, %s134
      %p141 = scmp.eq.s32.totalorder %s35, 3
      %p142 = por %p140, %p141
      %p143 = scmp.ne.s32.totalorder %s134, %s135
      %p144 = scmp.eq.s32.totalorder %s35, 0
      %p145 = por %p143, %p144
      %p146 = scmp.ne.s32.totalorder %s134, %s135
      %p147 = scmp.eq.s32.totalorder %s36, 3
      %p148 = por %p146, %p147
      %p150 = scmp.ne.s32.totalorder %s135, %s149
      %p151 = scmp.eq.s32.totalorder %s36, 0
      %p152 = por %p150, %p151
      %s154 = sadd.s32 %s153, 1
      %p157 = scmp.eq.s32.totalorder %s30, 3
      %p158 = scmp.ne.s32.totalorder %s153, %s155
      %p159 = scmp.eq.s32.totalorder %s30, 0
      %p160 = por %p158, %p159
      %p161 = scmp.ne.s32.totalorder %s153, %s155
      %p162 = scmp.eq.s32.totalorder %s35, 3
      %p163 = por %p161, %p162
      %p164 = scmp.ne.s32.totalorder %s155, %s156
      %p165 = scmp.eq.s32.totalorder %s35, 0
      %p166 = por %p164, %p165
      %p167 = scmp.ne.s32.totalorder %s155, %s156
      %p168 = scmp.eq.s32.totalorder %s36, 3
      %p169 = por %p167, %p168
      %p171 = scmp.ne.s32.totalorder %s156, %s170
      %p172 = scmp.eq.s32.totalorder %s36, 0
      %p173 = por %p171, %p172
      %s175 = sadd.s32 %s174, 1
      %p178 = scmp.eq.s32.totalorder %s30, 3
      %p179 = scmp.ne.s32.totalorder %s174, %s176
      %p180 = scmp.eq.s32.totalorder %s30, 0
      %p181 = por %p179, %p180
      %p182 = scmp.ne.s32.totalorder %s174, %s176
      %p183 = scmp.eq.s32.totalorder %s35, 3
      %p184 = por %p182, %p183
      %p185 = scmp.ne.s32.totalorder %s176, %s177
      %p186 = scmp.eq.s32.totalorder %s35, 0
      %p187 = por %p185, %p186
      %p188 = scmp.ne.s32.totalorder %s176, %s177
      %p189 = scmp.eq.s32.totalorder %s36, 3
      %p190 = por %p188, %p189
      %p192 = scmp.ne.s32.totalorder %s177, %s191
      %p193 = scmp.eq.s32.totalorder %s36, 0
      %p194 = por %p192, %p193
      %s196 = sadd.s32 %s195, 1
      %p199 = scmp.eq.s32.totalorder %s30, 3
      %p200 = scmp.ne.s32.totalorder %s195, %s197
      %p201 = scmp.eq.s32.totalorder %s30, 0
      %p202 = por %p200, %p201
      %p203 = scmp.ne.s32.totalorder %s195, %s197
      %p204 = scmp.eq.s32.totalorder %s35, 3
      %p205 = por %p203, %p204
      %p206 = scmp.ne.s32.totalorder %s197, %s198
      %p207 = scmp.eq.s32.totalorder %s35, 0
      %p208 = por %p206, %p207
      %p209 = scmp.ne.s32.totalorder %s197, %s198
      %p210 = scmp.eq.s32.totalorder %s36, 3
      %p211 = por %p209, %p210
      %p213 = scmp.ne.s32.totalorder %s198, %s212
      %p214 = scmp.eq.s32.totalorder %s36, 0
      %p215 = por %p213, %p214
      %s217 = sadd.s32 %s216, 1
      %p220 = scmp.eq.s32.totalorder %s30, 3
      %p221 = scmp.ne.s32.totalorder %s216, %s218
      %p222 = scmp.eq.s32.totalorder %s30, 0
      %p223 = por %p221, %p222
      %p224 = scmp.ne.s32.totalorder %s216, %s218
      %p225 = scmp.eq.s32.totalorder %s35, 3
      %p226 = por %p224, %p225
      %p227 = scmp.ne.s32.totalorder %s218, %s219
      %p228 = scmp.eq.s32.totalorder %s35, 0
      %p229 = por %p227, %p228
      %p230 = scmp.ne.s32.totalorder %s218, %s219
      %p231 = scmp.eq.s32.totalorder %s36, 3
      %p232 = por %p230, %p231
      %p234 = scmp.ne.s32.totalorder %s219, %s233
      %p235 = scmp.eq.s32.totalorder %s36, 0
      %p236 = por %p234, %p235
      %s238 = sadd.s32 %s237, 1
      %p241 = scmp.eq.s32.totalorder %s30, 3
      %p242 = scmp.ne.s32.totalorder %s237, %s239
      %p243 = scmp.eq.s32.totalorder %s30, 0
      %p244 = por %p242, %p243
      %p245 = scmp.ne.s32.totalorder %s237, %s239
      %p246 = scmp.eq.s32.totalorder %s35, 3
      %p247 = por %p245, %p246
      %p248 = scmp.ne.s32.totalorder %s239, %s240
      %p249 = scmp.eq.s32.totalorder %s35, 0
      %p250 = por %p248, %p249
      %p251 = scmp.ne.s32.totalorder %s239, %s240
      %p252 = scmp.eq.s32.totalorder %s36, 3
      %p253 = por %p251, %p252
      %p255 = scmp.ne.s32.totalorder %s240, %s254
      %p256 = scmp.eq.s32.totalorder %s36, 0
      %p257 = por %p255, %p256
      %p258 = scmp.le.s32.totalorder 1, %s30
      %p259 = scmp.lt.s32.totalorder %s30, 5
      %p260 = pnand %p258, %p259
      %p261 = pneg %p260
      // Predicated region
      $region9: #{_forest_forward_impl.1} parent=5 // pred_check
        _
      $region10: #{_forest_forward_impl.1} parent=5 // pred_check_branch
        %263 = sbr.rel (%p260) target = $region12
      $region11: #{_forest_forward_impl.1} parent=5 // pred_region
        %s264 = ssub.s32 %s30, 1
        // Predicated region
        $region13: #{_forest_forward_impl.1} parent=11 // pred_check
          %p265 = pneg %p103
        $region14: #{_forest_forward_impl.1} parent=11 // pred_check_branch
          %267 = sbr.rel (%p265) target = $region16
        $region15: #{_forest_forward_impl.1} parent=11 // pred_region
          _
        $region16: #{_forest_forward_impl.1} parent=11 // pred_fallthru
          _
        // Predicated region
        $region17: #{_forest_forward_impl.1} parent=11 // pred_check
          %p268 = pneg %p124
        $region18: #{_forest_forward_impl.1} parent=11 // pred_check_branch
          %270 = sbr.rel (%p268) target = $region20
        $region19: #{_forest_forward_impl.1} parent=11 // pred_region
          _
        $region20: #{_forest_forward_impl.1} parent=11 // pred_fallthru
          _
        // Predicated region
        $region21: #{_forest_forward_impl.1} parent=11 // pred_check
          %p271 = pneg %p145
        $region22: #{_forest_forward_impl.1} parent=11 // pred_check_branch
          %273 = sbr.rel (%p271) target = $region24
        $region23: #{_forest_forward_impl.1} parent=11 // pred_region
          %s275 = ssub.s32 6144, 6144
          %276 = vsyncadd [#allocation8], %s275
          %s277 = sshll.u32 [#allocation7], 4
          %s278 = int_to_ptr.vmem [resolvable:$true] %s277
          %283 = dma.hbm_to_vmem [thread:$0]  %s6, 6144, %s278, [#allocation8], 384, 384, 24
        $region24: #{_forest_forward_impl.1} parent=11 // pred_fallthru
          _
        // Predicated region
        $region25: #{_forest_forward_impl.1} parent=11 // pred_check
          %p284 = pneg %p166
        $region26: #{_forest_forward_impl.1} parent=11 // pred_check_branch
          %286 = sbr.rel (%p284) target = $region28
        $region27: #{_forest_forward_impl.1} parent=11 // pred_region
          _
        $region28: #{_forest_forward_impl.1} parent=11 // pred_fallthru
          _
        // Predicated region
        $region29: #{_forest_forward_impl.1} parent=11 // pred_check
          %p287 = pneg %p187
        $region30: #{_forest_forward_impl.1} parent=11 // pred_check_branch
          %289 = sbr.rel (%p287) target = $region32
        $region31: #{_forest_forward_impl.1} parent=11 // pred_region
          %s291 = ssub.s32 4096, 4096
          %292 = vsyncadd [#allocation11], %s291
          %s293 = sshll.u32 [#allocation10], 4
          %s294 = int_to_ptr.vmem [resolvable:$true] %s293
          %299 = dma.hbm_to_vmem [thread:$0]  %s8, 4096, %s294, [#allocation11], 128, 128, 8
        $region32: #{_forest_forward_impl.1} parent=11 // pred_fallthru
          _
        // Predicated region
        $region33: #{_forest_forward_impl.1} parent=11 // pred_check
          %p300 = pneg %p208
        $region34: #{_forest_forward_impl.1} parent=11 // pred_check_branch
          %302 = sbr.rel (%p300) target = $region36
        $region35: #{_forest_forward_impl.1} parent=11 // pred_region
          _
        $region36: #{_forest_forward_impl.1} parent=11 // pred_fallthru
          _
        // Predicated region
        $region37: #{_forest_forward_impl.1} parent=11 // pred_check
          %p303 = pneg %p229
        $region38: #{_forest_forward_impl.1} parent=11 // pred_check_branch
          %305 = sbr.rel (%p303) target = $region40
        $region39: #{_forest_forward_impl.1} parent=11 // pred_region
          %s307 = ssub.s32 16384, 16384
          %308 = vsyncadd [#allocation11], %s307
          %s309 = sshll.u32 [#allocation12], 4
          %s310 = int_to_ptr.vmem [resolvable:$true] %s309
          %315 = dma.hbm_to_vmem [thread:$0]  %s10, 16384, %s310, [#allocation11], 128, 128, 8
        $region40: #{_forest_forward_impl.1} parent=11 // pred_fallthru
          _
      $region12: #{_forest_forward_impl.1} parent=5 // pred_fallthru
        _
      %p316 = scmp.lt.s32.totalorder %s30, 4
      // Predicated region
      $region41: #{_forest_forward_impl.1} parent=5 // pred_check
        %p317 = pneg %p316
      $region42: #{_forest_forward_impl.1} parent=5 // pred_check_branch
        %319 = sbr.rel (%p317) target = $region44
      $region43: #{_forest_forward_impl.1} parent=5 // pred_region
        // Predicated region
        $region45: #{_forest_forward_impl.1} parent=43 // pred_check
          %p320 = pneg %p50
        $region46: #{_forest_forward_impl.1} parent=43 // pred_check_branch
          %322 = sbr.rel (%p320) target = $region48
        $region47: #{_forest_forward_impl.1} parent=43 // pred_region
          %p323 = scmp.lt.s32.totalorder %s30, 3
          %s324 = scalar_select %p323, %s30, 3
          %s325 = smul.addr %s324, 8
          %s326 = scalar_lea.vmem %s2, %s325
        $region48: #{_forest_forward_impl.1} parent=43 // pred_fallthru
          _
        // Predicated region
        $region49: #{_forest_forward_impl.1} parent=43 // pred_check
          %p327 = pneg %p76
        $region50: #{_forest_forward_impl.1} parent=43 // pred_check_branch
          %329 = sbr.rel (%p327) target = $region52
        $region51: #{_forest_forward_impl.1} parent=43 // pred_region
          %p330 = scmp.lt.s32.totalorder %s30, 3
          %s331 = scalar_select %p330, %s30, 3
          %s332 = smul.addr %s331, 8
          %s333 = scalar_lea.vmem %s3, %s332
        $region52: #{_forest_forward_impl.1} parent=43 // pred_fallthru
          _
      $region44: #{_forest_forward_impl.1} parent=5 // pred_fallthru
        _
      %p334 = scmp.le.s32.totalorder 1, %s30
      %p335 = scmp.lt.s32.totalorder %s30, 5
      %p336 = pnand %p334, %p335
      %p337 = pneg %p336
      // Predicated region
      $region53: #{_forest_forward_impl.1} parent=5 // pred_check
        _
      $region54: #{_forest_forward_impl.1} parent=5 // pred_check_branch
        %339 = sbr.rel (%p336) target = $region56
      $region55: #{_forest_forward_impl.1} parent=5 // pred_region
        %s340 = ssub.s32 %s30, 1
        // Predicated region
        $region57: #{_forest_forward_impl.1} parent=55 // pred_check
          %p341 = pneg %p145
        $region58: #{_forest_forward_impl.1} parent=55 // pred_check_branch
          %343 = sbr.rel (%p341) target = $region60
        $region59: #{_forest_forward_impl.1} parent=55 // pred_region
          %344 = dma.done [#allocation8], 6144
        $region60: #{_forest_forward_impl.1} parent=55 // pred_fallthru
          _
        // Predicated region
        $region61: #{_forest_forward_impl.1} parent=55 // pred_check
          %p345 = pneg %p187
        $region62: #{_forest_forward_impl.1} parent=55 // pred_check_branch
          %347 = sbr.rel (%p345) target = $region64
        $region63: #{_forest_forward_impl.1} parent=55 // pred_region
          %348 = dma.done [#allocation11], 4096
        $region64: #{_forest_forward_impl.1} parent=55 // pred_fallthru
          _
        // Predicated region
        $region65: #{_forest_forward_impl.1} parent=55 // pred_check
          %p349 = pneg %p229
        $region66: #{_forest_forward_impl.1} parent=55 // pred_check_branch
          %351 = sbr.rel (%p349) target = $region68
        $region67: #{_forest_forward_impl.1} parent=55 // pred_region
          %352 = dma.done [#allocation11], 16384
        $region68: #{_forest_forward_impl.1} parent=55 // pred_fallthru
          _
        %p353 = scmp.lt.s32.totalorder %s35, 3
        %s354 = scalar_select %p353, %s35, 3
        %s355 = smul.addr %s354, 8
        %s356 = scalar_lea.vmem %s2, %s355
        %p357 = pneg %p56
        %p358 = pneg %p53
        %p359 = scmp.lt.s32.totalorder %s35, 3
        %s360 = scalar_select %p359, %s35, 3
        %s361 = smul.addr %s360, 8
        %s362 = scalar_lea.vmem %s3, %s361
        %p363 = pneg %p82
        %p364 = pneg %p79
        %p365 = pneg %p103
        %p366 = pneg %p100
        %p367 = pneg %p124
        %p368 = pneg %p121
        %p369 = pneg %p145
        %p370 = pneg %p142
        %p371 = pneg %p166
        %p372 = pneg %p163
        %p373 = pneg %p187
        %p374 = pneg %p184
        %p375 = pneg %p208
        %p376 = pneg %p205
        %p377 = pneg %p229
        %p378 = pneg %p226
        %p379 = pneg %p250
        %p380 = pneg %p247
        %p381 = scmp.lt.s32.totalorder %s35, 3
        %s382 = scalar_select %p381, %s35, 3
        %s383 = smul.addr %s382, 8
        %s384 = scalar_lea.vmem %s2, %s383
        %p385 = scmp.lt.s32.totalorder %s35, 3
        %s386 = scalar_select %p385, %s35, 3
        %s387 = smul.addr %s386, 8
        %s388 = scalar_lea.vmem %s3, %s387
        %p389 = scmp.eq.s32.totalorder %s35, 0
        // Predicated region
        $region69: #{_forest_forward_impl.1} parent=55 // pred_check
          %p390 = pneg %p389
        $region70: #{_forest_forward_impl.1} parent=55 // pred_check_branch
          %392 = sbr.rel (%p390) target = $region72
        $region71: #{_forest_forward_impl.1} parent=55 // pred_region
          %v393 = vld [vmem:[#allocation12] sm:$0xff]
          %v394 = vld [vmem:[#allocation12 + $0x8] sm:$0xff]
          %v395 = vld [vmem:[#allocation12 + $0x10] sm:$0xff]
          %v396 = vld [vmem:[#allocation12 + $0x18] sm:$0xff]
          %v397 = vld [vmem:[#allocation12 + $0x20] sm:$0xff]
          %v398 = vld [vmem:[#allocation12 + $0x28] sm:$0xff]
          %v399 = vld [vmem:[#allocation12 + $0x30] sm:$0xff]
          %v400 = vld [vmem:[#allocation12 + $0x38] sm:$0xff]
          %v401 = vld [vmem:[#allocation12 + $0x40] sm:$0xff]
          %v402 = vld [vmem:[#allocation12 + $0x48] sm:$0xff]
          %v403 = vld [vmem:[#allocation12 + $0x50] sm:$0xff]
          %v404 = vld [vmem:[#allocation12 + $0x58] sm:$0xff]
          %v405 = vld [vmem:[#allocation12 + $0x60] sm:$0xff]
          %v406 = vld [vmem:[#allocation12 + $0x68] sm:$0xff]
          %v407 = vld [vmem:[#allocation12 + $0x70] sm:$0xff]
          %v408 = vld [vmem:[#allocation12 + $0x78] sm:$0xff]
          %409 = vst [vmem:[#allocation13] sm:$0xff] %v393
          %410 = vst [vmem:[#allocation13 + $0x8] sm:$0xff] %v394
          %411 = vst [vmem:[#allocation13 + $0x10] sm:$0xff] %v395
          %412 = vst [vmem:[#allocation13 + $0x18] sm:$0xff] %v396
          %413 = vst [vmem:[#allocation13 + $0x20] sm:$0xff] %v397
          %414 = vst [vmem:[#allocation13 + $0x28] sm:$0xff] %v398
          %415 = vst [vmem:[#allocation13 + $0x30] sm:$0xff] %v399
          %416 = vst [vmem:[#allocation13 + $0x38] sm:$0xff] %v400
          %417 = vst [vmem:[#allocation13 + $0x40] sm:$0xff] %v401
          %418 = vst [vmem:[#allocation13 + $0x48] sm:$0xff] %v402
          %419 = vst [vmem:[#allocation13 + $0x50] sm:$0xff] %v403
          %420 = vst [vmem:[#allocation13 + $0x58] sm:$0xff] %v404
          %421 = vst [vmem:[#allocation13 + $0x60] sm:$0xff] %v405
          %422 = vst [vmem:[#allocation13 + $0x68] sm:$0xff] %v406
          %423 = vst [vmem:[#allocation13 + $0x70] sm:$0xff] %v407
          %424 = vst [vmem:[#allocation13 + $0x78] sm:$0xff] %v408
          %v425 = vld [vmem:[#allocation12 + $0x80] sm:$0xff]
          %v426 = vld [vmem:[#allocation12 + $0x88] sm:$0xff]
          %v427 = vld [vmem:[#allocation12 + $0x90] sm:$0xff]
          %v428 = vld [vmem:[#allocation12 + $0x98] sm:$0xff]
          %v429 = vld [vmem:[#allocation12 + $0xa0] sm:$0xff]
          %v430 = vld [vmem:[#allocation12 + $0xa8] sm:$0xff]
          %v431 = vld [vmem:[#allocation12 + $0xb0] sm:$0xff]
          %v432 = vld [vmem:[#allocation12 + $0xb8] sm:$0xff]
          %v433 = vld [vmem:[#allocation12 + $0xc0] sm:$0xff]
          %v434 = vld [vmem:[#allocation12 + $0xc8] sm:$0xff]
          %v435 = vld [vmem:[#allocation12 + $0xd0] sm:$0xff]
          %v436 = vld [vmem:[#allocation12 + $0xd8] sm:$0xff]
          %v437 = vld [vmem:[#allocation12 + $0xe0] sm:$0xff]
          %v438 = vld [vmem:[#allocation12 + $0xe8] sm:$0xff]
          %v439 = vld [vmem:[#allocation12 + $0xf0] sm:$0xff]
          %v440 = vld [vmem:[#allocation12 + $0xf8] sm:$0xff]
          %441 = vst [vmem:[#allocation13 + $0x80] sm:$0xff] %v425
          %442 = vst [vmem:[#allocation13 + $0x88] sm:$0xff] %v426
          %443 = vst [vmem:[#allocation13 + $0x90] sm:$0xff] %v427
          %444 = vst [vmem:[#allocation13 + $0x98] sm:$0xff] %v428
          %445 = vst [vmem:[#allocation13 + $0xa0] sm:$0xff] %v429
          %446 = vst [vmem:[#allocation13 + $0xa8] sm:$0xff] %v430
          %447 = vst [vmem:[#allocation13 + $0xb0] sm:$0xff] %v431
          %448 = vst [vmem:[#allocation13 + $0xb8] sm:$0xff] %v432
          %449 = vst [vmem:[#allocation13 + $0xc0] sm:$0xff] %v433
          %450 = vst [vmem:[#allocation13 + $0xc8] sm:$0xff] %v434
          %451 = vst [vmem:[#allocation13 + $0xd0] sm:$0xff] %v435
          %452 = vst [vmem:[#allocation13 + $0xd8] sm:$0xff] %v436
          %453 = vst [vmem:[#allocation13 + $0xe0] sm:$0xff] %v437
          %454 = vst [vmem:[#allocation13 + $0xe8] sm:$0xff] %v438
          %455 = vst [vmem:[#allocation13 + $0xf0] sm:$0xff] %v439
          %456 = vst [vmem:[#allocation13 + $0xf8] sm:$0xff] %v440
          %v457 = vld [vmem:[#allocation12 + $0x100] sm:$0xff]
          %v458 = vld [vmem:[#allocation12 + $0x108] sm:$0xff]
          %v459 = vld [vmem:[#allocation12 + $0x110] sm:$0xff]
          %v460 = vld [vmem:[#allocation12 + $0x118] sm:$0xff]
          %v461 = vld [vmem:[#allocation12 + $0x120] sm:$0xff]
          %v462 = vld [vmem:[#allocation12 + $0x128] sm:$0xff]
          %v463 = vld [vmem:[#allocation12 + $0x130] sm:$0xff]
          %v464 = vld [vmem:[#allocation12 + $0x138] sm:$0xff]
          %v465 = vld [vmem:[#allocation12 + $0x140] sm:$0xff]
          %v466 = vld [vmem:[#allocation12 + $0x148] sm:$0xff]
          %v467 = vld [vmem:[#allocation12 + $0x150] sm:$0xff]
          %v468 = vld [vmem:[#allocation12 + $0x158] sm:$0xff]
          %v469 = vld [vmem:[#allocation12 + $0x160] sm:$0xff]
          %v470 = vld [vmem:[#allocation12 + $0x168] sm:$0xff]
          %v471 = vld [vmem:[#allocation12 + $0x170] sm:$0xff]
          %v472 = vld [vmem:[#allocation12 + $0x178] sm:$0xff]
          %473 = vst [vmem:[#allocation13 + $0x100] sm:$0xff] %v457
          %474 = vst [vmem:[#allocation13 + $0x108] sm:$0xff] %v458
          %475 = vst [vmem:[#allocation13 + $0x110] sm:$0xff] %v459
          %476 = vst [vmem:[#allocation13 + $0x118] sm:$0xff] %v460
          %477 = vst [vmem:[#allocation13 + $0x120] sm:$0xff] %v461
          %478 = vst [vmem:[#allocation13 + $0x128] sm:$0xff] %v462
          %479 = vst [vmem:[#allocation13 + $0x130] sm:$0xff] %v463
          %480 = vst [vmem:[#allocation13 + $0x138] sm:$0xff] %v464
          %481 = vst [vmem:[#allocation13 + $0x140] sm:$0xff] %v465
          %482 = vst [vmem:[#allocation13 + $0x148] sm:$0xff] %v466
          %483 = vst [vmem:[#allocation13 + $0x150] sm:$0xff] %v467
          %484 = vst [vmem:[#allocation13 + $0x158] sm:$0xff] %v468
          %485 = vst [vmem:[#allocation13 + $0x160] sm:$0xff] %v469
          %486 = vst [vmem:[#allocation13 + $0x168] sm:$0xff] %v470
          %487 = vst [vmem:[#allocation13 + $0x170] sm:$0xff] %v471
          %488 = vst [vmem:[#allocation13 + $0x178] sm:$0xff] %v472
          %v489 = vld [vmem:[#allocation12 + $0x180] sm:$0xff]
          %v490 = vld [vmem:[#allocation12 + $0x188] sm:$0xff]
          %v491 = vld [vmem:[#allocation12 + $0x190] sm:$0xff]
          %v492 = vld [vmem:[#allocation12 + $0x198] sm:$0xff]
          %v493 = vld [vmem:[#allocation12 + $0x1a0] sm:$0xff]
          %v494 = vld [vmem:[#allocation12 + $0x1a8] sm:$0xff]
          %v495 = vld [vmem:[#allocation12 + $0x1b0] sm:$0xff]
          %v496 = vld [vmem:[#allocation12 + $0x1b8] sm:$0xff]
          %v497 = vld [vmem:[#allocation12 + $0x1c0] sm:$0xff]
          %v498 = vld [vmem:[#allocation12 + $0x1c8] sm:$0xff]
          %v499 = vld [vmem:[#allocation12 + $0x1d0] sm:$0xff]
          %v500 = vld [vmem:[#allocation12 + $0x1d8] sm:$0xff]
          %v501 = vld [vmem:[#allocation12 + $0x1e0] sm:$0xff]
          %v502 = vld [vmem:[#allocation12 + $0x1e8] sm:$0xff]
          %v503 = vld [vmem:[#allocation12 + $0x1f0] sm:$0xff]
          %v504 = vld [vmem:[#allocation12 + $0x1f8] sm:$0xff]
          %505 = vst [vmem:[#allocation13 + $0x180] sm:$0xff] %v489
          %506 = vst [vmem:[#allocation13 + $0x188] sm:$0xff] %v490
          %507 = vst [vmem:[#allocation13 + $0x190] sm:$0xff] %v491
          %508 = vst [vmem:[#allocation13 + $0x198] sm:$0xff] %v492
          %509 = vst [vmem:[#allocation13 + $0x1a0] sm:$0xff] %v493
          %510 = vst [vmem:[#allocation13 + $0x1a8] sm:$0xff] %v494
          %511 = vst [vmem:[#allocation13 + $0x1b0] sm:$0xff] %v495
          %512 = vst [vmem:[#allocation13 + $0x1b8] sm:$0xff] %v496
          %513 = vst [vmem:[#allocation13 + $0x1c0] sm:$0xff] %v497
          %514 = vst [vmem:[#allocation13 + $0x1c8] sm:$0xff] %v498
          %515 = vst [vmem:[#allocation13 + $0x1d0] sm:$0xff] %v499
          %516 = vst [vmem:[#allocation13 + $0x1d8] sm:$0xff] %v500
          %517 = vst [vmem:[#allocation13 + $0x1e0] sm:$0xff] %v501
          %518 = vst [vmem:[#allocation13 + $0x1e8] sm:$0xff] %v502
          %519 = vst [vmem:[#allocation13 + $0x1f0] sm:$0xff] %v503
          %520 = vst [vmem:[#allocation13 + $0x1f8] sm:$0xff] %v504
          %v521 = vld [vmem:[#allocation12 + $0x200] sm:$0xff]
          %v522 = vld [vmem:[#allocation12 + $0x208] sm:$0xff]
          %v523 = vld [vmem:[#allocation12 + $0x210] sm:$0xff]
          %v524 = vld [vmem:[#allocation12 + $0x218] sm:$0xff]
          %v525 = vld [vmem:[#allocation12 + $0x220] sm:$0xff]
          %v526 = vld [vmem:[#allocation12 + $0x228] sm:$0xff]
          %v527 = vld [vmem:[#allocation12 + $0x230] sm:$0xff]
          %v528 = vld [vmem:[#allocation12 + $0x238] sm:$0xff]
          %v529 = vld [vmem:[#allocation12 + $0x240] sm:$0xff]
          %v530 = vld [vmem:[#allocation12 + $0x248] sm:$0xff]
          %v531 = vld [vmem:[#allocation12 + $0x250] sm:$0xff]
          %v532 = vld [vmem:[#allocation12 + $0x258] sm:$0xff]
          %v533 = vld [vmem:[#allocation12 + $0x260] sm:$0xff]
          %v534 = vld [vmem:[#allocation12 + $0x268] sm:$0xff]
          %v535 = vld [vmem:[#allocation12 + $0x270] sm:$0xff]
          %v536 = vld [vmem:[#allocation12 + $0x278] sm:$0xff]
          %537 = vst [vmem:[#allocation13 + $0x200] sm:$0xff] %v521
          %538 = vst [vmem:[#allocation13 + $0x208] sm:$0xff] %v522
          %539 = vst [vmem:[#allocation13 + $0x210] sm:$0xff] %v523
          %540 = vst [vmem:[#allocation13 + $0x218] sm:$0xff] %v524
          %541 = vst [vmem:[#allocation13 + $0x220] sm:$0xff] %v525
          %542 = vst [vmem:[#allocation13 + $0x228] sm:$0xff] %v526
          %543 = vst [vmem:[#allocation13 + $0x230] sm:$0xff] %v527
          %544 = vst [vmem:[#allocation13 + $0x238] sm:$0xff] %v528
          %545 = vst [vmem:[#allocation13 + $0x240] sm:$0xff] %v529
          %546 = vst [vmem:[#allocation13 + $0x248] sm:$0xff] %v530
          %547 = vst [vmem:[#allocation13 + $0x250] sm:$0xff] %v531
          %548 = vst [vmem:[#allocation13 + $0x258] sm:$0xff] %v532
          %549 = vst [vmem:[#allocation13 + $0x260] sm:$0xff] %v533
          %550 = vst [vmem:[#allocation13 + $0x268] sm:$0xff] %v534
          %551 = vst [vmem:[#allocation13 + $0x270] sm:$0xff] %v535
          %552 = vst [vmem:[#allocation13 + $0x278] sm:$0xff] %v536
          %v553 = vld [vmem:[#allocation12 + $0x280] sm:$0xff]
          %v554 = vld [vmem:[#allocation12 + $0x288] sm:$0xff]
          %v555 = vld [vmem:[#allocation12 + $0x290] sm:$0xff]
          %v556 = vld [vmem:[#allocation12 + $0x298] sm:$0xff]
          %v557 = vld [vmem:[#allocation12 + $0x2a0] sm:$0xff]
          %v558 = vld [vmem:[#allocation12 + $0x2a8] sm:$0xff]
          %v559 = vld [vmem:[#allocation12 + $0x2b0] sm:$0xff]
          %v560 = vld [vmem:[#allocation12 + $0x2b8] sm:$0xff]
          %v561 = vld [vmem:[#allocation12 + $0x2c0] sm:$0xff]
          %v562 = vld [vmem:[#allocation12 + $0x2c8] sm:$0xff]
          %v563 = vld [vmem:[#allocation12 + $0x2d0] sm:$0xff]
          %v564 = vld [vmem:[#allocation12 + $0x2d8] sm:$0xff]
          %v565 = vld [vmem:[#allocation12 + $0x2e0] sm:$0xff]
          %v566 = vld [vmem:[#allocation12 + $0x2e8] sm:$0xff]
          %v567 = vld [vmem:[#allocation12 + $0x2f0] sm:$0xff]
          %v568 = vld [vmem:[#allocation12 + $0x2f8] sm:$0xff]
          %569 = vst [vmem:[#allocation13 + $0x280] sm:$0xff] %v553
          %570 = vst [vmem:[#allocation13 + $0x288] sm:$0xff] %v554
          %571 = vst [vmem:[#allocation13 + $0x290] sm:$0xff] %v555
          %572 = vst [vmem:[#allocation13 + $0x298] sm:$0xff] %v556
          %573 = vst [vmem:[#allocation13 + $0x2a0] sm:$0xff] %v557
          %574 = vst [vmem:[#allocation13 + $0x2a8] sm:$0xff] %v558
          %575 = vst [vmem:[#allocation13 + $0x2b0] sm:$0xff] %v559
          %576 = vst [vmem:[#allocation13 + $0x2b8] sm:$0xff] %v560
          %577 = vst [vmem:[#allocation13 + $0x2c0] sm:$0xff] %v561
          %578 = vst [vmem:[#allocation13 + $0x2c8] sm:$0xff] %v562
          %579 = vst [vmem:[#allocation13 + $0x2d0] sm:$0xff] %v563
          %580 = vst [vmem:[#allocation13 + $0x2d8] sm:$0xff] %v564
          %581 = vst [vmem:[#allocation13 + $0x2e0] sm:$0xff] %v565
          %582 = vst [vmem:[#allocation13 + $0x2e8] sm:$0xff] %v566
          %583 = vst [vmem:[#allocation13 + $0x2f0] sm:$0xff] %v567
          %584 = vst [vmem:[#allocation13 + $0x2f8] sm:$0xff] %v568
          %v585 = vld [vmem:[#allocation12 + $0x300] sm:$0xff]
          %v586 = vld [vmem:[#allocation12 + $0x308] sm:$0xff]
          %v587 = vld [vmem:[#allocation12 + $0x310] sm:$0xff]
          %v588 = vld [vmem:[#allocation12 + $0x318] sm:$0xff]
          %v589 = vld [vmem:[#allocation12 + $0x320] sm:$0xff]
          %v590 = vld [vmem:[#allocation12 + $0x328] sm:$0xff]
          %v591 = vld [vmem:[#allocation12 + $0x330] sm:$0xff]
          %v592 = vld [vmem:[#allocation12 + $0x338] sm:$0xff]
          %v593 = vld [vmem:[#allocation12 + $0x340] sm:$0xff]
          %v594 = vld [vmem:[#allocation12 + $0x348] sm:$0xff]
          %v595 = vld [vmem:[#allocation12 + $0x350] sm:$0xff]
          %v596 = vld [vmem:[#allocation12 + $0x358] sm:$0xff]
          %v597 = vld [vmem:[#allocation12 + $0x360] sm:$0xff]
          %v598 = vld [vmem:[#allocation12 + $0x368] sm:$0xff]
          %v599 = vld [vmem:[#allocation12 + $0x370] sm:$0xff]
          %v600 = vld [vmem:[#allocation12 + $0x378] sm:$0xff]
          %601 = vst [vmem:[#allocation13 + $0x300] sm:$0xff] %v585
          %602 = vst [vmem:[#allocation13 + $0x308] sm:$0xff] %v586
          %603 = vst [vmem:[#allocation13 + $0x310] sm:$0xff] %v587
          %604 = vst [vmem:[#allocation13 + $0x318] sm:$0xff] %v588
          %605 = vst [vmem:[#allocation13 + $0x320] sm:$0xff] %v589
          %606 = vst [vmem:[#allocation13 + $0x328] sm:$0xff] %v590
          %607 = vst [vmem:[#allocation13 + $0x330] sm:$0xff] %v591
          %608 = vst [vmem:[#allocation13 + $0x338] sm:$0xff] %v592
          %609 = vst [vmem:[#allocation13 + $0x340] sm:$0xff] %v593
          %610 = vst [vmem:[#allocation13 + $0x348] sm:$0xff] %v594
          %611 = vst [vmem:[#allocation13 + $0x350] sm:$0xff] %v595
          %612 = vst [vmem:[#allocation13 + $0x358] sm:$0xff] %v596
          %613 = vst [vmem:[#allocation13 + $0x360] sm:$0xff] %v597
          %614 = vst [vmem:[#allocation13 + $0x368] sm:$0xff] %v598
          %615 = vst [vmem:[#allocation13 + $0x370] sm:$0xff] %v599
          %616 = vst [vmem:[#allocation13 + $0x378] sm:$0xff] %v600
          %v617 = vld [vmem:[#allocation12 + $0x380] sm:$0xff]
          %v618 = vld [vmem:[#allocation12 + $0x388] sm:$0xff]
          %v619 = vld [vmem:[#allocation12 + $0x390] sm:$0xff]
          %v620 = vld [vmem:[#allocation12 + $0x398] sm:$0xff]
          %v621 = vld [vmem:[#allocation12 + $0x3a0] sm:$0xff]
          %v622 = vld [vmem:[#allocation12 + $0x3a8] sm:$0xff]
          %v623 = vld [vmem:[#allocation12 + $0x3b0] sm:$0xff]
          %v624 = vld [vmem:[#allocation12 + $0x3b8] sm:$0xff]
          %v625 = vld [vmem:[#allocation12 + $0x3c0] sm:$0xff]
          %v626 = vld [vmem:[#allocation12 + $0x3c8] sm:$0xff]
          %v627 = vld [vmem:[#allocation12 + $0x3d0] sm:$0xff]
          %v628 = vld [vmem:[#allocation12 + $0x3d8] sm:$0xff]
          %v629 = vld [vmem:[#allocation12 + $0x3e0] sm:$0xff]
          %v630 = vld [vmem:[#allocation12 + $0x3e8] sm:$0xff]
          %v631 = vld [vmem:[#allocation12 + $0x3f0] sm:$0xff]
          %v632 = vld [vmem:[#allocation12 + $0x3f8] sm:$0xff]
          %633 = vst [vmem:[#allocation13 + $0x380] sm:$0xff] %v617
          %634 = vst [vmem:[#allocation13 + $0x388] sm:$0xff] %v618
          %635 = vst [vmem:[#allocation13 + $0x390] sm:$0xff] %v619
          %636 = vst [vmem:[#allocation13 + $0x398] sm:$0xff] %v620
          %637 = vst [vmem:[#allocation13 + $0x3a0] sm:$0xff] %v621
          %638 = vst [vmem:[#allocation13 + $0x3a8] sm:$0xff] %v622
          %639 = vst [vmem:[#allocation13 + $0x3b0] sm:$0xff] %v623
          %640 = vst [vmem:[#allocation13 + $0x3b8] sm:$0xff] %v624
          %641 = vst [vmem:[#allocation13 + $0x3c0] sm:$0xff] %v625
          %642 = vst [vmem:[#allocation13 + $0x3c8] sm:$0xff] %v626
          %643 = vst [vmem:[#allocation13 + $0x3d0] sm:$0xff] %v627
          %644 = vst [vmem:[#allocation13 + $0x3d8] sm:$0xff] %v628
          %645 = vst [vmem:[#allocation13 + $0x3e0] sm:$0xff] %v629
          %646 = vst [vmem:[#allocation13 + $0x3e8] sm:$0xff] %v630
          %647 = vst [vmem:[#allocation13 + $0x3f0] sm:$0xff] %v631
          %648 = vst [vmem:[#allocation13 + $0x3f8] sm:$0xff] %v632
        $region72: #{_forest_forward_impl.1} parent=55 // pred_fallthru
          _
        %s649 = smul.u32 %s35, 128
        %s650 = sld [smem:[#allocation5 + %s649]]
        %s651 = scalar_lea.vmem [#allocation13], %s650
        %v652 = vld [vmem:[%s651] sm:$0x1]
        %653 = vst [vmem:[#allocation2] sm:$0x1] %v652
        %s654 = sadd.s32 %s649, 1
        %s655 = sld [smem:[#allocation5 + %s654]]
        %s656 = scalar_lea.vmem [#allocation13], %s655
        %v657 = vld [vmem:[%s656] sm:$0x1]
        %658 = vst [vmem:[#allocation2 + $0x8] sm:$0x1] %v657
        %s659 = sadd.s32 %s649, 2
        %s660 = sld [smem:[#allocation5 + %s659]]
        %s661 = scalar_lea.vmem [#allocation13], %s660
        %v662 = vld [vmem:[%s661] sm:$0x1]
        %663 = vst [vmem:[#allocation2 + $0x10] sm:$0x1] %v662
        %s664 = sadd.s32 %s649, 3
        %s665 = sld [smem:[#allocation5 + %s664]]
        %s666 = scalar_lea.vmem [#allocation13], %s665
        %v667 = vld [vmem:[%s666] sm:$0x1]
        %668 = vst [vmem:[#allocation2 + $0x18] sm:$0x1] %v667
        %s669 = sadd.s32 %s649, 4
        %s670 = sld [smem:[#allocation5 + %s669]]
        %s671 = scalar_lea.vmem [#allocation13], %s670
        %v672 = vld [vmem:[%s671] sm:$0x1]
        %673 = vst [vmem:[#allocation2 + $0x20] sm:$0x1] %v672
        %s674 = sadd.s32 %s649, 5
        %s675 = sld [smem:[#allocation5 + %s674]]
        %s676 = scalar_lea.vmem [#allocation13], %s675
        %v677 = vld [vmem:[%s676] sm:$0x1]
        %678 = vst [vmem:[#allocation2 + $0x28] sm:$0x1] %v677
        %s679 = sadd.s32 %s649, 6
        %s680 = sld [smem:[#allocation5 + %s679]]
        %s681 = scalar_lea.vmem [#allocation13], %s680
        %v682 = vld [vmem:[%s681] sm:$0x1]
        %683 = vst [vmem:[#allocation2 + $0x30] sm:$0x1] %v682
        %s684 = sadd.s32 %s649, 7
        %s685 = sld [smem:[#allocation5 + %s684]]
        %s686 = scalar_lea.vmem [#allocation13], %s685
        %v687 = vld [vmem:[%s686] sm:$0x1]
        %688 = vst [vmem:[#allocation2 + $0x38] sm:$0x1] %v687
        %s689 = sadd.s32 %s649, 8
        %s690 = sld [smem:[#allocation5 + %s689]]
        %s691 = scalar_lea.vmem [#allocation13], %s690
        %v692 = vld [vmem:[%s691] sm:$0x1]
        %693 = vst [vmem:[#allocation2 + $0x1] sm:$0x1] %v692
        %s694 = sadd.s32 %s649, 9
        %s695 = sld [smem:[#allocation5 + %s694]]
        %s696 = scalar_lea.vmem [#allocation13], %s695
        %v697 = vld [vmem:[%s696] sm:$0x1]
        %698 = vst [vmem:[#allocation2 + $0x9] sm:$0x1] %v697
        %s699 = sadd.s32 %s649, 10
        %s700 = sld [smem:[#allocation5 + %s699]]
        %s701 = scalar_lea.vmem [#allocation13], %s700
        %v702 = vld [vmem:[%s701] sm:$0x1]
        %703 = vst [vmem:[#allocation2 + $0x11] sm:$0x1] %v702
        %s704 = sadd.s32 %s649, 11
        %s705 = sld [smem:[#allocation5 + %s704]]
        %s706 = scalar_lea.vmem [#allocation13], %s705
        %v707 = vld [vmem:[%s706] sm:$0x1]
        %708 = vst [vmem:[#allocation2 + $0x19] sm:$0x1] %v707
        %s709 = sadd.s32 %s649, 12
        %s710 = sld [smem:[#allocation5 + %s709]]
        %s711 = scalar_lea.vmem [#allocation13], %s710
        %v712 = vld [vmem:[%s711] sm:$0x1]
        %713 = vst [vmem:[#allocation2 + $0x21] sm:$0x1] %v712
        %s714 = sadd.s32 %s649, 13
        %s715 = sld [smem:[#allocation5 + %s714]]
        %s716 = scalar_lea.vmem [#allocation13], %s715
        %v717 = vld [vmem:[%s716] sm:$0x1]
        %718 = vst [vmem:[#allocation2 + $0x29] sm:$0x1] %v717
        %s719 = sadd.s32 %s649, 14
        %s720 = sld [smem:[#allocation5 + %s719]]
        %s721 = scalar_lea.vmem [#allocation13], %s720
        %v722 = vld [vmem:[%s721] sm:$0x1]
        %723 = vst [vmem:[#allocation2 + $0x31] sm:$0x1] %v722
        %s724 = sadd.s32 %s649, 15
        %s725 = sld [smem:[#allocation5 + %s724]]
        %s726 = scalar_lea.vmem [#allocation13], %s725
        %v727 = vld [vmem:[%s726] sm:$0x1]
        %728 = vst [vmem:[#allocation2 + $0x39] sm:$0x1] %v727
        %s729 = sadd.s32 %s649, 16
        %s730 = sld [smem:[#allocation5 + %s729]]
        %s731 = scalar_lea.vmem [#allocation13], %s730
        %v732 = vld [vmem:[%s731] sm:$0x1]
        %733 = vst [vmem:[#allocation2 + $0x2] sm:$0x1] %v732
        %s734 = sadd.s32 %s649, 17
        %s735 = sld [smem:[#allocation5 + %s734]]
        %s736 = scalar_lea.vmem [#allocation13], %s735
        %v737 = vld [vmem:[%s736] sm:$0x1]
        %738 = vst [vmem:[#allocation2 + $0xa] sm:$0x1] %v737
        %s739 = sadd.s32 %s649, 18
        %s740 = sld [smem:[#allocation5 + %s739]]
        %s741 = scalar_lea.vmem [#allocation13], %s740
        %v742 = vld [vmem:[%s741] sm:$0x1]
        %743 = vst [vmem:[#allocation2 + $0x12] sm:$0x1] %v742
        %s744 = sadd.s32 %s649, 19
        %s745 = sld [smem:[#allocation5 + %s744]]
        %s746 = scalar_lea.vmem [#allocation13], %s745
        %v747 = vld [vmem:[%s746] sm:$0x1]
        %748 = vst [vmem:[#allocation2 + $0x1a] sm:$0x1] %v747
        %s749 = sadd.s32 %s649, 20
        %s750 = sld [smem:[#allocation5 + %s749]]
        %s751 = scalar_lea.vmem [#allocation13], %s750
        %v752 = vld [vmem:[%s751] sm:$0x1]
        %753 = vst [vmem:[#allocation2 + $0x22] sm:$0x1] %v752
        %s754 = sadd.s32 %s649, 21
        %s755 = sld [smem:[#allocation5 + %s754]]
        %s756 = scalar_lea.vmem [#allocation13], %s755
        %v757 = vld [vmem:[%s756] sm:$0x1]
        %758 = vst [vmem:[#allocation2 + $0x2a] sm:$0x1] %v757
        %s759 = sadd.s32 %s649, 22
        %s760 = sld [smem:[#allocation5 + %s759]]
        %s761 = scalar_lea.vmem [#allocation13], %s760
        %v762 = vld [vmem:[%s761] sm:$0x1]
        %763 = vst [vmem:[#allocation2 + $0x32] sm:$0x1] %v762
        %s764 = sadd.s32 %s649, 23
        %s765 = sld [smem:[#allocation5 + %s764]]
        %s766 = scalar_lea.vmem [#allocation13], %s765
        %v767 = vld [vmem:[%s766] sm:$0x1]
        %768 = vst [vmem:[#allocation2 + $0x3a] sm:$0x1] %v767
        %s769 = sadd.s32 %s649, 24
        %s770 = sld [smem:[#allocation5 + %s769]]
        %s771 = scalar_lea.vmem [#allocation13], %s770
        %v772 = vld [vmem:[%s771] sm:$0x1]
        %773 = vst [vmem:[#allocation2 + $0x3] sm:$0x1] %v772
        %s774 = sadd.s32 %s649, 25
        %s775 = sld [smem:[#allocation5 + %s774]]
        %s776 = scalar_lea.vmem [#allocation13], %s775
        %v777 = vld [vmem:[%s776] sm:$0x1]
        %778 = vst [vmem:[#allocation2 + $0xb] sm:$0x1] %v777
        %s779 = sadd.s32 %s649, 26
        %s780 = sld [smem:[#allocation5 + %s779]]
        %s781 = scalar_lea.vmem [#allocation13], %s780
        %v782 = vld [vmem:[%s781] sm:$0x1]
        %783 = vst [vmem:[#allocation2 + $0x13] sm:$0x1] %v782
        %s784 = sadd.s32 %s649, 27
        %s785 = sld [smem:[#allocation5 + %s784]]
        %s786 = scalar_lea.vmem [#allocation13], %s785
        %v787 = vld [vmem:[%s786] sm:$0x1]
        %788 = vst [vmem:[#allocation2 + $0x1b] sm:$0x1] %v787
        %s789 = sadd.s32 %s649, 28
        %s790 = sld [smem:[#allocation5 + %s789]]
        %s791 = scalar_lea.vmem [#allocation13], %s790
        %v792 = vld [vmem:[%s791] sm:$0x1]
        %793 = vst [vmem:[#allocation2 + $0x23] sm:$0x1] %v792
        %s794 = sadd.s32 %s649, 29
        %s795 = sld [smem:[#allocation5 + %s794]]
        %s796 = scalar_lea.vmem [#allocation13], %s795
        %v797 = vld [vmem:[%s796] sm:$0x1]
        %798 = vst [vmem:[#allocation2 + $0x2b] sm:$0x1] %v797
        %s799 = sadd.s32 %s649, 30
        %s800 = sld [smem:[#allocation5 + %s799]]
        %s801 = scalar_lea.vmem [#allocation13], %s800
        %v802 = vld [vmem:[%s801] sm:$0x1]
        %803 = vst [vmem:[#allocation2 + $0x33] sm:$0x1] %v802
        %s804 = sadd.s32 %s649, 31
        %s805 = sld [smem:[#allocation5 + %s804]]
        %s806 = scalar_lea.vmem [#allocation13], %s805
        %v807 = vld [vmem:[%s806] sm:$0x1]
        %808 = vst [vmem:[#allocation2 + $0x3b] sm:$0x1] %v807
        %s809 = sadd.s32 %s649, 32
        %s810 = sld [smem:[#allocation5 + %s809]]
        %s811 = scalar_lea.vmem [#allocation13], %s810
        %v812 = vld [vmem:[%s811] sm:$0x1]
        %813 = vst [vmem:[#allocation2 + $0x4] sm:$0x1] %v812
        %s814 = sadd.s32 %s649, 33
        %s815 = sld [smem:[#allocation5 + %s814]]
        %s816 = scalar_lea.vmem [#allocation13], %s815
        %v817 = vld [vmem:[%s816] sm:$0x1]
        %818 = vst [vmem:[#allocation2 + $0xc] sm:$0x1] %v817
        %s819 = sadd.s32 %s649, 34
        %s820 = sld [smem:[#allocation5 + %s819]]
        %s821 = scalar_lea.vmem [#allocation13], %s820
        %v822 = vld [vmem:[%s821] sm:$0x1]
        %823 = vst [vmem:[#allocation2 + $0x14] sm:$0x1] %v822
        %s824 = sadd.s32 %s649, 35
        %s825 = sld [smem:[#allocation5 + %s824]]
        %s826 = scalar_lea.vmem [#allocation13], %s825
        %v827 = vld [vmem:[%s826] sm:$0x1]
        %828 = vst [vmem:[#allocation2 + $0x1c] sm:$0x1] %v827
        %s829 = sadd.s32 %s649, 36
        %s830 = sld [smem:[#allocation5 + %s829]]
        %s831 = scalar_lea.vmem [#allocation13], %s830
        %v832 = vld [vmem:[%s831] sm:$0x1]
        %833 = vst [vmem:[#allocation2 + $0x24] sm:$0x1] %v832
        %s834 = sadd.s32 %s649, 37
        %s835 = sld [smem:[#allocation5 + %s834]]
        %s836 = scalar_lea.vmem [#allocation13], %s835
        %v837 = vld [vmem:[%s836] sm:$0x1]
        %838 = vst [vmem:[#allocation2 + $0x2c] sm:$0x1] %v837
        %s839 = sadd.s32 %s649, 38
        %s840 = sld [smem:[#allocation5 + %s839]]
        %s841 = scalar_lea.vmem [#allocation13], %s840
        %v842 = vld [vmem:[%s841] sm:$0x1]
        %843 = vst [vmem:[#allocation2 + $0x34] sm:$0x1] %v842
        %s844 = sadd.s32 %s649, 39
        %s845 = sld [smem:[#allocation5 + %s844]]
        %s846 = scalar_lea.vmem [#allocation13], %s845
        %v847 = vld [vmem:[%s846] sm:$0x1]
        %848 = vst [vmem:[#allocation2 + $0x3c] sm:$0x1] %v847
        %s849 = sadd.s32 %s649, 40
        %s850 = sld [smem:[#allocation5 + %s849]]
        %s851 = scalar_lea.vmem [#allocation13], %s850
        %v852 = vld [vmem:[%s851] sm:$0x1]
        %853 = vst [vmem:[#allocation2 + $0x5] sm:$0x1] %v852
        %s854 = sadd.s32 %s649, 41
        %s855 = sld [smem:[#allocation5 + %s854]]
        %s856 = scalar_lea.vmem [#allocation13], %s855
        %v857 = vld [vmem:[%s856] sm:$0x1]
        %858 = vst [vmem:[#allocation2 + $0xd] sm:$0x1] %v857
        %s859 = sadd.s32 %s649, 42
        %s860 = sld [smem:[#allocation5 + %s859]]
        %s861 = scalar_lea.vmem [#allocation13], %s860
        %v862 = vld [vmem:[%s861] sm:$0x1]
        %863 = vst [vmem:[#allocation2 + $0x15] sm:$0x1] %v862
        %s864 = sadd.s32 %s649, 43
        %s865 = sld [smem:[#allocation5 + %s864]]
        %s866 = scalar_lea.vmem [#allocation13], %s865
        %v867 = vld [vmem:[%s866] sm:$0x1]
        %868 = vst [vmem:[#allocation2 + $0x1d] sm:$0x1] %v867
        %s869 = sadd.s32 %s649, 44
        %s870 = sld [smem:[#allocation5 + %s869]]
        %s871 = scalar_lea.vmem [#allocation13], %s870
        %v872 = vld [vmem:[%s871] sm:$0x1]
        %873 = vst [vmem:[#allocation2 + $0x25] sm:$0x1] %v872
        %s874 = sadd.s32 %s649, 45
        %s875 = sld [smem:[#allocation5 + %s874]]
        %s876 = scalar_lea.vmem [#allocation13], %s875
        %v877 = vld [vmem:[%s876] sm:$0x1]
        %878 = vst [vmem:[#allocation2 + $0x2d] sm:$0x1] %v877
        %s879 = sadd.s32 %s649, 46
        %s880 = sld [smem:[#allocation5 + %s879]]
        %s881 = scalar_lea.vmem [#allocation13], %s880
        %v882 = vld [vmem:[%s881] sm:$0x1]
        %883 = vst [vmem:[#allocation2 + $0x35] sm:$0x1] %v882
        %s884 = sadd.s32 %s649, 47
        %s885 = sld [smem:[#allocation5 + %s884]]
        %s886 = scalar_lea.vmem [#allocation13], %s885
        %v887 = vld [vmem:[%s886] sm:$0x1]
        %888 = vst [vmem:[#allocation2 + $0x3d] sm:$0x1] %v887
        %s889 = sadd.s32 %s649, 48
        %s890 = sld [smem:[#allocation5 + %s889]]
        %s891 = scalar_lea.vmem [#allocation13], %s890
        %v892 = vld [vmem:[%s891] sm:$0x1]
        %893 = vst [vmem:[#allocation2 + $0x6] sm:$0x1] %v892
        %s894 = sadd.s32 %s649, 49
        %s895 = sld [smem:[#allocation5 + %s894]]
        %s896 = scalar_lea.vmem [#allocation13], %s895
        %v897 = vld [vmem:[%s896] sm:$0x1]
        %898 = vst [vmem:[#allocation2 + $0xe] sm:$0x1] %v897
        %s899 = sadd.s32 %s649, 50
        %s900 = sld [smem:[#allocation5 + %s899]]
        %s901 = scalar_lea.vmem [#allocation13], %s900
        %v902 = vld [vmem:[%s901] sm:$0x1]
        %903 = vst [vmem:[#allocation2 + $0x16] sm:$0x1] %v902
        %s904 = sadd.s32 %s649, 51
        %s905 = sld [smem:[#allocation5 + %s904]]
        %s906 = scalar_lea.vmem [#allocation13], %s905
        %v907 = vld [vmem:[%s906] sm:$0x1]
        %908 = vst [vmem:[#allocation2 + $0x1e] sm:$0x1] %v907
        %s909 = sadd.s32 %s649, 52
        %s910 = sld [smem:[#allocation5 + %s909]]
        %s911 = scalar_lea.vmem [#allocation13], %s910
        %v912 = vld [vmem:[%s911] sm:$0x1]
        %913 = vst [vmem:[#allocation2 + $0x26] sm:$0x1] %v912
        %s914 = sadd.s32 %s649, 53
        %s915 = sld [smem:[#allocation5 + %s914]]
        %s916 = scalar_lea.vmem [#allocation13], %s915
        %v917 = vld [vmem:[%s916] sm:$0x1]
        %918 = vst [vmem:[#allocation2 + $0x2e] sm:$0x1] %v917
        %s919 = sadd.s32 %s649, 54
        %s920 = sld [smem:[#allocation5 + %s919]]
        %s921 = scalar_lea.vmem [#allocation13], %s920
        %v922 = vld [vmem:[%s921] sm:$0x1]
        %923 = vst [vmem:[#allocation2 + $0x36] sm:$0x1] %v922
        %s924 = sadd.s32 %s649, 55
        %s925 = sld [smem:[#allocation5 + %s924]]
        %s926 = scalar_lea.vmem [#allocation13], %s925
        %v927 = vld [vmem:[%s926] sm:$0x1]
        %928 = vst [vmem:[#allocation2 + $0x3e] sm:$0x1] %v927
        %s929 = sadd.s32 %s649, 56
        %s930 = sld [smem:[#allocation5 + %s929]]
        %s931 = scalar_lea.vmem [#allocation13], %s930
        %v932 = vld [vmem:[%s931] sm:$0x1]
        %933 = vst [vmem:[#allocation2 + $0x7] sm:$0x1] %v932
        %s934 = sadd.s32 %s649, 57
        %s935 = sld [smem:[#allocation5 + %s934]]
        %s936 = scalar_lea.vmem [#allocation13], %s935
        %v937 = vld [vmem:[%s936] sm:$0x1]
        %938 = vst [vmem:[#allocation2 + $0xf] sm:$0x1] %v937
        %s939 = sadd.s32 %s649, 58
        %s940 = sld [smem:[#allocation5 + %s939]]
        %s941 = scalar_lea.vmem [#allocation13], %s940
        %v942 = vld [vmem:[%s941] sm:$0x1]
        %943 = vst [vmem:[#allocation2 + $0x17] sm:$0x1] %v942
        %s944 = sadd.s32 %s649, 59
        %s945 = sld [smem:[#allocation5 + %s944]]
        %s946 = scalar_lea.vmem [#allocation13], %s945
        %v947 = vld [vmem:[%s946] sm:$0x1]
        %948 = vst [vmem:[#allocation2 + $0x1f] sm:$0x1] %v947
        %s949 = sadd.s32 %s649, 60
        %s950 = sld [smem:[#allocation5 + %s949]]
        %s951 = scalar_lea.vmem [#allocation13], %s950
        %v952 = vld [vmem:[%s951] sm:$0x1]
        %953 = vst [vmem:[#allocation2 + $0x27] sm:$0x1] %v952
        %s954 = sadd.s32 %s649, 61
        %s955 = sld [smem:[#allocation5 + %s954]]
        %s956 = scalar_lea.vmem [#allocation13], %s955
        %v957 = vld [vmem:[%s956] sm:$0x1]
        %958 = vst [vmem:[#allocation2 + $0x2f] sm:$0x1] %v957
        %s959 = sadd.s32 %s649, 62
        %s960 = sld [smem:[#allocation5 + %s959]]
        %s961 = scalar_lea.vmem [#allocation13], %s960
        %v962 = vld [vmem:[%s961] sm:$0x1]
        %963 = vst [vmem:[#allocation2 + $0x37] sm:$0x1] %v962
        %s964 = sadd.s32 %s649, 63
        %s965 = sld [smem:[#allocation5 + %s964]]
        %s966 = scalar_lea.vmem [#allocation13], %s965
        %v967 = vld [vmem:[%s966] sm:$0x1]
        %968 = vst [vmem:[#allocation2 + $0x3f] sm:$0x1] %v967
        %v969 = vld [vmem:[%s388] sm:$0xff]
        %970 = vst [vmem:[#allocation3] sm:$0xff] %v969
        %v971 = vld [vmem:[%s5] sm:$0x7]
        %v972 = vld [vmem:[%s7] sm:$0x7]
        %v973 = vld [vmem:[#allocation2] sm:$0xff]
        %v974 = vld [vmem:[#allocation2 + $0x8] sm:$0xff]
        %v975 = vld [vmem:[#allocation2 + $0x10] sm:$0xff]
        %v976 = vld [vmem:[#allocation2 + $0x18] sm:$0xff]
        %v977 = vld [vmem:[#allocation2 + $0x20] sm:$0xff]
        %v978 = vld [vmem:[#allocation2 + $0x28] sm:$0xff]
        %v979 = vld [vmem:[#allocation2 + $0x30] sm:$0xff]
        %v980 = vld [vmem:[#allocation2 + $0x38] sm:$0xff]
        %v981 = vld [vmem:[%s4] sm:$0xff]
        %v982 = vld [vmem:[%s4 + $0x8] sm:$0xff]
        %v983 = vld [vmem:[%s4 + $0x10] sm:$0xff]
        %v984 = vld [vmem:[%s4 + $0x18] sm:$0xff]
        %v985 = vld [vmem:[%s4 + $0x20] sm:$0xff]
        %v986 = vld [vmem:[%s4 + $0x28] sm:$0xff]
        %v987 = vld [vmem:[%s4 + $0x30] sm:$0xff]
        %v988 = vld [vmem:[%s4 + $0x38] sm:$0xff]
        %v989 = vld [vmem:[%s4 + $0x40] sm:$0xff]
        %v990 = vld [vmem:[%s4 + $0x48] sm:$0xff]
        %v991 = vld [vmem:[%s4 + $0x50] sm:$0xff]
        %v992 = vld [vmem:[%s4 + $0x58] sm:$0xff]
        %v993 = vld [vmem:[%s4 + $0x60] sm:$0xff]
        %v994 = vld [vmem:[%s4 + $0x68] sm:$0xff]
        %v995 = vld [vmem:[%s4 + $0x70] sm:$0xff]
        %v996 = vld [vmem:[%s4 + $0x78] sm:$0xff]
        %v997 = vld [vmem:[%s4 + $0x80] sm:$0xff]
        %v998 = vld [vmem:[%s4 + $0x88] sm:$0xff]
        %v999 = vld [vmem:[%s4 + $0x90] sm:$0xff]
        %v1000 = vld [vmem:[%s4 + $0x98] sm:$0xff]
        %v1001 = vld [vmem:[%s4 + $0xa0] sm:$0xff]
        %v1002 = vld [vmem:[%s4 + $0xa8] sm:$0xff]
        %v1003 = vld [vmem:[%s4 + $0xb0] sm:$0xff]
        %v1004 = vld [vmem:[%s4 + $0xb8] sm:$0xff]
        %v1005 = vld [vmem:[%s4 + $0xc0] sm:$0xff]
        %v1006 = vld [vmem:[%s4 + $0xc8] sm:$0xff]
        %v1007 = vld [vmem:[%s4 + $0xd0] sm:$0xff]
        %v1008 = vld [vmem:[%s4 + $0xd8] sm:$0xff]
        %v1009 = vld [vmem:[%s4 + $0xe0] sm:$0xff]
        %v1010 = vld [vmem:[%s4 + $0xe8] sm:$0xff]
        %v1011 = vld [vmem:[%s4 + $0xf0] sm:$0xff]
        %v1012 = vld [vmem:[%s4 + $0xf8] sm:$0xff]
        %v1013 = vld [vmem:[%s4 + $0x100] sm:$0xff]
        %v1014 = vld [vmem:[%s4 + $0x108] sm:$0xff]
        %v1015 = vld [vmem:[%s4 + $0x110] sm:$0xff]
        %v1016 = vld [vmem:[%s4 + $0x118] sm:$0xff]
        %v1017 = vld [vmem:[%s4 + $0x120] sm:$0xff]
        %v1018 = vld [vmem:[%s4 + $0x128] sm:$0xff]
        %v1019 = vld [vmem:[%s4 + $0x130] sm:$0xff]
        %v1020 = vld [vmem:[%s4 + $0x138] sm:$0xff]
        %v1021 = vld [vmem:[%s4 + $0x140] sm:$0xff]
        %v1022 = vld [vmem:[%s4 + $0x148] sm:$0xff]
        %v1023 = vld [vmem:[%s4 + $0x150] sm:$0xff]
        %v1024 = vld [vmem:[%s4 + $0x158] sm:$0xff]
        %v1025 = vld [vmem:[%s4 + $0x160] sm:$0xff]
        %v1026 = vld [vmem:[%s4 + $0x168] sm:$0xff]
        %v1027 = vld [vmem:[%s4 + $0x170] sm:$0xff]
        %v1028 = vld [vmem:[%s4 + $0x178] sm:$0xff]
        %v1030 = vlaneseq
        %v1031 = vshrl.u32 %v1030, 7
        %v1032 = vsub.s32 0, %v1031
        %v1033 = vrot.slane %v971, %v1032
        %v1034 = vlaneseq
        %v1035 = vshrl.u32 %v1034, 7
        %v1036 = vsub.s32 1, %v1035
        %v1037 = vrot.slane %v971, %v1036
        %v1038 = vlaneseq
        %v1039 = vshrl.u32 %v1038, 7
        %v1040 = vsub.s32 2, %v1039
        %v1041 = vrot.slane %v971, %v1040
        %1045 = vmatprep.subr.mxu0 %v1027
        %1046 = vmatpush1.msra.mxu0 %v1026
        %1047 = vmatprep.subr.mxu0 %v1024
        %1048 = vmatpush1.msra.mxu0 %v1023
        %1049 = vmatprep.subr.mxu0 %v1021
        %1050 = vmatpush1.msra.mxu0 %v1020
        %1051 = vmatprep.subr.mxu0 %v1018
        %1052 = vmatpush1.msra.mxu0 %v1017
        %1053 = vmatprep.subr.mxu0 %v1015
        %1054 = vmatpush1.msra.mxu0 %v1014
        %1055 = vmatprep.subr.mxu0 %v1012
        %1056 = vmatpush1.msra.mxu0 %v1011
        %1057 = vmatprep.subr.mxu0 %v1009
        %1058 = vmatpush1.msra.mxu0 %v1008
        %1059 = vmatprep.subr.mxu0 %v1006
        %1060 = vmatpush1.msra.mxu0 %v1005
        %1061 = vmatprep.subr.mxu0 %v1003
        %1062 = vmatpush1.msra.mxu0 %v1002
        %1063 = vmatprep.subr.mxu0 %v1000
        %1064 = vmatpush1.msra.mxu0 %v999
        %1065 = vmatprep.subr.mxu0 %v997
        %1066 = vmatpush1.msra.mxu0 %v996
        %1067 = vmatprep.subr.mxu0 %v994
        %1068 = vmatpush1.msra.mxu0 %v993
        %1069 = vmatprep.subr.mxu0 %v991
        %1070 = vmatpush1.msra.mxu0 %v990
        %1071 = vmatprep.subr.mxu0 %v988
        %1072 = vmatpush1.msra.mxu0 %v987
        %1073 = vmatprep.subr.mxu0 %v985
        %1074 = vmatpush1.msra.mxu0 %v984
        %1075 = vmatprep.subr.mxu0 %v982
        %1076 = vmatpush1.msra.mxu0 %v981
        %1077 = vmatprep.subr.mxu0 0.0
        %1078 = vmatpush2.msra.mxu0 0.0
        %1079 = vmatprep.subr.mxu0 0.0
        %1080 = vmatpush2.msra.mxu0 0.0
        %1081 = vmatprep.subr.mxu0 0.0
        %1082 = vmatpush2.msra.mxu0 0.0
        %1083 = vmatprep.subr.mxu0 0.0
        %1084 = vmatpush2.msra.mxu0 0.0
        %1085 = vmatprep.subr.mxu0 0.0
        %1086 = vmatpush2.msra.mxu0 0.0
        %1087 = vmatprep.subr.mxu0 0.0
        %1088 = vmatpush2.msra.mxu0 0.0
        %1089 = vmatprep.subr.mxu0 0.0
        %1090 = vmatpush2.msra.mxu0 0.0
        %1091 = vmatprep.subr.mxu0 0.0
        %1092 = vmatpush2.msra.mxu0 0.0
        %1093 = vmatprep.subr.mxu0 0.0
        %1094 = vmatpush2.msra.mxu0 0.0
        %1095 = vmatprep.subr.mxu0 0.0
        %1096 = vmatpush2.msra.mxu0 0.0
        %1097 = vmatprep.subr.mxu0 0.0
        %1098 = vmatpush2.msra.mxu0 0.0
        %1099 = vmatprep.subr.mxu0 0.0
        %1100 = vmatpush2.msra.mxu0 0.0
        %1101 = vmatprep.subr.mxu0 0.0
        %1102 = vmatpush2.msra.mxu0 0.0
        %1103 = vmatprep.subr.mxu0 0.0
        %1104 = vmatpush2.msra.mxu0 0.0
        %1105 = vmatprep.subr.mxu0 0.0
        %1106 = vmatpush2.msra.mxu0 0.0
        %1107 = vmatprep.subr.mxu0 0.0
        %1108 = vmatpush2.msra.mxu0 0.0
        %1109 = vmatprep.mubr.f32.mxu0 0.0
        %1110 = vmatmul.mubr.f32.gmra.mxu0 %v973
        %v1111 = vpop.f32.mrf.mxu0
        %v1112 = vadd.f32 %v1033, %v1111
        %v1113 = vpop.f32.mrf.mxu0
        %v1114 = vadd.f32 %v1037, %v1113
        %1115 = vmatprep.mubr.f32.mxu0 0.0
        %1116 = vmatmul.mubr.f32.gmra.mxu0 %v974
        %v1117 = vpop.f32.mrf.mxu0
        %v1118 = vadd.f32 %v1033, %v1117
        %v1119 = vpop.f32.mrf.mxu0
        %v1120 = vadd.f32 %v1037, %v1119
        %1121 = vmatprep.mubr.f32.mxu0 0.0
        %1122 = vmatmul.mubr.f32.gmra.mxu0 %v975
        %v1123 = vpop.f32.mrf.mxu0
        %v1124 = vadd.f32 %v1033, %v1123
        %v1125 = vpop.f32.mrf.mxu0
        %v1126 = vadd.f32 %v1037, %v1125
        %1127 = vmatprep.mubr.f32.mxu0 0.0
        %1128 = vmatmul.mubr.f32.gmra.mxu0 %v976
        %v1129 = vpop.f32.mrf.mxu0
        %v1130 = vadd.f32 %v1033, %v1129
        %v1131 = vpop.f32.mrf.mxu0
        %v1132 = vadd.f32 %v1037, %v1131
        %1133 = vmatprep.mubr.f32.mxu0 0.0
        %1134 = vmatmul.mubr.f32.gmra.mxu0 %v977
        %v1135 = vpop.f32.mrf.mxu0
        %v1136 = vadd.f32 %v1033, %v1135
        %v1137 = vpop.f32.mrf.mxu0
        %v1138 = vadd.f32 %v1037, %v1137
        %1139 = vmatprep.mubr.f32.mxu0 0.0
        %1140 = vmatmul.mubr.f32.gmra.mxu0 %v978
        %v1141 = vpop.f32.mrf.mxu0
        %v1142 = vadd.f32 %v1033, %v1141
        %v1143 = vpop.f32.mrf.mxu0
        %v1144 = vadd.f32 %v1037, %v1143
        %1145 = vmatprep.mubr.f32.mxu0 0.0
        %1146 = vmatmul.mubr.f32.gmra.mxu0 %v979
        %v1147 = vpop.f32.mrf.mxu0
        %v1148 = vadd.f32 %v1033, %v1147
        %v1149 = vpop.f32.mrf.mxu0
        %v1150 = vadd.f32 %v1037, %v1149
        %1151 = vmatprep.mubr.f32.mxu0 0.0
        %1152 = vmatmul.mubr.f32.gmra.mxu0 %v980
        %v1153 = vpop.f32.mrf.mxu0
        %v1154 = vadd.f32 %v1033, %v1153
        %v1155 = vpop.f32.mrf.mxu0
        %v1156 = vadd.f32 %v1037, %v1155
        %1157 = vdwg.mxu0
        %1158 = vmatprep.subr.mxu0 0.0
        %1159 = vmatpush1.msra.mxu0 %v1028
        %1160 = vmatprep.subr.mxu0 0.0
        %1161 = vmatpush1.msra.mxu0 %v1025
        %1162 = vmatprep.subr.mxu0 0.0
        %1163 = vmatpush1.msra.mxu0 %v1022
        %1164 = vmatprep.subr.mxu0 0.0
        %1165 = vmatpush1.msra.mxu0 %v1019
        %1166 = vmatprep.subr.mxu0 0.0
        %1167 = vmatpush1.msra.mxu0 %v1016
        %1168 = vmatprep.subr.mxu0 0.0
        %1169 = vmatpush1.msra.mxu0 %v1013
        %1170 = vmatprep.subr.mxu0 0.0
        %1171 = vmatpush1.msra.mxu0 %v1010
        %1172 = vmatprep.subr.mxu0 0.0
        %1173 = vmatpush1.msra.mxu0 %v1007
        %1174 = vmatprep.subr.mxu0 0.0
        %1175 = vmatpush1.msra.mxu0 %v1004
        %1176 = vmatprep.subr.mxu0 0.0
        %1177 = vmatpush1.msra.mxu0 %v1001
        %1178 = vmatprep.subr.mxu0 0.0
        %1179 = vmatpush1.msra.mxu0 %v998
        %1180 = vmatprep.subr.mxu0 0.0
        %1181 = vmatpush1.msra.mxu0 %v995
        %1182 = vmatprep.subr.mxu0 0.0
        %1183 = vmatpush1.msra.mxu0 %v992
        %1184 = vmatprep.subr.mxu0 0.0
        %1185 = vmatpush1.msra.mxu0 %v989
        %1186 = vmatprep.subr.mxu0 0.0
        %1187 = vmatpush1.msra.mxu0 %v986
        %1188 = vmatprep.subr.mxu0 0.0
        %1189 = vmatpush1.msra.mxu0 %v983
        %1190 = vmatprep.subr.mxu0 0.0
        %1191 = vmatpush2.msra.mxu0 0.0
        %1192 = vmatprep.subr.mxu0 0.0
        %1193 = vmatpush2.msra.mxu0 0.0
        %1194 = vmatprep.subr.mxu0 0.0
        %1195 = vmatpush2.msra.mxu0 0.0
        %1196 = vmatprep.subr.mxu0 0.0
        %1197 = vmatpush2.msra.mxu0 0.0
        %1198 = vmatprep.subr.mxu0 0.0
        %1199 = vmatpush2.msra.mxu0 0.0
        %1200 = vmatprep.subr.mxu0 0.0
        %1201 = vmatpush2.msra.mxu0 0.0
        %1202 = vmatprep.subr.mxu0 0.0
        %1203 = vmatpush2.msra.mxu0 0.0
        %1204 = vmatprep.subr.mxu0 0.0
        %1205 = vmatpush2.msra.mxu0 0.0
        %1206 = vmatprep.subr.mxu0 0.0
        %1207 = vmatpush2.msra.mxu0 0.0
        %1208 = vmatprep.subr.mxu0 0.0
        %1209 = vmatpush2.msra.mxu0 0.0
        %1210 = vmatprep.subr.mxu0 0.0
        %1211 = vmatpush2.msra.mxu0 0.0
        %1212 = vmatprep.subr.mxu0 0.0
        %1213 = vmatpush2.msra.mxu0 0.0
        %1214 = vmatprep.subr.mxu0 0.0
        %1215 = vmatpush2.msra.mxu0 0.0
        %1216 = vmatprep.subr.mxu0 0.0
        %1217 = vmatpush2.msra.mxu0 0.0
        %1218 = vmatprep.subr.mxu0 0.0
        %1219 = vmatpush2.msra.mxu0 0.0
        %1220 = vmatprep.subr.mxu0 0.0
        %1221 = vmatpush2.msra.mxu0 0.0
        %1222 = vmatprep.mubr.f32.mxu0 0.0
        %1223 = vmatmul.mubr.f32.gmra.mxu0 %v973
        %v1224 = vpop.f32.mrf.mxu0
        %v1225 = vadd.f32 %v1041, %v1224
        %v1226 = vpop.f32.mrf.mxu0
        %1227 = vmatprep.mubr.f32.mxu0 0.0
        %1228 = vmatmul.mubr.f32.gmra.mxu0 %v974
        %v1229 = vpop.f32.mrf.mxu0
        %v1230 = vadd.f32 %v1041, %v1229
        %v1231 = vpop.f32.mrf.mxu0
        %1232 = vmatprep.mubr.f32.mxu0 0.0
        %1233 = vmatmul.mubr.f32.gmra.mxu0 %v975
        %v1234 = vpop.f32.mrf.mxu0
        %v1235 = vadd.f32 %v1041, %v1234
        %v1236 = vpop.f32.mrf.mxu0
        %1237 = vmatprep.mubr.f32.mxu0 0.0
        %1238 = vmatmul.mubr.f32.gmra.mxu0 %v976
        %v1239 = vpop.f32.mrf.mxu0
        %v1240 = vadd.f32 %v1041, %v1239
        %v1241 = vpop.f32.mrf.mxu0
        %1242 = vmatprep.mubr.f32.mxu0 0.0
        %1243 = vmatmul.mubr.f32.gmra.mxu0 %v977
        %v1244 = vpop.f32.mrf.mxu0
        %v1245 = vadd.f32 %v1041, %v1244
        %v1246 = vpop.f32.mrf.mxu0
        %1247 = vmatprep.mubr.f32.mxu0 0.0
        %1248 = vmatmul.mubr.f32.gmra.mxu0 %v978
        %v1249 = vpop.f32.mrf.mxu0
        %v1250 = vadd.f32 %v1041, %v1249
        %v1251 = vpop.f32.mrf.mxu0
        %1252 = vmatprep.mubr.f32.mxu0 0.0
        %1253 = vmatmul.mubr.f32.gmra.mxu0 %v979
        %v1254 = vpop.f32.mrf.mxu0
        %v1255 = vadd.f32 %v1041, %v1254
        %v1256 = vpop.f32.mrf.mxu0
        %1257 = vmatprep.mubr.f32.mxu0 0.0
        %1258 = vmatmul.mubr.f32.gmra.mxu0 %v980
        %v1259 = vpop.f32.mrf.mxu0
        %v1260 = vadd.f32 %v1041, %v1259
        %v1261 = vpop.f32.mrf.mxu0
        %1262 = vdwg.mxu0
        %v1263 = vld [vmem:[%s384] sm:$0xff]
        %v1264 = vld [vmem:[#allocation7] sm:$0xff]
        %v1265 = vld [vmem:[#allocation7 + $0x8] sm:$0xff]
        %v1266 = vld [vmem:[#allocation7 + $0x10] sm:$0xff]
        %v1267 = vld [vmem:[#allocation7 + $0x18] sm:$0xff]
        %v1268 = vld [vmem:[#allocation7 + $0x20] sm:$0xff]
        %v1269 = vld [vmem:[#allocation7 + $0x28] sm:$0xff]
        %v1270 = vld [vmem:[#allocation7 + $0x30] sm:$0xff]
        %v1271 = vld [vmem:[#allocation7 + $0x38] sm:$0xff]
        %v1272 = vld [vmem:[#allocation7 + $0x40] sm:$0xff]
        %v1273 = vld [vmem:[#allocation7 + $0x48] sm:$0xff]
        %v1274 = vld [vmem:[#allocation7 + $0x50] sm:$0xff]
        %v1275 = vld [vmem:[#allocation7 + $0x58] sm:$0xff]
        %v1276 = vld [vmem:[#allocation7 + $0x60] sm:$0xff]
        %v1277 = vld [vmem:[#allocation7 + $0x68] sm:$0xff]
        %v1278 = vld [vmem:[#allocation7 + $0x70] sm:$0xff]
        %v1279 = vld [vmem:[#allocation7 + $0x78] sm:$0xff]
        %v1280 = vld [vmem:[#allocation7 + $0x80] sm:$0xff]
        %v1281 = vld [vmem:[#allocation7 + $0x88] sm:$0xff]
        %v1282 = vld [vmem:[#allocation7 + $0x90] sm:$0xff]
        %v1283 = vld [vmem:[#allocation7 + $0x98] sm:$0xff]
        %v1284 = vld [vmem:[#allocation7 + $0xa0] sm:$0xff]
        %v1285 = vld [vmem:[#allocation7 + $0xa8] sm:$0xff]
        %v1286 = vld [vmem:[#allocation7 + $0xb0] sm:$0xff]
        %v1287 = vld [vmem:[#allocation7 + $0xb8] sm:$0xff]
        %v1288 = vld [vmem:[#allocation7 + $0xc0] sm:$0xff]
        %v1289 = vld [vmem:[#allocation7 + $0xc8] sm:$0xff]
        %v1290 = vld [vmem:[#allocation7 + $0xd0] sm:$0xff]
        %v1291 = vld [vmem:[#allocation7 + $0xd8] sm:$0xff]
        %v1292 = vld [vmem:[#allocation7 + $0xe0] sm:$0xff]
        %v1293 = vld [vmem:[#allocation7 + $0xe8] sm:$0xff]
        %v1294 = vld [vmem:[#allocation7 + $0xf0] sm:$0xff]
        %v1295 = vld [vmem:[#allocation7 + $0xf8] sm:$0xff]
        %v1296 = vld [vmem:[#allocation7 + $0x100] sm:$0xff]
        %v1297 = vld [vmem:[#allocation7 + $0x108] sm:$0xff]
        %v1298 = vld [vmem:[#allocation7 + $0x110] sm:$0xff]
        %v1299 = vld [vmem:[#allocation7 + $0x118] sm:$0xff]
        %v1300 = vld [vmem:[#allocation7 + $0x120] sm:$0xff]
        %v1301 = vld [vmem:[#allocation7 + $0x128] sm:$0xff]
        %v1302 = vld [vmem:[#allocation7 + $0x130] sm:$0xff]
        %v1303 = vld [vmem:[#allocation7 + $0x138] sm:$0xff]
        %v1304 = vld [vmem:[#allocation7 + $0x140] sm:$0xff]
        %v1305 = vld [vmem:[#allocation7 + $0x148] sm:$0xff]
        %v1306 = vld [vmem:[#allocation7 + $0x150] sm:$0xff]
        %v1307 = vld [vmem:[#allocation7 + $0x158] sm:$0xff]
        %v1308 = vld [vmem:[#allocation7 + $0x160] sm:$0xff]
        %v1309 = vld [vmem:[#allocation7 + $0x168] sm:$0xff]
        %v1310 = vld [vmem:[#allocation7 + $0x170] sm:$0xff]
        %v1311 = vld [vmem:[#allocation7 + $0x178] sm:$0xff]
        %v1313 = vlaneseq
        %v1314 = vshrl.u32 %v1313, 7
        %v1315 = vsub.s32 0, %v1314
        %v1316 = vrot.slane %v972, %v1315
        %v1317 = vlaneseq
        %v1318 = vshrl.u32 %v1317, 7
        %v1319 = vsub.s32 1, %v1318
        %v1320 = vrot.slane %v972, %v1319
        %v1321 = vlaneseq
        %v1322 = vshrl.u32 %v1321, 7
        %v1323 = vsub.s32 2, %v1322
        %v1324 = vrot.slane %v972, %v1323
        %1328 = vmatprep.subr.mxu0 %v1310
        %1329 = vmatpush1.msra.mxu0 %v1309
        %1330 = vmatprep.subr.mxu0 %v1307
        %1331 = vmatpush1.msra.mxu0 %v1306
        %1332 = vmatprep.subr.mxu0 %v1304
        %1333 = vmatpush1.msra.mxu0 %v1303
        %1334 = vmatprep.subr.mxu0 %v1301
        %1335 = vmatpush1.msra.mxu0 %v1300
        %1336 = vmatprep.subr.mxu0 %v1298
        %1337 = vmatpush1.msra.mxu0 %v1297
        %1338 = vmatprep.subr.mxu0 %v1295
        %1339 = vmatpush1.msra.mxu0 %v1294
        %1340 = vmatprep.subr.mxu0 %v1292
        %1341 = vmatpush1.msra.mxu0 %v1291
        %1342 = vmatprep.subr.mxu0 %v1289
        %1343 = vmatpush1.msra.mxu0 %v1288
        %1344 = vmatprep.subr.mxu0 %v1286
        %1345 = vmatpush1.msra.mxu0 %v1285
        %1346 = vmatprep.subr.mxu0 %v1283
        %1347 = vmatpush1.msra.mxu0 %v1282
        %1348 = vmatprep.subr.mxu0 %v1280
        %1349 = vmatpush1.msra.mxu0 %v1279
        %1350 = vmatprep.subr.mxu0 %v1277
        %1351 = vmatpush1.msra.mxu0 %v1276
        %1352 = vmatprep.subr.mxu0 %v1274
        %1353 = vmatpush1.msra.mxu0 %v1273
        %1354 = vmatprep.subr.mxu0 %v1271
        %1355 = vmatpush1.msra.mxu0 %v1270
        %1356 = vmatprep.subr.mxu0 %v1268
        %1357 = vmatpush1.msra.mxu0 %v1267
        %1358 = vmatprep.subr.mxu0 %v1265
        %1359 = vmatpush1.msra.mxu0 %v1264
        %1360 = vmatprep.subr.mxu0 0.0
        %1361 = vmatpush2.msra.mxu0 0.0
        %1362 = vmatprep.subr.mxu0 0.0
        %1363 = vmatpush2.msra.mxu0 0.0
        %1364 = vmatprep.subr.mxu0 0.0
        %1365 = vmatpush2.msra.mxu0 0.0
        %1366 = vmatprep.subr.mxu0 0.0
        %1367 = vmatpush2.msra.mxu0 0.0
        %1368 = vmatprep.subr.mxu0 0.0
        %1369 = vmatpush2.msra.mxu0 0.0
        %1370 = vmatprep.subr.mxu0 0.0
        %1371 = vmatpush2.msra.mxu0 0.0
        %1372 = vmatprep.subr.mxu0 0.0
        %1373 = vmatpush2.msra.mxu0 0.0
        %1374 = vmatprep.subr.mxu0 0.0
        %1375 = vmatpush2.msra.mxu0 0.0
        %1376 = vmatprep.subr.mxu0 0.0
        %1377 = vmatpush2.msra.mxu0 0.0
        %1378 = vmatprep.subr.mxu0 0.0
        %1379 = vmatpush2.msra.mxu0 0.0
        %1380 = vmatprep.subr.mxu0 0.0
        %1381 = vmatpush2.msra.mxu0 0.0
        %1382 = vmatprep.subr.mxu0 0.0
        %1383 = vmatpush2.msra.mxu0 0.0
        %1384 = vmatprep.subr.mxu0 0.0
        %1385 = vmatpush2.msra.mxu0 0.0
        %1386 = vmatprep.subr.mxu0 0.0
        %1387 = vmatpush2.msra.mxu0 0.0
        %1388 = vmatprep.subr.mxu0 0.0
        %1389 = vmatpush2.msra.mxu0 0.0
        %1390 = vmatprep.subr.mxu0 0.0
        %1391 = vmatpush2.msra.mxu0 0.0
        %1392 = vmatprep.mubr.f32.mxu0 0.0
        %1393 = vmatmul.mubr.f32.gmra.mxu0 0.0
        %v1394 = vpop.f32.mrf.mxu0
        %v1395 = vadd.f32 %v1316, %v1394
        %v1396 = vpop.f32.mrf.mxu0
        %v1397 = vadd.f32 %v1320, %v1396
        %1398 = vdwg.mxu0
        %1399 = vmatprep.subr.mxu0 0.0
        %1400 = vmatpush1.msra.mxu0 %v1311
        %1401 = vmatprep.subr.mxu0 0.0
        %1402 = vmatpush1.msra.mxu0 %v1308
        %1403 = vmatprep.subr.mxu0 0.0
        %1404 = vmatpush1.msra.mxu0 %v1305
        %1405 = vmatprep.subr.mxu0 0.0
        %1406 = vmatpush1.msra.mxu0 %v1302
        %1407 = vmatprep.subr.mxu0 0.0
        %1408 = vmatpush1.msra.mxu0 %v1299
        %1409 = vmatprep.subr.mxu0 0.0
        %1410 = vmatpush1.msra.mxu0 %v1296
        %1411 = vmatprep.subr.mxu0 0.0
        %1412 = vmatpush1.msra.mxu0 %v1293
        %1413 = vmatprep.subr.mxu0 0.0
        %1414 = vmatpush1.msra.mxu0 %v1290
        %1415 = vmatprep.subr.mxu0 0.0
        %1416 = vmatpush1.msra.mxu0 %v1287
        %1417 = vmatprep.subr.mxu0 0.0
        %1418 = vmatpush1.msra.mxu0 %v1284
        %1419 = vmatprep.subr.mxu0 0.0
        %1420 = vmatpush1.msra.mxu0 %v1281
        %1421 = vmatprep.subr.mxu0 0.0
        %1422 = vmatpush1.msra.mxu0 %v1278
        %1423 = vmatprep.subr.mxu0 0.0
        %1424 = vmatpush1.msra.mxu0 %v1275
        %1425 = vmatprep.subr.mxu0 0.0
        %1426 = vmatpush1.msra.mxu0 %v1272
        %1427 = vmatprep.subr.mxu0 0.0
        %1428 = vmatpush1.msra.mxu0 %v1269
        %1429 = vmatprep.subr.mxu0 0.0
        %1430 = vmatpush1.msra.mxu0 %v1266
        %1431 = vmatprep.subr.mxu0 0.0
        %1432 = vmatpush2.msra.mxu0 0.0
        %1433 = vmatprep.subr.mxu0 0.0
        %1434 = vmatpush2.msra.mxu0 0.0
        %1435 = vmatprep.subr.mxu0 0.0
        %1436 = vmatpush2.msra.mxu0 0.0
        %1437 = vmatprep.subr.mxu0 0.0
        %1438 = vmatpush2.msra.mxu0 0.0
        %1439 = vmatprep.subr.mxu0 0.0
        %1440 = vmatpush2.msra.mxu0 0.0
        %1441 = vmatprep.subr.mxu0 0.0
        %1442 = vmatpush2.msra.mxu0 0.0
        %1443 = vmatprep.subr.mxu0 0.0
        %1444 = vmatpush2.msra.mxu0 0.0
        %1445 = vmatprep.subr.mxu0 0.0
        %1446 = vmatpush2.msra.mxu0 0.0
        %1447 = vmatprep.subr.mxu0 0.0
        %1448 = vmatpush2.msra.mxu0 0.0
        %1449 = vmatprep.subr.mxu0 0.0
        %1450 = vmatpush2.msra.mxu0 0.0
        %1451 = vmatprep.subr.mxu0 0.0
        %1452 = vmatpush2.msra.mxu0 0.0
        %1453 = vmatprep.subr.mxu0 0.0
        %1454 = vmatpush2.msra.mxu0 0.0
        %1455 = vmatprep.subr.mxu0 0.0
        %1456 = vmatpush2.msra.mxu0 0.0
        %1457 = vmatprep.subr.mxu0 0.0
        %1458 = vmatpush2.msra.mxu0 0.0
        %1459 = vmatprep.subr.mxu0 0.0
        %1460 = vmatpush2.msra.mxu0 0.0
        %1461 = vmatprep.subr.mxu0 0.0
        %1462 = vmatpush2.msra.mxu0 0.0
        %1463 = vmatprep.mubr.f32.mxu0 0.0
        %1464 = vmatmul.mubr.f32.gmra.mxu0 0.0
        %v1465 = vpop.f32.mrf.mxu0
        %v1466 = vadd.f32 %v1324, %v1465
        %v1467 = vpop.f32.mrf.mxu0
        %1468 = vdwg.mxu0
        %v1469 = vadd.f32 %v1112, %v1395
        %v1470 = vxor.u32 %v1469, 2147483648
        %v1471 = vmul.f32 %v1470, 1.442695
        %v1472 = vpow.pop %v1471
        %v1473 = vadd.f32 %v1472, 1.0
        %v1474 = vrcp.pop %v1473
        %v1475 = vmul.f32 1.0, %v1474
        %v1476 = vadd.f32 %v1114, %v1397
        %v1477 = vxor.u32 %v1476, 2147483648
        %v1478 = vmul.f32 %v1477, 1.442695
        %v1479 = vpow.pop %v1478
        %v1480 = vadd.f32 %v1479, 1.0
        %v1481 = vrcp.pop %v1480
        %v1482 = vmul.f32 1.0, %v1481
        %v1483 = vmul.f32 %v1475, %v1466
        %v1484 = vadd.f32 %v1225, %v1483
        %v1485 = vtanh.pop %v1484
        %v1486 = vsub.f32 1.0, %v1482
        %v1487 = vmul.f32 %v1486, %v1485
        %v1488 = vmul.f32 %v1482, 0.0
        %v1489 = vadd.f32 %v1487, %v1488
        %vm1490 = vcmp.gt.f32.partialorder %v1263, 0.0
        %v1491 = vsel %vm1490, 1, 0
        %v1492 = vcvt.s32.f32 %v1491
        %1494 = vset.pattern.permute.xlu0 0
        %1495 = vperm.xlu0 %1494, %v1492
        %v1496 = vpop.permute.xlu0 %1495
        %v1498 = vmul.f32 %v1496, %v1489
        %v1499 = vsub.f32 1.0, %v1492
        %1501 = vset.pattern.permute.xlu0 0
        %1502 = vperm.xlu0 %1501, %v1499
        %v1503 = vpop.permute.xlu0 %1502
        %v1505 = vmul.f32 %v1503, 0.0
        %v1506 = vadd.f32 %v1498, %v1505
        %1507 = vmatprep.subr.mxu0 %v1310
        %1508 = vmatpush1.msra.mxu0 %v1309
        %1509 = vmatprep.subr.mxu0 %v1307
        %1510 = vmatpush1.msra.mxu0 %v1306
        %1511 = vmatprep.subr.mxu0 %v1304
        %1512 = vmatpush1.msra.mxu0 %v1303
        %1513 = vmatprep.subr.mxu0 %v1301
        %1514 = vmatpush1.msra.mxu0 %v1300
        %1515 = vmatprep.subr.mxu0 %v1298
        %1516 = vmatpush1.msra.mxu0 %v1297
        %1517 = vmatprep.subr.mxu0 %v1295
        %1518 = vmatpush1.msra.mxu0 %v1294
        %1519 = vmatprep.subr.mxu0 %v1292
        %1520 = vmatpush1.msra.mxu0 %v1291
        %1521 = vmatprep.subr.mxu0 %v1289
        %1522 = vmatpush1.msra.mxu0 %v1288
        %1523 = vmatprep.subr.mxu0 %v1286
        %1524 = vmatpush1.msra.mxu0 %v1285
        %1525 = vmatprep.subr.mxu0 %v1283
        %1526 = vmatpush1.msra.mxu0 %v1282
        %1527 = vmatprep.subr.mxu0 %v1280
        %1528 = vmatpush1.msra.mxu0 %v1279
        %1529 = vmatprep.subr.mxu0 %v1277
        %1530 = vmatpush1.msra.mxu0 %v1276
        %1531 = vmatprep.subr.mxu0 %v1274
        %1532 = vmatpush1.msra.mxu0 %v1273
        %1533 = vmatprep.subr.mxu0 %v1271
        %1534 = vmatpush1.msra.mxu0 %v1270
        %1535 = vmatprep.subr.mxu0 %v1268
        %1536 = vmatpush1.msra.mxu0 %v1267
        %1537 = vmatprep.subr.mxu0 %v1265
        %1538 = vmatpush1.msra.mxu0 %v1264
        %1539 = vmatprep.subr.mxu0 0.0
        %1540 = vmatpush2.msra.mxu0 0.0
        %1541 = vmatprep.subr.mxu0 0.0
        %1542 = vmatpush2.msra.mxu0 0.0
        %1543 = vmatprep.subr.mxu0 0.0
        %1544 = vmatpush2.msra.mxu0 0.0
        %1545 = vmatprep.subr.mxu0 0.0
        %1546 = vmatpush2.msra.mxu0 0.0
        %1547 = vmatprep.subr.mxu0 0.0
        %1548 = vmatpush2.msra.mxu0 0.0
        %1549 = vmatprep.subr.mxu0 0.0
        %1550 = vmatpush2.msra.mxu0 0.0
        %1551 = vmatprep.subr.mxu0 0.0
        %1552 = vmatpush2.msra.mxu0 0.0
        %1553 = vmatprep.subr.mxu0 0.0
        %1554 = vmatpush2.msra.mxu0 0.0
        %1555 = vmatprep.subr.mxu0 0.0
        %1556 = vmatpush2.msra.mxu0 0.0
        %1557 = vmatprep.subr.mxu0 0.0
        %1558 = vmatpush2.msra.mxu0 0.0
        %1559 = vmatprep.subr.mxu0 0.0
        %1560 = vmatpush2.msra.mxu0 0.0
        %1561 = vmatprep.subr.mxu0 0.0
        %1562 = vmatpush2.msra.mxu0 0.0
        %1563 = vmatprep.subr.mxu0 0.0
        %1564 = vmatpush2.msra.mxu0 0.0
        %1565 = vmatprep.subr.mxu0 0.0
        %1566 = vmatpush2.msra.mxu0 0.0
        %1567 = vmatprep.subr.mxu0 0.0
        %1568 = vmatpush2.msra.mxu0 0.0
        %1569 = vmatprep.subr.mxu0 0.0
        %1570 = vmatpush2.msra.mxu0 0.0
        %1571 = vmatprep.mubr.f32.mxu0 0.0
        %1572 = vmatmul.mubr.f32.gmra.mxu0 %v1506
        %v1573 = vpop.f32.mrf.mxu0
        %v1574 = vadd.f32 %v1316, %v1573
        %v1575 = vpop.f32.mrf.mxu0
        %v1576 = vadd.f32 %v1320, %v1575
        %1577 = vdwg.mxu0
        %1578 = vmatprep.subr.mxu0 0.0
        %1579 = vmatpush1.msra.mxu0 %v1311
        %1580 = vmatprep.subr.mxu0 0.0
        %1581 = vmatpush1.msra.mxu0 %v1308
        %1582 = vmatprep.subr.mxu0 0.0
        %1583 = vmatpush1.msra.mxu0 %v1305
        %1584 = vmatprep.subr.mxu0 0.0
        %1585 = vmatpush1.msra.mxu0 %v1302
        %1586 = vmatprep.subr.mxu0 0.0
        %1587 = vmatpush1.msra.mxu0 %v1299
        %1588 = vmatprep.subr.mxu0 0.0
        %1589 = vmatpush1.msra.mxu0 %v1296
        %1590 = vmatprep.subr.mxu0 0.0
        %1591 = vmatpush1.msra.mxu0 %v1293
        %1592 = vmatprep.subr.mxu0 0.0
        %1593 = vmatpush1.msra.mxu0 %v1290
        %1594 = vmatprep.subr.mxu0 0.0
        %1595 = vmatpush1.msra.mxu0 %v1287
        %1596 = vmatprep.subr.mxu0 0.0
        %1597 = vmatpush1.msra.mxu0 %v1284
        %1598 = vmatprep.subr.mxu0 0.0
        %1599 = vmatpush1.msra.mxu0 %v1281
        %1600 = vmatprep.subr.mxu0 0.0
        %1601 = vmatpush1.msra.mxu0 %v1278
        %1602 = vmatprep.subr.mxu0 0.0
        %1603 = vmatpush1.msra.mxu0 %v1275
        %1604 = vmatprep.subr.mxu0 0.0
        %1605 = vmatpush1.msra.mxu0 %v1272
        %1606 = vmatprep.subr.mxu0 0.0
        %1607 = vmatpush1.msra.mxu0 %v1269
        %1608 = vmatprep.subr.mxu0 0.0
        %1609 = vmatpush1.msra.mxu0 %v1266
        %1610 = vmatprep.subr.mxu0 0.0
        %1611 = vmatpush2.msra.mxu0 0.0
        %1612 = vmatprep.subr.mxu0 0.0
        %1613 = vmatpush2.msra.mxu0 0.0
        %1614 = vmatprep.subr.mxu0 0.0
        %1615 = vmatpush2.msra.mxu0 0.0
        %1616 = vmatprep.subr.mxu0 0.0
        %1617 = vmatpush2.msra.mxu0 0.0
        %1618 = vmatprep.subr.mxu0 0.0
        %1619 = vmatpush2.msra.mxu0 0.0
        %1620 = vmatprep.subr.mxu0 0.0
        %1621 = vmatpush2.msra.mxu0 0.0
        %1622 = vmatprep.subr.mxu0 0.0
        %1623 = vmatpush2.msra.mxu0 0.0
        %1624 = vmatprep.subr.mxu0 0.0
        %1625 = vmatpush2.msra.mxu0 0.0
        %1626 = vmatprep.subr.mxu0 0.0
        %1627 = vmatpush2.msra.mxu0 0.0
        %1628 = vmatprep.subr.mxu0 0.0
        %1629 = vmatpush2.msra.mxu0 0.0
        %1630 = vmatprep.subr.mxu0 0.0
        %1631 = vmatpush2.msra.mxu0 0.0
        %1632 = vmatprep.subr.mxu0 0.0
        %1633 = vmatpush2.msra.mxu0 0.0
        %1634 = vmatprep.subr.mxu0 0.0
        %1635 = vmatpush2.msra.mxu0 0.0
        %1636 = vmatprep.subr.mxu0 0.0
        %1637 = vmatpush2.msra.mxu0 0.0
        %1638 = vmatprep.subr.mxu0 0.0
        %1639 = vmatpush2.msra.mxu0 0.0
        %1640 = vmatprep.subr.mxu0 0.0
        %1641 = vmatpush2.msra.mxu0 0.0
        %1642 = vmatprep.mubr.f32.mxu0 0.0
        %1643 = vmatmul.mubr.f32.gmra.mxu0 %v1506
        %v1644 = vpop.f32.mrf.mxu0
        %v1645 = vadd.f32 %v1324, %v1644
        %v1646 = vpop.f32.mrf.mxu0
        %1647 = vdwg.mxu0
        %v1648 = vadd.f32 %v1118, %v1574
        %v1649 = vxor.u32 %v1648, 2147483648
        %v1650 = vmul.f32 %v1649, 1.442695
        %v1651 = vpow.pop %v1650
        %v1652 = vadd.f32 %v1651, 1.0
        %v1653 = vrcp.pop %v1652
        %v1654 = vmul.f32 1.0, %v1653
        %v1655 = vadd.f32 %v1120, %v1576
        %v1656 = vxor.u32 %v1655, 2147483648
        %v1657 = vmul.f32 %v1656, 1.442695
        %v1658 = vpow.pop %v1657
        %v1659 = vadd.f32 %v1658, 1.0
        %v1660 = vrcp.pop %v1659
        %v1661 = vmul.f32 1.0, %v1660
        %v1662 = vmul.f32 %v1654, %v1645
        %v1663 = vadd.f32 %v1230, %v1662
        %v1664 = vtanh.pop %v1663
        %v1665 = vsub.f32 1.0, %v1661
        %v1666 = vmul.f32 %v1665, %v1664
        %v1667 = vmul.f32 %v1661, %v1506
        %v1668 = vadd.f32 %v1666, %v1667
        %vm1669 = vcmp.gt.f32.partialorder %v1263, 1.0
        %v1670 = vsel %vm1669, 1, 0
        %v1671 = vcvt.s32.f32 %v1670
        %1673 = vset.pattern.permute.xlu0 0
        %1674 = vperm.xlu0 %1673, %v1671
        %v1675 = vpop.permute.xlu0 %1674
        %v1677 = vmul.f32 %v1675, %v1668
        %v1678 = vsub.f32 1.0, %v1671
        %1680 = vset.pattern.permute.xlu0 0
        %1681 = vperm.xlu0 %1680, %v1678
        %v1682 = vpop.permute.xlu0 %1681
        %v1684 = vmul.f32 %v1682, %v1506
        %v1685 = vadd.f32 %v1677, %v1684
        %1686 = vmatprep.subr.mxu0 %v1310
        %1687 = vmatpush1.msra.mxu0 %v1309
        %1688 = vmatprep.subr.mxu0 %v1307
        %1689 = vmatpush1.msra.mxu0 %v1306
        %1690 = vmatprep.subr.mxu0 %v1304
        %1691 = vmatpush1.msra.mxu0 %v1303
        %1692 = vmatprep.subr.mxu0 %v1301
        %1693 = vmatpush1.msra.mxu0 %v1300
        %1694 = vmatprep.subr.mxu0 %v1298
        %1695 = vmatpush1.msra.mxu0 %v1297
        %1696 = vmatprep.subr.mxu0 %v1295
        %1697 = vmatpush1.msra.mxu0 %v1294
        %1698 = vmatprep.subr.mxu0 %v1292
        %1699 = vmatpush1.msra.mxu0 %v1291
        %1700 = vmatprep.subr.mxu0 %v1289
        %1701 = vmatpush1.msra.mxu0 %v1288
        %1702 = vmatprep.subr.mxu0 %v1286
        %1703 = vmatpush1.msra.mxu0 %v1285
        %1704 = vmatprep.subr.mxu0 %v1283
        %1705 = vmatpush1.msra.mxu0 %v1282
        %1706 = vmatprep.subr.mxu0 %v1280
        %1707 = vmatpush1.msra.mxu0 %v1279
        %1708 = vmatprep.subr.mxu0 %v1277
        %1709 = vmatpush1.msra.mxu0 %v1276
        %1710 = vmatprep.subr.mxu0 %v1274
        %1711 = vmatpush1.msra.mxu0 %v1273
        %1712 = vmatprep.subr.mxu0 %v1271
        %1713 = vmatpush1.msra.mxu0 %v1270
        %1714 = vmatprep.subr.mxu0 %v1268
        %1715 = vmatpush1.msra.mxu0 %v1267
        %1716 = vmatprep.subr.mxu0 %v1265
        %1717 = vmatpush1.msra.mxu0 %v1264
        %1718 = vmatprep.subr.mxu0 0.0
        %1719 = vmatpush2.msra.mxu0 0.0
        %1720 = vmatprep.subr.mxu0 0.0
        %1721 = vmatpush2.msra.mxu0 0.0
        %1722 = vmatprep.subr.mxu0 0.0
        %1723 = vmatpush2.msra.mxu0 0.0
        %1724 = vmatprep.subr.mxu0 0.0
        %1725 = vmatpush2.msra.mxu0 0.0
        %1726 = vmatprep.subr.mxu0 0.0
        %1727 = vmatpush2.msra.mxu0 0.0
        %1728 = vmatprep.subr.mxu0 0.0
        %1729 = vmatpush2.msra.mxu0 0.0
        %1730 = vmatprep.subr.mxu0 0.0
        %1731 = vmatpush2.msra.mxu0 0.0
        %1732 = vmatprep.subr.mxu0 0.0
        %1733 = vmatpush2.msra.mxu0 0.0
        %1734 = vmatprep.subr.mxu0 0.0
        %1735 = vmatpush2.msra.mxu0 0.0
        %1736 = vmatprep.subr.mxu0 0.0
        %1737 = vmatpush2.msra.mxu0 0.0
        %1738 = vmatprep.subr.mxu0 0.0
        %1739 = vmatpush2.msra.mxu0 0.0
        %1740 = vmatprep.subr.mxu0 0.0
        %1741 = vmatpush2.msra.mxu0 0.0
        %1742 = vmatprep.subr.mxu0 0.0
        %1743 = vmatpush2.msra.mxu0 0.0
        %1744 = vmatprep.subr.mxu0 0.0
        %1745 = vmatpush2.msra.mxu0 0.0
        %1746 = vmatprep.subr.mxu0 0.0
        %1747 = vmatpush2.msra.mxu0 0.0
        %1748 = vmatprep.subr.mxu0 0.0
        %1749 = vmatpush2.msra.mxu0 0.0
        %1750 = vmatprep.mubr.f32.mxu0 0.0
        %1751 = vmatmul.mubr.f32.gmra.mxu0 %v1685
        %v1752 = vpop.f32.mrf.mxu0
        %v1753 = vadd.f32 %v1316, %v1752
        %v1754 = vpop.f32.mrf.mxu0
        %v1755 = vadd.f32 %v1320, %v1754
        %1756 = vdwg.mxu0
        %1757 = vmatprep.subr.mxu0 0.0
        %1758 = vmatpush1.msra.mxu0 %v1311
        %1759 = vmatprep.subr.mxu0 0.0
        %1760 = vmatpush1.msra.mxu0 %v1308
        %1761 = vmatprep.subr.mxu0 0.0
        %1762 = vmatpush1.msra.mxu0 %v1305
        %1763 = vmatprep.subr.mxu0 0.0
        %1764 = vmatpush1.msra.mxu0 %v1302
        %1765 = vmatprep.subr.mxu0 0.0
        %1766 = vmatpush1.msra.mxu0 %v1299
        %1767 = vmatprep.subr.mxu0 0.0
        %1768 = vmatpush1.msra.mxu0 %v1296
        %1769 = vmatprep.subr.mxu0 0.0
        %1770 = vmatpush1.msra.mxu0 %v1293
        %1771 = vmatprep.subr.mxu0 0.0
        %1772 = vmatpush1.msra.mxu0 %v1290
        %1773 = vmatprep.subr.mxu0 0.0
        %1774 = vmatpush1.msra.mxu0 %v1287
        %1775 = vmatprep.subr.mxu0 0.0
        %1776 = vmatpush1.msra.mxu0 %v1284
        %1777 = vmatprep.subr.mxu0 0.0
        %1778 = vmatpush1.msra.mxu0 %v1281
        %1779 = vmatprep.subr.mxu0 0.0
        %1780 = vmatpush1.msra.mxu0 %v1278
        %1781 = vmatprep.subr.mxu0 0.0
        %1782 = vmatpush1.msra.mxu0 %v1275
        %1783 = vmatprep.subr.mxu0 0.0
        %1784 = vmatpush1.msra.mxu0 %v1272
        %1785 = vmatprep.subr.mxu0 0.0
        %1786 = vmatpush1.msra.mxu0 %v1269
        %1787 = vmatprep.subr.mxu0 0.0
        %1788 = vmatpush1.msra.mxu0 %v1266
        %1789 = vmatprep.subr.mxu0 0.0
        %1790 = vmatpush2.msra.mxu0 0.0
        %1791 = vmatprep.subr.mxu0 0.0
        %1792 = vmatpush2.msra.mxu0 0.0
        %1793 = vmatprep.subr.mxu0 0.0
        %1794 = vmatpush2.msra.mxu0 0.0
        %1795 = vmatprep.subr.mxu0 0.0
        %1796 = vmatpush2.msra.mxu0 0.0
        %1797 = vmatprep.subr.mxu0 0.0
        %1798 = vmatpush2.msra.mxu0 0.0
        %1799 = vmatprep.subr.mxu0 0.0
        %1800 = vmatpush2.msra.mxu0 0.0
        %1801 = vmatprep.subr.mxu0 0.0
        %1802 = vmatpush2.msra.mxu0 0.0
        %1803 = vmatprep.subr.mxu0 0.0
        %1804 = vmatpush2.msra.mxu0 0.0
        %1805 = vmatprep.subr.mxu0 0.0
        %1806 = vmatpush2.msra.mxu0 0.0
        %1807 = vmatprep.subr.mxu0 0.0
        %1808 = vmatpush2.msra.mxu0 0.0
        %1809 = vmatprep.subr.mxu0 0.0
        %1810 = vmatpush2.msra.mxu0 0.0
        %1811 = vmatprep.subr.mxu0 0.0
        %1812 = vmatpush2.msra.mxu0 0.0
        %1813 = vmatprep.subr.mxu0 0.0
        %1814 = vmatpush2.msra.mxu0 0.0
        %1815 = vmatprep.subr.mxu0 0.0
        %1816 = vmatpush2.msra.mxu0 0.0
        %1817 = vmatprep.subr.mxu0 0.0
        %1818 = vmatpush2.msra.mxu0 0.0
        %1819 = vmatprep.subr.mxu0 0.0
        %1820 = vmatpush2.msra.mxu0 0.0
        %1821 = vmatprep.mubr.f32.mxu0 0.0
        %1822 = vmatmul.mubr.f32.gmra.mxu0 %v1685
        %v1823 = vpop.f32.mrf.mxu0
        %v1824 = vadd.f32 %v1324, %v1823
        %v1825 = vpop.f32.mrf.mxu0
        %1826 = vdwg.mxu0
        %v1827 = vadd.f32 %v1124, %v1753
        %v1828 = vxor.u32 %v1827, 2147483648
        %v1829 = vmul.f32 %v1828, 1.442695
        %v1830 = vpow.pop %v1829
        %v1831 = vadd.f32 %v1830, 1.0
        %v1832 = vrcp.pop %v1831
        %v1833 = vmul.f32 1.0, %v1832
        %v1834 = vadd.f32 %v1126, %v1755
        %v1835 = vxor.u32 %v1834, 2147483648
        %v1836 = vmul.f32 %v1835, 1.442695
        %v1837 = vpow.pop %v1836
        %v1838 = vadd.f32 %v1837, 1.0
        %v1839 = vrcp.pop %v1838
        %v1840 = vmul.f32 1.0, %v1839
        %v1841 = vmul.f32 %v1833, %v1824
        %v1842 = vadd.f32 %v1235, %v1841
        %v1843 = vtanh.pop %v1842
        %v1844 = vsub.f32 1.0, %v1840
        %v1845 = vmul.f32 %v1844, %v1843
        %v1846 = vmul.f32 %v1840, %v1685
        %v1847 = vadd.f32 %v1845, %v1846
        %vm1848 = vcmp.gt.f32.partialorder %v1263, 2.0
        %v1849 = vsel %vm1848, 1, 0
        %v1850 = vcvt.s32.f32 %v1849
        %1852 = vset.pattern.permute.xlu0 0
        %1853 = vperm.xlu0 %1852, %v1850
        %v1854 = vpop.permute.xlu0 %1853
        %v1856 = vmul.f32 %v1854, %v1847
        %v1857 = vsub.f32 1.0, %v1850
        %1859 = vset.pattern.permute.xlu0 0
        %1860 = vperm.xlu0 %1859, %v1857
        %v1861 = vpop.permute.xlu0 %1860
        %v1863 = vmul.f32 %v1861, %v1685
        %v1864 = vadd.f32 %v1856, %v1863
        %1865 = vmatprep.subr.mxu0 %v1310
        %1866 = vmatpush1.msra.mxu0 %v1309
        %1867 = vmatprep.subr.mxu0 %v1307
        %1868 = vmatpush1.msra.mxu0 %v1306
        %1869 = vmatprep.subr.mxu0 %v1304
        %1870 = vmatpush1.msra.mxu0 %v1303
        %1871 = vmatprep.subr.mxu0 %v1301
        %1872 = vmatpush1.msra.mxu0 %v1300
        %1873 = vmatprep.subr.mxu0 %v1298
        %1874 = vmatpush1.msra.mxu0 %v1297
        %1875 = vmatprep.subr.mxu0 %v1295
        %1876 = vmatpush1.msra.mxu0 %v1294
        %1877 = vmatprep.subr.mxu0 %v1292
        %1878 = vmatpush1.msra.mxu0 %v1291
        %1879 = vmatprep.subr.mxu0 %v1289
        %1880 = vmatpush1.msra.mxu0 %v1288
        %1881 = vmatprep.subr.mxu0 %v1286
        %1882 = vmatpush1.msra.mxu0 %v1285
        %1883 = vmatprep.subr.mxu0 %v1283
        %1884 = vmatpush1.msra.mxu0 %v1282
        %1885 = vmatprep.subr.mxu0 %v1280
        %1886 = vmatpush1.msra.mxu0 %v1279
        %1887 = vmatprep.subr.mxu0 %v1277
        %1888 = vmatpush1.msra.mxu0 %v1276
        %1889 = vmatprep.subr.mxu0 %v1274
        %1890 = vmatpush1.msra.mxu0 %v1273
        %1891 = vmatprep.subr.mxu0 %v1271
        %1892 = vmatpush1.msra.mxu0 %v1270
        %1893 = vmatprep.subr.mxu0 %v1268
        %1894 = vmatpush1.msra.mxu0 %v1267
        %1895 = vmatprep.subr.mxu0 %v1265
        %1896 = vmatpush1.msra.mxu0 %v1264
        %1897 = vmatprep.subr.mxu0 0.0
        %1898 = vmatpush2.msra.mxu0 0.0
        %1899 = vmatprep.subr.mxu0 0.0
        %1900 = vmatpush2.msra.mxu0 0.0
        %1901 = vmatprep.subr.mxu0 0.0
        %1902 = vmatpush2.msra.mxu0 0.0
        %1903 = vmatprep.subr.mxu0 0.0
        %1904 = vmatpush2.msra.mxu0 0.0
        %1905 = vmatprep.subr.mxu0 0.0
        %1906 = vmatpush2.msra.mxu0 0.0
        %1907 = vmatprep.subr.mxu0 0.0
        %1908 = vmatpush2.msra.mxu0 0.0
        %1909 = vmatprep.subr.mxu0 0.0
        %1910 = vmatpush2.msra.mxu0 0.0
        %1911 = vmatprep.subr.mxu0 0.0
        %1912 = vmatpush2.msra.mxu0 0.0
        %1913 = vmatprep.subr.mxu0 0.0
        %1914 = vmatpush2.msra.mxu0 0.0
        %1915 = vmatprep.subr.mxu0 0.0
        %1916 = vmatpush2.msra.mxu0 0.0
        %1917 = vmatprep.subr.mxu0 0.0
        %1918 = vmatpush2.msra.mxu0 0.0
        %1919 = vmatprep.subr.mxu0 0.0
        %1920 = vmatpush2.msra.mxu0 0.0
        %1921 = vmatprep.subr.mxu0 0.0
        %1922 = vmatpush2.msra.mxu0 0.0
        %1923 = vmatprep.subr.mxu0 0.0
        %1924 = vmatpush2.msra.mxu0 0.0
        %1925 = vmatprep.subr.mxu0 0.0
        %1926 = vmatpush2.msra.mxu0 0.0
        %1927 = vmatprep.subr.mxu0 0.0
        %1928 = vmatpush2.msra.mxu0 0.0
        %1929 = vmatprep.mubr.f32.mxu0 0.0
        %1930 = vmatmul.mubr.f32.gmra.mxu0 %v1864
        %v1931 = vpop.f32.mrf.mxu0
        %v1932 = vadd.f32 %v1316, %v1931
        %v1933 = vpop.f32.mrf.mxu0
        %v1934 = vadd.f32 %v1320, %v1933
        %1935 = vdwg.mxu0
        %1936 = vmatprep.subr.mxu0 0.0
        %1937 = vmatpush1.msra.mxu0 %v1311
        %1938 = vmatprep.subr.mxu0 0.0
        %1939 = vmatpush1.msra.mxu0 %v1308
        %1940 = vmatprep.subr.mxu0 0.0
        %1941 = vmatpush1.msra.mxu0 %v1305
        %1942 = vmatprep.subr.mxu0 0.0
        %1943 = vmatpush1.msra.mxu0 %v1302
        %1944 = vmatprep.subr.mxu0 0.0
        %1945 = vmatpush1.msra.mxu0 %v1299
        %1946 = vmatprep.subr.mxu0 0.0
        %1947 = vmatpush1.msra.mxu0 %v1296
        %1948 = vmatprep.subr.mxu0 0.0
        %1949 = vmatpush1.msra.mxu0 %v1293
        %1950 = vmatprep.subr.mxu0 0.0
        %1951 = vmatpush1.msra.mxu0 %v1290
        %1952 = vmatprep.subr.mxu0 0.0
        %1953 = vmatpush1.msra.mxu0 %v1287
        %1954 = vmatprep.subr.mxu0 0.0
        %1955 = vmatpush1.msra.mxu0 %v1284
        %1956 = vmatprep.subr.mxu0 0.0
        %1957 = vmatpush1.msra.mxu0 %v1281
        %1958 = vmatprep.subr.mxu0 0.0
        %1959 = vmatpush1.msra.mxu0 %v1278
        %1960 = vmatprep.subr.mxu0 0.0
        %1961 = vmatpush1.msra.mxu0 %v1275
        %1962 = vmatprep.subr.mxu0 0.0
        %1963 = vmatpush1.msra.mxu0 %v1272
        %1964 = vmatprep.subr.mxu0 0.0
        %1965 = vmatpush1.msra.mxu0 %v1269
        %1966 = vmatprep.subr.mxu0 0.0
        %1967 = vmatpush1.msra.mxu0 %v1266
        %1968 = vmatprep.subr.mxu0 0.0
        %1969 = vmatpush2.msra.mxu0 0.0
        %1970 = vmatprep.subr.mxu0 0.0
        %1971 = vmatpush2.msra.mxu0 0.0
        %1972 = vmatprep.subr.mxu0 0.0
        %1973 = vmatpush2.msra.mxu0 0.0
        %1974 = vmatprep.subr.mxu0 0.0
        %1975 = vmatpush2.msra.mxu0 0.0
        %1976 = vmatprep.subr.mxu0 0.0
        %1977 = vmatpush2.msra.mxu0 0.0
        %1978 = vmatprep.subr.mxu0 0.0
        %1979 = vmatpush2.msra.mxu0 0.0
        %1980 = vmatprep.subr.mxu0 0.0
        %1981 = vmatpush2.msra.mxu0 0.0
        %1982 = vmatprep.subr.mxu0 0.0
        %1983 = vmatpush2.msra.mxu0 0.0
        %1984 = vmatprep.subr.mxu0 0.0
        %1985 = vmatpush2.msra.mxu0 0.0
        %1986 = vmatprep.subr.mxu0 0.0
        %1987 = vmatpush2.msra.mxu0 0.0
        %1988 = vmatprep.subr.mxu0 0.0
        %1989 = vmatpush2.msra.mxu0 0.0
        %1990 = vmatprep.subr.mxu0 0.0
        %1991 = vmatpush2.msra.mxu0 0.0
        %1992 = vmatprep.subr.mxu0 0.0
        %1993 = vmatpush2.msra.mxu0 0.0
        %1994 = vmatprep.subr.mxu0 0.0
        %1995 = vmatpush2.msra.mxu0 0.0
        %1996 = vmatprep.subr.mxu0 0.0
        %1997 = vmatpush2.msra.mxu0 0.0
        %1998 = vmatprep.subr.mxu0 0.0
        %1999 = vmatpush2.msra.mxu0 0.0
        %2000 = vmatprep.mubr.f32.mxu0 0.0
        %2001 = vmatmul.mubr.f32.gmra.mxu0 %v1864
        %v2002 = vpop.f32.mrf.mxu0
        %v2003 = vadd.f32 %v1324, %v2002
        %v2004 = vpop.f32.mrf.mxu0
        %2005 = vdwg.mxu0
        %v2006 = vadd.f32 %v1130, %v1932
        %v2007 = vxor.u32 %v2006, 2147483648
        %v2008 = vmul.f32 %v2007, 1.442695
        %v2009 = vpow.pop %v2008
        %v2010 = vadd.f32 %v2009, 1.0
        %v2011 = vrcp.pop %v2010
        %v2012 = vmul.f32 1.0, %v2011
        %v2013 = vadd.f32 %v1132, %v1934
        %v2014 = vxor.u32 %v2013, 2147483648
        %v2015 = vmul.f32 %v2014, 1.442695
        %v2016 = vpow.pop %v2015
        %v2017 = vadd.f32 %v2016, 1.0
        %v2018 = vrcp.pop %v2017
        %v2019 = vmul.f32 1.0, %v2018
        %v2020 = vmul.f32 %v2012, %v2003
        %v2021 = vadd.f32 %v1240, %v2020
        %v2022 = vtanh.pop %v2021
        %v2023 = vsub.f32 1.0, %v2019
        %v2024 = vmul.f32 %v2023, %v2022
        %v2025 = vmul.f32 %v2019, %v1864
        %v2026 = vadd.f32 %v2024, %v2025
        %vm2027 = vcmp.gt.f32.partialorder %v1263, 3.0
        %v2028 = vsel %vm2027, 1, 0
        %v2029 = vcvt.s32.f32 %v2028
        %2031 = vset.pattern.permute.xlu0 0
        %2032 = vperm.xlu0 %2031, %v2029
        %v2033 = vpop.permute.xlu0 %2032
        %v2035 = vmul.f32 %v2033, %v2026
        %v2036 = vsub.f32 1.0, %v2029
        %2038 = vset.pattern.permute.xlu0 0
        %2039 = vperm.xlu0 %2038, %v2036
        %v2040 = vpop.permute.xlu0 %2039
        %v2042 = vmul.f32 %v2040, %v1864
        %v2043 = vadd.f32 %v2035, %v2042
        %2044 = vmatprep.subr.mxu0 %v1310
        %2045 = vmatpush1.msra.mxu0 %v1309
        %2046 = vmatprep.subr.mxu0 %v1307
        %2047 = vmatpush1.msra.mxu0 %v1306
        %2048 = vmatprep.subr.mxu0 %v1304
        %2049 = vmatpush1.msra.mxu0 %v1303
        %2050 = vmatprep.subr.mxu0 %v1301
        %2051 = vmatpush1.msra.mxu0 %v1300
        %2052 = vmatprep.subr.mxu0 %v1298
        %2053 = vmatpush1.msra.mxu0 %v1297
        %2054 = vmatprep.subr.mxu0 %v1295
        %2055 = vmatpush1.msra.mxu0 %v1294
        %2056 = vmatprep.subr.mxu0 %v1292
        %2057 = vmatpush1.msra.mxu0 %v1291
        %2058 = vmatprep.subr.mxu0 %v1289
        %2059 = vmatpush1.msra.mxu0 %v1288
        %2060 = vmatprep.subr.mxu0 %v1286
        %2061 = vmatpush1.msra.mxu0 %v1285
        %2062 = vmatprep.subr.mxu0 %v1283
        %2063 = vmatpush1.msra.mxu0 %v1282
        %2064 = vmatprep.subr.mxu0 %v1280
        %2065 = vmatpush1.msra.mxu0 %v1279
        %2066 = vmatprep.subr.mxu0 %v1277
        %2067 = vmatpush1.msra.mxu0 %v1276
        %2068 = vmatprep.subr.mxu0 %v1274
        %2069 = vmatpush1.msra.mxu0 %v1273
        %2070 = vmatprep.subr.mxu0 %v1271
        %2071 = vmatpush1.msra.mxu0 %v1270
        %2072 = vmatprep.subr.mxu0 %v1268
        %2073 = vmatpush1.msra.mxu0 %v1267
        %2074 = vmatprep.subr.mxu0 %v1265
        %2075 = vmatpush1.msra.mxu0 %v1264
        %2076 = vmatprep.subr.mxu0 0.0
        %2077 = vmatpush2.msra.mxu0 0.0
        %2078 = vmatprep.subr.mxu0 0.0
        %2079 = vmatpush2.msra.mxu0 0.0
        %2080 = vmatprep.subr.mxu0 0.0
        %2081 = vmatpush2.msra.mxu0 0.0
        %2082 = vmatprep.subr.mxu0 0.0
        %2083 = vmatpush2.msra.mxu0 0.0
        %2084 = vmatprep.subr.mxu0 0.0
        %2085 = vmatpush2.msra.mxu0 0.0
        %2086 = vmatprep.subr.mxu0 0.0
        %2087 = vmatpush2.msra.mxu0 0.0
        %2088 = vmatprep.subr.mxu0 0.0
        %2089 = vmatpush2.msra.mxu0 0.0
        %2090 = vmatprep.subr.mxu0 0.0
        %2091 = vmatpush2.msra.mxu0 0.0
        %2092 = vmatprep.subr.mxu0 0.0
        %2093 = vmatpush2.msra.mxu0 0.0
        %2094 = vmatprep.subr.mxu0 0.0
        %2095 = vmatpush2.msra.mxu0 0.0
        %2096 = vmatprep.subr.mxu0 0.0
        %2097 = vmatpush2.msra.mxu0 0.0
        %2098 = vmatprep.subr.mxu0 0.0
        %2099 = vmatpush2.msra.mxu0 0.0
        %2100 = vmatprep.subr.mxu0 0.0
        %2101 = vmatpush2.msra.mxu0 0.0
        %2102 = vmatprep.subr.mxu0 0.0
        %2103 = vmatpush2.msra.mxu0 0.0
        %2104 = vmatprep.subr.mxu0 0.0
        %2105 = vmatpush2.msra.mxu0 0.0
        %2106 = vmatprep.subr.mxu0 0.0
        %2107 = vmatpush2.msra.mxu0 0.0
        %2108 = vmatprep.mubr.f32.mxu0 0.0
        %2109 = vmatmul.mubr.f32.gmra.mxu0 %v2043
        %v2110 = vpop.f32.mrf.mxu0
        %v2111 = vadd.f32 %v1316, %v2110
        %v2112 = vpop.f32.mrf.mxu0
        %v2113 = vadd.f32 %v1320, %v2112
        %2114 = vdwg.mxu0
        %2115 = vmatprep.subr.mxu0 0.0
        %2116 = vmatpush1.msra.mxu0 %v1311
        %2117 = vmatprep.subr.mxu0 0.0
        %2118 = vmatpush1.msra.mxu0 %v1308
        %2119 = vmatprep.subr.mxu0 0.0
        %2120 = vmatpush1.msra.mxu0 %v1305
        %2121 = vmatprep.subr.mxu0 0.0
        %2122 = vmatpush1.msra.mxu0 %v1302
        %2123 = vmatprep.subr.mxu0 0.0
        %2124 = vmatpush1.msra.mxu0 %v1299
        %2125 = vmatprep.subr.mxu0 0.0
        %2126 = vmatpush1.msra.mxu0 %v1296
        %2127 = vmatprep.subr.mxu0 0.0
        %2128 = vmatpush1.msra.mxu0 %v1293
        %2129 = vmatprep.subr.mxu0 0.0
        %2130 = vmatpush1.msra.mxu0 %v1290
        %2131 = vmatprep.subr.mxu0 0.0
        %2132 = vmatpush1.msra.mxu0 %v1287
        %2133 = vmatprep.subr.mxu0 0.0
        %2134 = vmatpush1.msra.mxu0 %v1284
        %2135 = vmatprep.subr.mxu0 0.0
        %2136 = vmatpush1.msra.mxu0 %v1281
        %2137 = vmatprep.subr.mxu0 0.0
        %2138 = vmatpush1.msra.mxu0 %v1278
        %2139 = vmatprep.subr.mxu0 0.0
        %2140 = vmatpush1.msra.mxu0 %v1275
        %2141 = vmatprep.subr.mxu0 0.0
        %2142 = vmatpush1.msra.mxu0 %v1272
        %2143 = vmatprep.subr.mxu0 0.0
        %2144 = vmatpush1.msra.mxu0 %v1269
        %2145 = vmatprep.subr.mxu0 0.0
        %2146 = vmatpush1.msra.mxu0 %v1266
        %2147 = vmatprep.subr.mxu0 0.0
        %2148 = vmatpush2.msra.mxu0 0.0
        %2149 = vmatprep.subr.mxu0 0.0
        %2150 = vmatpush2.msra.mxu0 0.0
        %2151 = vmatprep.subr.mxu0 0.0
        %2152 = vmatpush2.msra.mxu0 0.0
        %2153 = vmatprep.subr.mxu0 0.0
        %2154 = vmatpush2.msra.mxu0 0.0
        %2155 = vmatprep.subr.mxu0 0.0
        %2156 = vmatpush2.msra.mxu0 0.0
        %2157 = vmatprep.subr.mxu0 0.0
        %2158 = vmatpush2.msra.mxu0 0.0
        %2159 = vmatprep.subr.mxu0 0.0
        %2160 = vmatpush2.msra.mxu0 0.0
        %2161 = vmatprep.subr.mxu0 0.0
        %2162 = vmatpush2.msra.mxu0 0.0
        %2163 = vmatprep.subr.mxu0 0.0
        %2164 = vmatpush2.msra.mxu0 0.0
        %2165 = vmatprep.subr.mxu0 0.0
        %2166 = vmatpush2.msra.mxu0 0.0
        %2167 = vmatprep.subr.mxu0 0.0
        %2168 = vmatpush2.msra.mxu0 0.0
        %2169 = vmatprep.subr.mxu0 0.0
        %2170 = vmatpush2.msra.mxu0 0.0
        %2171 = vmatprep.subr.mxu0 0.0
        %2172 = vmatpush2.msra.mxu0 0.0
        %2173 = vmatprep.subr.mxu0 0.0
        %2174 = vmatpush2.msra.mxu0 0.0
        %2175 = vmatprep.subr.mxu0 0.0
        %2176 = vmatpush2.msra.mxu0 0.0
        %2177 = vmatprep.subr.mxu0 0.0
        %2178 = vmatpush2.msra.mxu0 0.0
        %2179 = vmatprep.mubr.f32.mxu0 0.0
        %2180 = vmatmul.mubr.f32.gmra.mxu0 %v2043
        %v2181 = vpop.f32.mrf.mxu0
        %v2182 = vadd.f32 %v1324, %v2181
        %v2183 = vpop.f32.mrf.mxu0
        %2184 = vdwg.mxu0
        %v2185 = vadd.f32 %v1136, %v2111
        %v2186 = vxor.u32 %v2185, 2147483648
        %v2187 = vmul.f32 %v2186, 1.442695
        %v2188 = vpow.pop %v2187
        %v2189 = vadd.f32 %v2188, 1.0
        %v2190 = vrcp.pop %v2189
        %v2191 = vmul.f32 1.0, %v2190
        %v2192 = vadd.f32 %v1138, %v2113
        %v2193 = vxor.u32 %v2192, 2147483648
        %v2194 = vmul.f32 %v2193, 1.442695
        %v2195 = vpow.pop %v2194
        %v2196 = vadd.f32 %v2195, 1.0
        %v2197 = vrcp.pop %v2196
        %v2198 = vmul.f32 1.0, %v2197
        %v2199 = vmul.f32 %v2191, %v2182
        %v2200 = vadd.f32 %v1245, %v2199
        %v2201 = vtanh.pop %v2200
        %v2202 = vsub.f32 1.0, %v2198
        %v2203 = vmul.f32 %v2202, %v2201
        %v2204 = vmul.f32 %v2198, %v2043
        %v2205 = vadd.f32 %v2203, %v2204
        %vm2206 = vcmp.gt.f32.partialorder %v1263, 4.0
        %v2207 = vsel %vm2206, 1, 0
        %v2208 = vcvt.s32.f32 %v2207
        %2210 = vset.pattern.permute.xlu0 0
        %2211 = vperm.xlu0 %2210, %v2208
        %v2212 = vpop.permute.xlu0 %2211
        %v2214 = vmul.f32 %v2212, %v2205
        %v2215 = vsub.f32 1.0, %v2208
        %2217 = vset.pattern.permute.xlu0 0
        %2218 = vperm.xlu0 %2217, %v2215
        %v2219 = vpop.permute.xlu0 %2218
        %v2221 = vmul.f32 %v2219, %v2043
        %v2222 = vadd.f32 %v2214, %v2221
        %2223 = vmatprep.subr.mxu0 %v1310
        %2224 = vmatpush1.msra.mxu0 %v1309
        %2225 = vmatprep.subr.mxu0 %v1307
        %2226 = vmatpush1.msra.mxu0 %v1306
        %2227 = vmatprep.subr.mxu0 %v1304
        %2228 = vmatpush1.msra.mxu0 %v1303
        %2229 = vmatprep.subr.mxu0 %v1301
        %2230 = vmatpush1.msra.mxu0 %v1300
        %2231 = vmatprep.subr.mxu0 %v1298
        %2232 = vmatpush1.msra.mxu0 %v1297
        %2233 = vmatprep.subr.mxu0 %v1295
        %2234 = vmatpush1.msra.mxu0 %v1294
        %2235 = vmatprep.subr.mxu0 %v1292
        %2236 = vmatpush1.msra.mxu0 %v1291
        %2237 = vmatprep.subr.mxu0 %v1289
        %2238 = vmatpush1.msra.mxu0 %v1288
        %2239 = vmatprep.subr.mxu0 %v1286
        %2240 = vmatpush1.msra.mxu0 %v1285
        %2241 = vmatprep.subr.mxu0 %v1283
        %2242 = vmatpush1.msra.mxu0 %v1282
        %2243 = vmatprep.subr.mxu0 %v1280
        %2244 = vmatpush1.msra.mxu0 %v1279
        %2245 = vmatprep.subr.mxu0 %v1277
        %2246 = vmatpush1.msra.mxu0 %v1276
        %2247 = vmatprep.subr.mxu0 %v1274
        %2248 = vmatpush1.msra.mxu0 %v1273
        %2249 = vmatprep.subr.mxu0 %v1271
        %2250 = vmatpush1.msra.mxu0 %v1270
        %2251 = vmatprep.subr.mxu0 %v1268
        %2252 = vmatpush1.msra.mxu0 %v1267
        %2253 = vmatprep.subr.mxu0 %v1265
        %2254 = vmatpush1.msra.mxu0 %v1264
        %2255 = vmatprep.subr.mxu0 0.0
        %2256 = vmatpush2.msra.mxu0 0.0
        %2257 = vmatprep.subr.mxu0 0.0
        %2258 = vmatpush2.msra.mxu0 0.0
        %2259 = vmatprep.subr.mxu0 0.0
        %2260 = vmatpush2.msra.mxu0 0.0
        %2261 = vmatprep.subr.mxu0 0.0
        %2262 = vmatpush2.msra.mxu0 0.0
        %2263 = vmatprep.subr.mxu0 0.0
        %2264 = vmatpush2.msra.mxu0 0.0
        %2265 = vmatprep.subr.mxu0 0.0
        %2266 = vmatpush2.msra.mxu0 0.0
        %2267 = vmatprep.subr.mxu0 0.0
        %2268 = vmatpush2.msra.mxu0 0.0
        %2269 = vmatprep.subr.mxu0 0.0
        %2270 = vmatpush2.msra.mxu0 0.0
        %2271 = vmatprep.subr.mxu0 0.0
        %2272 = vmatpush2.msra.mxu0 0.0
        %2273 = vmatprep.subr.mxu0 0.0
        %2274 = vmatpush2.msra.mxu0 0.0
        %2275 = vmatprep.subr.mxu0 0.0
        %2276 = vmatpush2.msra.mxu0 0.0
        %2277 = vmatprep.subr.mxu0 0.0
        %2278 = vmatpush2.msra.mxu0 0.0
        %2279 = vmatprep.subr.mxu0 0.0
        %2280 = vmatpush2.msra.mxu0 0.0
        %2281 = vmatprep.subr.mxu0 0.0
        %2282 = vmatpush2.msra.mxu0 0.0
        %2283 = vmatprep.subr.mxu0 0.0
        %2284 = vmatpush2.msra.mxu0 0.0
        %2285 = vmatprep.subr.mxu0 0.0
        %2286 = vmatpush2.msra.mxu0 0.0
        %2287 = vmatprep.mubr.f32.mxu0 0.0
        %2288 = vmatmul.mubr.f32.gmra.mxu0 %v2222
        %v2289 = vpop.f32.mrf.mxu0
        %v2290 = vadd.f32 %v1316, %v2289
        %v2291 = vpop.f32.mrf.mxu0
        %v2292 = vadd.f32 %v1320, %v2291
        %2293 = vdwg.mxu0
        %2294 = vmatprep.subr.mxu0 0.0
        %2295 = vmatpush1.msra.mxu0 %v1311
        %2296 = vmatprep.subr.mxu0 0.0
        %2297 = vmatpush1.msra.mxu0 %v1308
        %2298 = vmatprep.subr.mxu0 0.0
        %2299 = vmatpush1.msra.mxu0 %v1305
        %2300 = vmatprep.subr.mxu0 0.0
        %2301 = vmatpush1.msra.mxu0 %v1302
        %2302 = vmatprep.subr.mxu0 0.0
        %2303 = vmatpush1.msra.mxu0 %v1299
        %2304 = vmatprep.subr.mxu0 0.0
        %2305 = vmatpush1.msra.mxu0 %v1296
        %2306 = vmatprep.subr.mxu0 0.0
        %2307 = vmatpush1.msra.mxu0 %v1293
        %2308 = vmatprep.subr.mxu0 0.0
        %2309 = vmatpush1.msra.mxu0 %v1290
        %2310 = vmatprep.subr.mxu0 0.0
        %2311 = vmatpush1.msra.mxu0 %v1287
        %2312 = vmatprep.subr.mxu0 0.0
        %2313 = vmatpush1.msra.mxu0 %v1284
        %2314 = vmatprep.subr.mxu0 0.0
        %2315 = vmatpush1.msra.mxu0 %v1281
        %2316 = vmatprep.subr.mxu0 0.0
        %2317 = vmatpush1.msra.mxu0 %v1278
        %2318 = vmatprep.subr.mxu0 0.0
        %2319 = vmatpush1.msra.mxu0 %v1275
        %2320 = vmatprep.subr.mxu0 0.0
        %2321 = vmatpush1.msra.mxu0 %v1272
        %2322 = vmatprep.subr.mxu0 0.0
        %2323 = vmatpush1.msra.mxu0 %v1269
        %2324 = vmatprep.subr.mxu0 0.0
        %2325 = vmatpush1.msra.mxu0 %v1266
        %2326 = vmatprep.subr.mxu0 0.0
        %2327 = vmatpush2.msra.mxu0 0.0
        %2328 = vmatprep.subr.mxu0 0.0
        %2329 = vmatpush2.msra.mxu0 0.0
        %2330 = vmatprep.subr.mxu0 0.0
        %2331 = vmatpush2.msra.mxu0 0.0
        %2332 = vmatprep.subr.mxu0 0.0
        %2333 = vmatpush2.msra.mxu0 0.0
        %2334 = vmatprep.subr.mxu0 0.0
        %2335 = vmatpush2.msra.mxu0 0.0
        %2336 = vmatprep.subr.mxu0 0.0
        %2337 = vmatpush2.msra.mxu0 0.0
        %2338 = vmatprep.subr.mxu0 0.0
        %2339 = vmatpush2.msra.mxu0 0.0
        %2340 = vmatprep.subr.mxu0 0.0
        %2341 = vmatpush2.msra.mxu0 0.0
        %2342 = vmatprep.subr.mxu0 0.0
        %2343 = vmatpush2.msra.mxu0 0.0
        %2344 = vmatprep.subr.mxu0 0.0
        %2345 = vmatpush2.msra.mxu0 0.0
        %2346 = vmatprep.subr.mxu0 0.0
        %2347 = vmatpush2.msra.mxu0 0.0
        %2348 = vmatprep.subr.mxu0 0.0
        %2349 = vmatpush2.msra.mxu0 0.0
        %2350 = vmatprep.subr.mxu0 0.0
        %2351 = vmatpush2.msra.mxu0 0.0
        %2352 = vmatprep.subr.mxu0 0.0
        %2353 = vmatpush2.msra.mxu0 0.0
        %2354 = vmatprep.subr.mxu0 0.0
        %2355 = vmatpush2.msra.mxu0 0.0
        %2356 = vmatprep.subr.mxu0 0.0
        %2357 = vmatpush2.msra.mxu0 0.0
        %2358 = vmatprep.mubr.f32.mxu0 0.0
        %2359 = vmatmul.mubr.f32.gmra.mxu0 %v2222
        %v2360 = vpop.f32.mrf.mxu0
        %v2361 = vadd.f32 %v1324, %v2360
        %v2362 = vpop.f32.mrf.mxu0
        %2363 = vdwg.mxu0
        %v2364 = vadd.f32 %v1142, %v2290
        %v2365 = vxor.u32 %v2364, 2147483648
        %v2366 = vmul.f32 %v2365, 1.442695
        %v2367 = vpow.pop %v2366
        %v2368 = vadd.f32 %v2367, 1.0
        %v2369 = vrcp.pop %v2368
        %v2370 = vmul.f32 1.0, %v2369
        %v2371 = vadd.f32 %v1144, %v2292
        %v2372 = vxor.u32 %v2371, 2147483648
        %v2373 = vmul.f32 %v2372, 1.442695
        %v2374 = vpow.pop %v2373
        %v2375 = vadd.f32 %v2374, 1.0
        %v2376 = vrcp.pop %v2375
        %v2377 = vmul.f32 1.0, %v2376
        %v2378 = vmul.f32 %v2370, %v2361
        %v2379 = vadd.f32 %v1250, %v2378
        %v2380 = vtanh.pop %v2379
        %v2381 = vsub.f32 1.0, %v2377
        %v2382 = vmul.f32 %v2381, %v2380
        %v2383 = vmul.f32 %v2377, %v2222
        %v2384 = vadd.f32 %v2382, %v2383
        %vm2385 = vcmp.gt.f32.partialorder %v1263, 5.0
        %v2386 = vsel %vm2385, 1, 0
        %v2387 = vcvt.s32.f32 %v2386
        %2389 = vset.pattern.permute.xlu0 0
        %2390 = vperm.xlu0 %2389, %v2387
        %v2391 = vpop.permute.xlu0 %2390
        %v2393 = vmul.f32 %v2391, %v2384
        %v2394 = vsub.f32 1.0, %v2387
        %2396 = vset.pattern.permute.xlu0 0
        %2397 = vperm.xlu0 %2396, %v2394
        %v2398 = vpop.permute.xlu0 %2397
        %v2400 = vmul.f32 %v2398, %v2222
        %v2401 = vadd.f32 %v2393, %v2400
        %2402 = vmatprep.subr.mxu0 %v1310
        %2403 = vmatpush1.msra.mxu0 %v1309
        %2404 = vmatprep.subr.mxu0 %v1307
        %2405 = vmatpush1.msra.mxu0 %v1306
        %2406 = vmatprep.subr.mxu0 %v1304
        %2407 = vmatpush1.msra.mxu0 %v1303
        %2408 = vmatprep.subr.mxu0 %v1301
        %2409 = vmatpush1.msra.mxu0 %v1300
        %2410 = vmatprep.subr.mxu0 %v1298
        %2411 = vmatpush1.msra.mxu0 %v1297
        %2412 = vmatprep.subr.mxu0 %v1295
        %2413 = vmatpush1.msra.mxu0 %v1294
        %2414 = vmatprep.subr.mxu0 %v1292
        %2415 = vmatpush1.msra.mxu0 %v1291
        %2416 = vmatprep.subr.mxu0 %v1289
        %2417 = vmatpush1.msra.mxu0 %v1288
        %2418 = vmatprep.subr.mxu0 %v1286
        %2419 = vmatpush1.msra.mxu0 %v1285
        %2420 = vmatprep.subr.mxu0 %v1283
        %2421 = vmatpush1.msra.mxu0 %v1282
        %2422 = vmatprep.subr.mxu0 %v1280
        %2423 = vmatpush1.msra.mxu0 %v1279
        %2424 = vmatprep.subr.mxu0 %v1277
        %2425 = vmatpush1.msra.mxu0 %v1276
        %2426 = vmatprep.subr.mxu0 %v1274
        %2427 = vmatpush1.msra.mxu0 %v1273
        %2428 = vmatprep.subr.mxu0 %v1271
        %2429 = vmatpush1.msra.mxu0 %v1270
        %2430 = vmatprep.subr.mxu0 %v1268
        %2431 = vmatpush1.msra.mxu0 %v1267
        %2432 = vmatprep.subr.mxu0 %v1265
        %2433 = vmatpush1.msra.mxu0 %v1264
        %2434 = vmatprep.subr.mxu0 0.0
        %2435 = vmatpush2.msra.mxu0 0.0
        %2436 = vmatprep.subr.mxu0 0.0
        %2437 = vmatpush2.msra.mxu0 0.0
        %2438 = vmatprep.subr.mxu0 0.0
        %2439 = vmatpush2.msra.mxu0 0.0
        %2440 = vmatprep.subr.mxu0 0.0
        %2441 = vmatpush2.msra.mxu0 0.0
        %2442 = vmatprep.subr.mxu0 0.0
        %2443 = vmatpush2.msra.mxu0 0.0
        %2444 = vmatprep.subr.mxu0 0.0
        %2445 = vmatpush2.msra.mxu0 0.0
        %2446 = vmatprep.subr.mxu0 0.0
        %2447 = vmatpush2.msra.mxu0 0.0
        %2448 = vmatprep.subr.mxu0 0.0
        %2449 = vmatpush2.msra.mxu0 0.0
        %2450 = vmatprep.subr.mxu0 0.0
        %2451 = vmatpush2.msra.mxu0 0.0
        %2452 = vmatprep.subr.mxu0 0.0
        %2453 = vmatpush2.msra.mxu0 0.0
        %2454 = vmatprep.subr.mxu0 0.0
        %2455 = vmatpush2.msra.mxu0 0.0
        %2456 = vmatprep.subr.mxu0 0.0
        %2457 = vmatpush2.msra.mxu0 0.0
        %2458 = vmatprep.subr.mxu0 0.0
        %2459 = vmatpush2.msra.mxu0 0.0
        %2460 = vmatprep.subr.mxu0 0.0
        %2461 = vmatpush2.msra.mxu0 0.0
        %2462 = vmatprep.subr.mxu0 0.0
        %2463 = vmatpush2.msra.mxu0 0.0
        %2464 = vmatprep.subr.mxu0 0.0
        %2465 = vmatpush2.msra.mxu0 0.0
        %2466 = vmatprep.mubr.f32.mxu0 0.0
        %2467 = vmatmul.mubr.f32.gmra.mxu0 %v2401
        %v2468 = vpop.f32.mrf.mxu0
        %v2469 = vadd.f32 %v1316, %v2468
        %v2470 = vpop.f32.mrf.mxu0
        %v2471 = vadd.f32 %v1320, %v2470
        %2472 = vdwg.mxu0
        %2473 = vmatprep.subr.mxu0 0.0
        %2474 = vmatpush1.msra.mxu0 %v1311
        %2475 = vmatprep.subr.mxu0 0.0
        %2476 = vmatpush1.msra.mxu0 %v1308
        %2477 = vmatprep.subr.mxu0 0.0
        %2478 = vmatpush1.msra.mxu0 %v1305
        %2479 = vmatprep.subr.mxu0 0.0
        %2480 = vmatpush1.msra.mxu0 %v1302
        %2481 = vmatprep.subr.mxu0 0.0
        %2482 = vmatpush1.msra.mxu0 %v1299
        %2483 = vmatprep.subr.mxu0 0.0
        %2484 = vmatpush1.msra.mxu0 %v1296
        %2485 = vmatprep.subr.mxu0 0.0
        %2486 = vmatpush1.msra.mxu0 %v1293
        %2487 = vmatprep.subr.mxu0 0.0
        %2488 = vmatpush1.msra.mxu0 %v1290
        %2489 = vmatprep.subr.mxu0 0.0
        %2490 = vmatpush1.msra.mxu0 %v1287
        %2491 = vmatprep.subr.mxu0 0.0
        %2492 = vmatpush1.msra.mxu0 %v1284
        %2493 = vmatprep.subr.mxu0 0.0
        %2494 = vmatpush1.msra.mxu0 %v1281
        %2495 = vmatprep.subr.mxu0 0.0
        %2496 = vmatpush1.msra.mxu0 %v1278
        %2497 = vmatprep.subr.mxu0 0.0
        %2498 = vmatpush1.msra.mxu0 %v1275
        %2499 = vmatprep.subr.mxu0 0.0
        %2500 = vmatpush1.msra.mxu0 %v1272
        %2501 = vmatprep.subr.mxu0 0.0
        %2502 = vmatpush1.msra.mxu0 %v1269
        %2503 = vmatprep.subr.mxu0 0.0
        %2504 = vmatpush1.msra.mxu0 %v1266
        %2505 = vmatprep.subr.mxu0 0.0
        %2506 = vmatpush2.msra.mxu0 0.0
        %2507 = vmatprep.subr.mxu0 0.0
        %2508 = vmatpush2.msra.mxu0 0.0
        %2509 = vmatprep.subr.mxu0 0.0
        %2510 = vmatpush2.msra.mxu0 0.0
        %2511 = vmatprep.subr.mxu0 0.0
        %2512 = vmatpush2.msra.mxu0 0.0
        %2513 = vmatprep.subr.mxu0 0.0
        %2514 = vmatpush2.msra.mxu0 0.0
        %2515 = vmatprep.subr.mxu0 0.0
        %2516 = vmatpush2.msra.mxu0 0.0
        %2517 = vmatprep.subr.mxu0 0.0
        %2518 = vmatpush2.msra.mxu0 0.0
        %2519 = vmatprep.subr.mxu0 0.0
        %2520 = vmatpush2.msra.mxu0 0.0
        %2521 = vmatprep.subr.mxu0 0.0
        %2522 = vmatpush2.msra.mxu0 0.0
        %2523 = vmatprep.subr.mxu0 0.0
        %2524 = vmatpush2.msra.mxu0 0.0
        %2525 = vmatprep.subr.mxu0 0.0
        %2526 = vmatpush2.msra.mxu0 0.0
        %2527 = vmatprep.subr.mxu0 0.0
        %2528 = vmatpush2.msra.mxu0 0.0
        %2529 = vmatprep.subr.mxu0 0.0
        %2530 = vmatpush2.msra.mxu0 0.0
        %2531 = vmatprep.subr.mxu0 0.0
        %2532 = vmatpush2.msra.mxu0 0.0
        %2533 = vmatprep.subr.mxu0 0.0
        %2534 = vmatpush2.msra.mxu0 0.0
        %2535 = vmatprep.subr.mxu0 0.0
        %2536 = vmatpush2.msra.mxu0 0.0
        %2537 = vmatprep.mubr.f32.mxu0 0.0
        %2538 = vmatmul.mubr.f32.gmra.mxu0 %v2401
        %v2539 = vpop.f32.mrf.mxu0
        %v2540 = vadd.f32 %v1324, %v2539
        %v2541 = vpop.f32.mrf.mxu0
        %2542 = vdwg.mxu0
        %v2543 = vadd.f32 %v1148, %v2469
        %v2544 = vxor.u32 %v2543, 2147483648
        %v2545 = vmul.f32 %v2544, 1.442695
        %v2546 = vpow.pop %v2545
        %v2547 = vadd.f32 %v2546, 1.0
        %v2548 = vrcp.pop %v2547
        %v2549 = vmul.f32 1.0, %v2548
        %v2550 = vadd.f32 %v1150, %v2471
        %v2551 = vxor.u32 %v2550, 2147483648
        %v2552 = vmul.f32 %v2551, 1.442695
        %v2553 = vpow.pop %v2552
        %v2554 = vadd.f32 %v2553, 1.0
        %v2555 = vrcp.pop %v2554
        %v2556 = vmul.f32 1.0, %v2555
        %v2557 = vmul.f32 %v2549, %v2540
        %v2558 = vadd.f32 %v1255, %v2557
        %v2559 = vtanh.pop %v2558
        %v2560 = vsub.f32 1.0, %v2556
        %v2561 = vmul.f32 %v2560, %v2559
        %v2562 = vmul.f32 %v2556, %v2401
        %v2563 = vadd.f32 %v2561, %v2562
        %vm2564 = vcmp.gt.f32.partialorder %v1263, 6.0
        %v2565 = vsel %vm2564, 1, 0
        %v2566 = vcvt.s32.f32 %v2565
        %2568 = vset.pattern.permute.xlu0 0
        %2569 = vperm.xlu0 %2568, %v2566
        %v2570 = vpop.permute.xlu0 %2569
        %v2572 = vmul.f32 %v2570, %v2563
        %v2573 = vsub.f32 1.0, %v2566
        %2575 = vset.pattern.permute.xlu0 0
        %2576 = vperm.xlu0 %2575, %v2573
        %v2577 = vpop.permute.xlu0 %2576
        %v2579 = vmul.f32 %v2577, %v2401
        %v2580 = vadd.f32 %v2572, %v2579
        %2581 = vmatprep.subr.mxu0 %v1310
        %2582 = vmatpush1.msra.mxu0 %v1309
        %2583 = vmatprep.subr.mxu0 %v1307
        %2584 = vmatpush1.msra.mxu0 %v1306
        %2585 = vmatprep.subr.mxu0 %v1304
        %2586 = vmatpush1.msra.mxu0 %v1303
        %2587 = vmatprep.subr.mxu0 %v1301
        %2588 = vmatpush1.msra.mxu0 %v1300
        %2589 = vmatprep.subr.mxu0 %v1298
        %2590 = vmatpush1.msra.mxu0 %v1297
        %2591 = vmatprep.subr.mxu0 %v1295
        %2592 = vmatpush1.msra.mxu0 %v1294
        %2593 = vmatprep.subr.mxu0 %v1292
        %2594 = vmatpush1.msra.mxu0 %v1291
        %2595 = vmatprep.subr.mxu0 %v1289
        %2596 = vmatpush1.msra.mxu0 %v1288
        %2597 = vmatprep.subr.mxu0 %v1286
        %2598 = vmatpush1.msra.mxu0 %v1285
        %2599 = vmatprep.subr.mxu0 %v1283
        %2600 = vmatpush1.msra.mxu0 %v1282
        %2601 = vmatprep.subr.mxu0 %v1280
        %2602 = vmatpush1.msra.mxu0 %v1279
        %2603 = vmatprep.subr.mxu0 %v1277
        %2604 = vmatpush1.msra.mxu0 %v1276
        %2605 = vmatprep.subr.mxu0 %v1274
        %2606 = vmatpush1.msra.mxu0 %v1273
        %2607 = vmatprep.subr.mxu0 %v1271
        %2608 = vmatpush1.msra.mxu0 %v1270
        %2609 = vmatprep.subr.mxu0 %v1268
        %2610 = vmatpush1.msra.mxu0 %v1267
        %2611 = vmatprep.subr.mxu0 %v1265
        %2612 = vmatpush1.msra.mxu0 %v1264
        %2613 = vmatprep.subr.mxu0 0.0
        %2614 = vmatpush2.msra.mxu0 0.0
        %2615 = vmatprep.subr.mxu0 0.0
        %2616 = vmatpush2.msra.mxu0 0.0
        %2617 = vmatprep.subr.mxu0 0.0
        %2618 = vmatpush2.msra.mxu0 0.0
        %2619 = vmatprep.subr.mxu0 0.0
        %2620 = vmatpush2.msra.mxu0 0.0
        %2621 = vmatprep.subr.mxu0 0.0
        %2622 = vmatpush2.msra.mxu0 0.0
        %2623 = vmatprep.subr.mxu0 0.0
        %2624 = vmatpush2.msra.mxu0 0.0
        %2625 = vmatprep.subr.mxu0 0.0
        %2626 = vmatpush2.msra.mxu0 0.0
        %2627 = vmatprep.subr.mxu0 0.0
        %2628 = vmatpush2.msra.mxu0 0.0
        %2629 = vmatprep.subr.mxu0 0.0
        %2630 = vmatpush2.msra.mxu0 0.0
        %2631 = vmatprep.subr.mxu0 0.0
        %2632 = vmatpush2.msra.mxu0 0.0
        %2633 = vmatprep.subr.mxu0 0.0
        %2634 = vmatpush2.msra.mxu0 0.0
        %2635 = vmatprep.subr.mxu0 0.0
        %2636 = vmatpush2.msra.mxu0 0.0
        %2637 = vmatprep.subr.mxu0 0.0
        %2638 = vmatpush2.msra.mxu0 0.0
        %2639 = vmatprep.subr.mxu0 0.0
        %2640 = vmatpush2.msra.mxu0 0.0
        %2641 = vmatprep.subr.mxu0 0.0
        %2642 = vmatpush2.msra.mxu0 0.0
        %2643 = vmatprep.subr.mxu0 0.0
        %2644 = vmatpush2.msra.mxu0 0.0
        %2645 = vmatprep.mubr.f32.mxu0 0.0
        %2646 = vmatmul.mubr.f32.gmra.mxu0 %v2580
        %v2647 = vpop.f32.mrf.mxu0
        %v2648 = vadd.f32 %v1316, %v2647
        %v2649 = vpop.f32.mrf.mxu0
        %v2650 = vadd.f32 %v1320, %v2649
        %2651 = vdwg.mxu0
        %2652 = vmatprep.subr.mxu0 0.0
        %2653 = vmatpush1.msra.mxu0 %v1311
        %2654 = vmatprep.subr.mxu0 0.0
        %2655 = vmatpush1.msra.mxu0 %v1308
        %2656 = vmatprep.subr.mxu0 0.0
        %2657 = vmatpush1.msra.mxu0 %v1305
        %2658 = vmatprep.subr.mxu0 0.0
        %2659 = vmatpush1.msra.mxu0 %v1302
        %2660 = vmatprep.subr.mxu0 0.0
        %2661 = vmatpush1.msra.mxu0 %v1299
        %2662 = vmatprep.subr.mxu0 0.0
        %2663 = vmatpush1.msra.mxu0 %v1296
        %2664 = vmatprep.subr.mxu0 0.0
        %2665 = vmatpush1.msra.mxu0 %v1293
        %2666 = vmatprep.subr.mxu0 0.0
        %2667 = vmatpush1.msra.mxu0 %v1290
        %2668 = vmatprep.subr.mxu0 0.0
        %2669 = vmatpush1.msra.mxu0 %v1287
        %2670 = vmatprep.subr.mxu0 0.0
        %2671 = vmatpush1.msra.mxu0 %v1284
        %2672 = vmatprep.subr.mxu0 0.0
        %2673 = vmatpush1.msra.mxu0 %v1281
        %2674 = vmatprep.subr.mxu0 0.0
        %2675 = vmatpush1.msra.mxu0 %v1278
        %2676 = vmatprep.subr.mxu0 0.0
        %2677 = vmatpush1.msra.mxu0 %v1275
        %2678 = vmatprep.subr.mxu0 0.0
        %2679 = vmatpush1.msra.mxu0 %v1272
        %2680 = vmatprep.subr.mxu0 0.0
        %2681 = vmatpush1.msra.mxu0 %v1269
        %2682 = vmatprep.subr.mxu0 0.0
        %2683 = vmatpush1.msra.mxu0 %v1266
        %2684 = vmatprep.subr.mxu0 0.0
        %2685 = vmatpush2.msra.mxu0 0.0
        %2686 = vmatprep.subr.mxu0 0.0
        %2687 = vmatpush2.msra.mxu0 0.0
        %2688 = vmatprep.subr.mxu0 0.0
        %2689 = vmatpush2.msra.mxu0 0.0
        %2690 = vmatprep.subr.mxu0 0.0
        %2691 = vmatpush2.msra.mxu0 0.0
        %2692 = vmatprep.subr.mxu0 0.0
        %2693 = vmatpush2.msra.mxu0 0.0
        %2694 = vmatprep.subr.mxu0 0.0
        %2695 = vmatpush2.msra.mxu0 0.0
        %2696 = vmatprep.subr.mxu0 0.0
        %2697 = vmatpush2.msra.mxu0 0.0
        %2698 = vmatprep.subr.mxu0 0.0
        %2699 = vmatpush2.msra.mxu0 0.0
        %2700 = vmatprep.subr.mxu0 0.0
        %2701 = vmatpush2.msra.mxu0 0.0
        %2702 = vmatprep.subr.mxu0 0.0
        %2703 = vmatpush2.msra.mxu0 0.0
        %2704 = vmatprep.subr.mxu0 0.0
        %2705 = vmatpush2.msra.mxu0 0.0
        %2706 = vmatprep.subr.mxu0 0.0
        %2707 = vmatpush2.msra.mxu0 0.0
        %2708 = vmatprep.subr.mxu0 0.0
        %2709 = vmatpush2.msra.mxu0 0.0
        %2710 = vmatprep.subr.mxu0 0.0
        %2711 = vmatpush2.msra.mxu0 0.0
        %2712 = vmatprep.subr.mxu0 0.0
        %2713 = vmatpush2.msra.mxu0 0.0
        %2714 = vmatprep.subr.mxu0 0.0
        %2715 = vmatpush2.msra.mxu0 0.0
        %2716 = vmatprep.mubr.f32.mxu0 0.0
        %2717 = vmatmul.mubr.f32.gmra.mxu0 %v2580
        %v2718 = vpop.f32.mrf.mxu0
        %v2719 = vadd.f32 %v1324, %v2718
        %v2720 = vpop.f32.mrf.mxu0
        %2721 = vdwg.mxu0
        %v2722 = vadd.f32 %v1154, %v2648
        %v2723 = vxor.u32 %v2722, 2147483648
        %v2724 = vmul.f32 %v2723, 1.442695
        %v2725 = vpow.pop %v2724
        %v2726 = vadd.f32 %v2725, 1.0
        %v2727 = vrcp.pop %v2726
        %v2728 = vmul.f32 1.0, %v2727
        %v2729 = vadd.f32 %v1156, %v2650
        %v2730 = vxor.u32 %v2729, 2147483648
        %v2731 = vmul.f32 %v2730, 1.442695
        %v2732 = vpow.pop %v2731
        %v2733 = vadd.f32 %v2732, 1.0
        %v2734 = vrcp.pop %v2733
        %v2735 = vmul.f32 1.0, %v2734
        %v2736 = vmul.f32 %v2728, %v2719
        %v2737 = vadd.f32 %v1260, %v2736
        %v2738 = vtanh.pop %v2737
        %v2739 = vsub.f32 1.0, %v2735
        %v2740 = vmul.f32 %v2739, %v2738
        %v2741 = vmul.f32 %v2735, %v2580
        %v2742 = vadd.f32 %v2740, %v2741
        %vm2743 = vcmp.gt.f32.partialorder %v1263, 7.0
        %v2744 = vsel %vm2743, 1, 0
        %v2745 = vcvt.s32.f32 %v2744
        %2747 = vset.pattern.permute.xlu0 0
        %2748 = vperm.xlu0 %2747, %v2745
        %v2749 = vpop.permute.xlu0 %2748
        %v2751 = vmul.f32 %v2749, %v2742
        %v2752 = vsub.f32 1.0, %v2745
        %2754 = vset.pattern.permute.xlu0 0
        %2755 = vperm.xlu0 %2754, %v2752
        %v2756 = vpop.permute.xlu0 %2755
        %v2758 = vmul.f32 %v2756, %v2580
        %v2759 = vadd.f32 %v2751, %v2758
        %2760 = vst [vmem:[#allocation3 + $0x8] sm:$0xff] %v2759
        %v2761 = vld [vmem:[#allocation3] sm:$0xff]
        %v2762 = vld [vmem:[#allocation3 + $0x8] sm:$0xff]
        %v2763 = vld [vmem:[#allocation10] sm:$0xff]
        %v2764 = vld [vmem:[#allocation10 + $0x8] sm:$0xff]
        %v2765 = vld [vmem:[#allocation10 + $0x10] sm:$0xff]
        %v2766 = vld [vmem:[#allocation10 + $0x18] sm:$0xff]
        %v2767 = vld [vmem:[#allocation10 + $0x20] sm:$0xff]
        %v2768 = vld [vmem:[#allocation10 + $0x28] sm:$0xff]
        %v2769 = vld [vmem:[#allocation10 + $0x30] sm:$0xff]
        %v2770 = vld [vmem:[#allocation10 + $0x38] sm:$0xff]
        %v2771 = vld [vmem:[#allocation10 + $0x40] sm:$0xff]
        %v2772 = vld [vmem:[#allocation10 + $0x48] sm:$0xff]
        %v2773 = vld [vmem:[#allocation10 + $0x50] sm:$0xff]
        %v2774 = vld [vmem:[#allocation10 + $0x58] sm:$0xff]
        %v2775 = vld [vmem:[#allocation10 + $0x60] sm:$0xff]
        %v2776 = vld [vmem:[#allocation10 + $0x68] sm:$0xff]
        %v2777 = vld [vmem:[#allocation10 + $0x70] sm:$0xff]
        %v2778 = vld [vmem:[#allocation10 + $0x78] sm:$0xff]
        %v2779 = vld [vmem:[#allocation10 + $0x80] sm:$0xff]
        %v2780 = vld [vmem:[#allocation10 + $0x88] sm:$0xff]
        %v2781 = vld [vmem:[#allocation10 + $0x90] sm:$0xff]
        %v2782 = vld [vmem:[#allocation10 + $0x98] sm:$0xff]
        %v2783 = vld [vmem:[#allocation10 + $0xa0] sm:$0xff]
        %v2784 = vld [vmem:[#allocation10 + $0xa8] sm:$0xff]
        %v2785 = vld [vmem:[#allocation10 + $0xb0] sm:$0xff]
        %v2786 = vld [vmem:[#allocation10 + $0xb8] sm:$0xff]
        %v2787 = vld [vmem:[#allocation10 + $0xc0] sm:$0xff]
        %v2788 = vld [vmem:[#allocation10 + $0xc8] sm:$0xff]
        %v2789 = vld [vmem:[#allocation10 + $0xd0] sm:$0xff]
        %v2790 = vld [vmem:[#allocation10 + $0xd8] sm:$0xff]
        %v2791 = vld [vmem:[#allocation10 + $0xe0] sm:$0xff]
        %v2792 = vld [vmem:[#allocation10 + $0xe8] sm:$0xff]
        %v2793 = vld [vmem:[#allocation10 + $0xf0] sm:$0xff]
        %v2794 = vld [vmem:[#allocation10 + $0xf8] sm:$0xff]
        %v2795 = vld [vmem:[%s9] sm:$0x1]
        %v2797 = vlaneseq
        %v2798 = vshrl.u32 %v2797, 7
        %v2799 = vsub.s32 0, %v2798
        %v2800 = vrot.slane %v2795, %v2799
        %2802 = vmatprep.subr.mxu0 0.0
        %2803 = vmatpush1.msra.mxu0 %v2778
        %2804 = vmatprep.subr.mxu0 0.0
        %2805 = vmatpush1.msra.mxu0 %v2777
        %2806 = vmatprep.subr.mxu0 0.0
        %2807 = vmatpush1.msra.mxu0 %v2776
        %2808 = vmatprep.subr.mxu0 0.0
        %2809 = vmatpush1.msra.mxu0 %v2775
        %2810 = vmatprep.subr.mxu0 0.0
        %2811 = vmatpush1.msra.mxu0 %v2774
        %2812 = vmatprep.subr.mxu0 0.0
        %2813 = vmatpush1.msra.mxu0 %v2773
        %2814 = vmatprep.subr.mxu0 0.0
        %2815 = vmatpush1.msra.mxu0 %v2772
        %2816 = vmatprep.subr.mxu0 0.0
        %2817 = vmatpush1.msra.mxu0 %v2771
        %2818 = vmatprep.subr.mxu0 0.0
        %2819 = vmatpush1.msra.mxu0 %v2770
        %2820 = vmatprep.subr.mxu0 0.0
        %2821 = vmatpush1.msra.mxu0 %v2769
        %2822 = vmatprep.subr.mxu0 0.0
        %2823 = vmatpush1.msra.mxu0 %v2768
        %2824 = vmatprep.subr.mxu0 0.0
        %2825 = vmatpush1.msra.mxu0 %v2767
        %2826 = vmatprep.subr.mxu0 0.0
        %2827 = vmatpush1.msra.mxu0 %v2766
        %2828 = vmatprep.subr.mxu0 0.0
        %2829 = vmatpush1.msra.mxu0 %v2765
        %2830 = vmatprep.subr.mxu0 0.0
        %2831 = vmatpush1.msra.mxu0 %v2764
        %2832 = vmatprep.subr.mxu0 0.0
        %2833 = vmatpush1.msra.mxu0 %v2763
        %2834 = vmatprep.subr.mxu0 0.0
        %2835 = vmatpush2.msra.mxu0 %v2794
        %2836 = vmatprep.subr.mxu0 0.0
        %2837 = vmatpush2.msra.mxu0 %v2793
        %2838 = vmatprep.subr.mxu0 0.0
        %2839 = vmatpush2.msra.mxu0 %v2792
        %2840 = vmatprep.subr.mxu0 0.0
        %2841 = vmatpush2.msra.mxu0 %v2791
        %2842 = vmatprep.subr.mxu0 0.0
        %2843 = vmatpush2.msra.mxu0 %v2790
        %2844 = vmatprep.subr.mxu0 0.0
        %2845 = vmatpush2.msra.mxu0 %v2789
        %2846 = vmatprep.subr.mxu0 0.0
        %2847 = vmatpush2.msra.mxu0 %v2788
        %2848 = vmatprep.subr.mxu0 0.0
        %2849 = vmatpush2.msra.mxu0 %v2787
        %2850 = vmatprep.subr.mxu0 0.0
        %2851 = vmatpush2.msra.mxu0 %v2786
        %2852 = vmatprep.subr.mxu0 0.0
        %2853 = vmatpush2.msra.mxu0 %v2785
        %2854 = vmatprep.subr.mxu0 0.0
        %2855 = vmatpush2.msra.mxu0 %v2784
        %2856 = vmatprep.subr.mxu0 0.0
        %2857 = vmatpush2.msra.mxu0 %v2783
        %2858 = vmatprep.subr.mxu0 0.0
        %2859 = vmatpush2.msra.mxu0 %v2782
        %2860 = vmatprep.subr.mxu0 0.0
        %2861 = vmatpush2.msra.mxu0 %v2781
        %2862 = vmatprep.subr.mxu0 0.0
        %2863 = vmatpush2.msra.mxu0 %v2780
        %2864 = vmatprep.subr.mxu0 0.0
        %2865 = vmatpush2.msra.mxu0 %v2779
        %2866 = vmatprep.mubr.f32.mxu0 %v2762
        %2867 = vmatmul.mubr.f32.gmra.mxu0 %v2761
        %v2868 = vpop.f32.mrf.mxu0
        %v2869 = vadd.f32 %v2800, %v2868
        %v2870 = vpop.f32.mrf.mxu0
        %2871 = vdwg.mxu0
        %v2872 = vtanh.pop %v2869
        %s2873 = sld [smem:[#allocation6 + %s649]]
        %s2874 = scalar_lea.vmem [#allocation13], %s2873
        %2875 = vst [vmem:[%s2874] sm:$0x1] %v2872
        %s2876 = sld [smem:[#allocation6 + %s654]]
        %s2877 = scalar_lea.vmem [#allocation13], %s2876
        %2878 = vst [vmem:[%s2877 - $0x1] sm:$0x2] %v2872
        %s2879 = sld [smem:[#allocation6 + %s659]]
        %s2880 = scalar_lea.vmem [#allocation13], %s2879
        %2881 = vst [vmem:[%s2880 - $0x2] sm:$0x4] %v2872
        %s2882 = sld [smem:[#allocation6 + %s664]]
        %s2883 = scalar_lea.vmem [#allocation13], %s2882
        %2884 = vst [vmem:[%s2883 - $0x3] sm:$0x8] %v2872
        %s2885 = sld [smem:[#allocation6 + %s669]]
        %s2886 = scalar_lea.vmem [#allocation13], %s2885
        %2887 = vst [vmem:[%s2886 - $0x4] sm:$0x10] %v2872
        %s2888 = sld [smem:[#allocation6 + %s674]]
        %s2889 = scalar_lea.vmem [#allocation13], %s2888
        %2890 = vst [vmem:[%s2889 - $0x5] sm:$0x20] %v2872
        %s2891 = sld [smem:[#allocation6 + %s679]]
        %s2892 = scalar_lea.vmem [#allocation13], %s2891
        %2893 = vst [vmem:[%s2892 - $0x6] sm:$0x40] %v2872
        %s2894 = sld [smem:[#allocation6 + %s684]]
        %s2895 = scalar_lea.vmem [#allocation13], %s2894
        %2896 = vst [vmem:[%s2895 - $0x7] sm:$0x80] %v2872
        // Predicated region
        $region73: #{_forest_forward_impl.1} parent=55 // pred_check
          %p2897 = pneg %p247
        $region74: #{_forest_forward_impl.1} parent=55 // pred_check_branch
          %2899 = sbr.rel (%p2897) target = $region76
        $region75: #{_forest_forward_impl.1} parent=55 // pred_region
          %s2901 = ssub.s32 16384, 16384
          %2902 = vsyncadd [#allocation9], %s2901
          %s2903 = sshll.u32 [#allocation13], 4
          %s2904 = int_to_ptr.vmem [resolvable:$true] %s2903
          %2909 = dma.vmem_to_hbm [thread:$0]  %s2904, 16384, %s11, [#allocation9], 128, 128, 8
        $region76: #{_forest_forward_impl.1} parent=55 // pred_fallthru
          _
        // Predicated region
        $region77: #{_forest_forward_impl.1} parent=55 // pred_check
          %p2910 = pneg %p247
        $region78: #{_forest_forward_impl.1} parent=55 // pred_check_branch
          %2912 = sbr.rel (%p2910) target = $region80
        $region79: #{_forest_forward_impl.1} parent=55 // pred_region
          %2913 = dma.done [#allocation9], 16384
        $region80: #{_forest_forward_impl.1} parent=55 // pred_fallthru
          _
      $region56: #{_forest_forward_impl.1} parent=5 // pred_fallthru
        _
      %p2914 = scmp.le.s32.totalorder 2, %s30
      // Predicated region
      $region81: #{_forest_forward_impl.1} parent=5 // pred_check
        %p2915 = pneg %p2914
      $region82: #{_forest_forward_impl.1} parent=5 // pred_check_branch
        %2917 = sbr.rel (%p2915) target = $region84
      $region83: #{_forest_forward_impl.1} parent=5 // pred_region
        %s2918 = ssub.s32 %s30, 2
      $region84: #{_forest_forward_impl.1} parent=5 // pred_fallthru
        _
    $region6: #{_forest_forward_impl.1} parent=1 // loop_footer
      %s34 = sadd.s32 1, %s30
    $region7: #{_forest_forward_impl.1} parent=1 // loop_footer_branch
      %29 = sbr.rel target = $region3
    $region8: #{_forest_forward_impl.1} parent=1 // loop_exit
      _
    %2919 = vsyncpa [#allocation8], 1
    %s2920 = scalar_lea.sflag [#allocation8], 1
    %2921 = vsyncpa %s2920, 1
    %2922 = vsyncpa [#allocation11], 1
    %2923 = vsyncpa [#allocation9], 1
    %s2924 = scalar_lea.sflag [#allocation9], 1
    %2925 = vsyncpa %s2924, 1

</llo_original>
